<compile_context>
chip_gen: v7x
topology: tpu7x:2x2x1
jax: 0.10.0
libtpu: 0.0.40
codegen_flags: <defaults>
</compile_context>

<pallas_src>
import functools

import jax
import jax.numpy as jnp
from jax.experimental import pallas as pl
from jax.experimental.pallas import tpu as pltpu

# Layer widths of the autoencoder (encoder then decoder).
DIMS = [28 * 28, 128, 64, 36, 18, 9, 18, 36, 64, 128, 28 * 28]
N_LAYERS = len(DIMS) - 1            # 10 Linear layers
LANE = 128
D_IO = 28 * 28                      # 784: input/output feature width (unpadded)

# Activation after each of the 10 Linear layers (matches the PyTorch Sequential).
_ACTS = ("relu",) * 4 + ("none",) + ("relu",) * 4 + ("sigmoid",)


def _autoencoder_kernel(x_ref, w0_ref, wmid_ref, w9_ref, benc_ref, blast_ref, o_ref):
    """Full 10-layer encoder+decoder chain for one batch tile.

    x_ref    : (block_b, 784) f32   raw input tile (cast to bf16 per K-chunk)
    w0_ref   : (784, 128)     bf16  layer 0 weight, VMEM resident
    wmid_ref : (8, 128, 128)  bf16  layers 1..8, zero-padded to uniform 128x128
    w9_ref   : (128, 784)     bf16  layer 9 weight, VMEM resident
    benc_ref : (1, 9*128)     f32   biases of layers 0..8, each zero-padded to 128 lanes
    blast_ref: (1, 784)       f32   layer 9 bias
    o_ref    : (block_b, 784) f32   output tile
    """
    block_b = x_ref.shape[0]

    # ---- layer 0: (B,784) @ (784,128), K-chunked so no (B,784) bf16 copy is live ----
    acc = jnp.zeros((block_b, LANE), jnp.float32)
    for k in range(0, D_IO, LANE):
        kw = min(LANE, D_IO - k)
        xk = x_ref[:, k:k + kw].astype(jnp.bfloat16)
        acc = acc + jnp.dot(xk, w0_ref[k:k + kw, :],
                            preferred_element_type=jnp.float32)
    h = jnp.maximum(acc + benc_ref[:, 0:LANE], 0.0).astype(jnp.bfloat16)

    # ---- layers 1..8: uniform (B,128)x(128,128); padded zero lanes stay zero ----
    for i in range(1, 9):
        z = jnp.dot(h, wmid_ref[i - 1], preferred_element_type=jnp.float32)
        z = z + benc_ref[:, LANE * i:LANE * (i + 1)]
        if _ACTS[i] == "relu":
            z = jnp.maximum(z, 0.0)
        # _ACTS[4] == "none": Linear(18, 9) has no activation in the original module.
        h = z.astype(jnp.bfloat16)

    # ---- layer 9: (B,128) @ (128,784), column-chunked; sigmoid = 0.5*tanh(0.5 z)+0.5 ----
    # Keeps live f32 values at <= 32 vregs (no spill of a (B,784) f32 value) and lets
    # the store of chunk c overlap the matmul of chunk c+1.
    for c in range(0, D_IO, LANE):
        cw = min(LANE, D_IO - c)
        z = jnp.dot(h, w9_ref[:, c:c + cw], preferred_element_type=jnp.float32)
        z = z + blast_ref[:, c:c + cw]
        o_ref[:, c:c + cw] = 0.5 * jnp.tanh(0.5 * z) + 0.5


def prepare_params(weights, biases):
    """One-time prep of the constant operands. Call once, outside the forward jit.

    weights[i]: (in_i, out_i) f32  (transposed w.r.t. torch.nn.Linear.weight).
    biases[i] : (1, out_i)    f32
    """
    w0 = weights[0].astype(jnp.bfloat16)                         # (784, 128)
    w9 = weights[9].astype(jnp.bfloat16)                         # (128, 784)
    w_mid = []
    for i in range(1, 9):
        w = weights[i].astype(jnp.bfloat16)
        w = jnp.pad(w, ((0, LANE - w.shape[0]), (0, LANE - w.shape[1])))
        w_mid.append(w)
    w_mid = jnp.stack(w_mid)                                     # (8, 128, 128)

    b_enc = jnp.concatenate(
        [jnp.pad(biases[i].astype(jnp.float32).reshape(1, -1),
                 ((0, 0), (0, LANE - DIMS[i + 1]))) for i in range(9)],
        axis=1)                                                  # (1, 1152)
    b_last = biases[9].astype(jnp.float32).reshape(1, -1)        # (1, 784)
    return w0, w_mid, w9, b_enc, b_last


@functools.partial(jax.jit, static_argnames=("block_b",))
def autoencoder_forward(x, prepared, *, block_b=256):
    """x: (B, 784) float32. prepared: output of prepare_params(). Returns (B, 784) f32."""
    w0, w_mid, w9, b_enc, b_last = prepared
    B, D = x.shape
    assert D == D_IO

    b_extra = (-B) % block_b                  # pad rows only if needed (zeros, sliced off)
    x_p = jnp.pad(x, ((0, b_extra), (0, 0))) if b_extra else x
    B_pad = B + b_extra
    grid = (B_pad // block_b,)

    io_in_spec = pl.BlockSpec((block_b, D_IO), lambda i: (i, 0))
    io_out_spec = pl.BlockSpec((block_b, D_IO), lambda i: (i, 0))
    # Constant weights/biases: whole-array VMEM residents (no per-step DMA machinery).
    vmem_spec = pl.BlockSpec(memory_space=pltpu.MemorySpace.VMEM)

    # Footprint: ~0.7 MiB resident bf16 weights + biases, double-buffered f32 in/out
    # tiles (2 bufs each), plus headroom for in-kernel scratch. Well under the scoped
    # default on all of v5e/v6e/v7x at these tile sizes.
    vmem_limit = int(4 * block_b * D_IO * 4 + 6 * 1024 * 1024)

    out = pl.pallas_call(
        _autoencoder_kernel,
        out_shape=jax.ShapeDtypeStruct((B_pad, D_IO), jnp.float32),
        grid_spec=pltpu.PrefetchScalarGridSpec(
            num_scalar_prefetch=0,
            grid=grid,
            in_specs=[io_in_spec] + [vmem_spec] * 5,
            out_specs=io_out_spec,
        ),
        compiler_params=pltpu.CompilerParams(
            dimension_semantics=("parallel",),   # shards batch tiles across TCs (v7x)
            vmem_limit_bytes=vmem_limit,
        ),
    )(x_p, w0, w_mid, w9, b_enc, b_last)

    return out if b_extra == 0 else out[:B]


def init_params(key):
    """Deterministic init mimicking torch.nn.Linear's U(-1/sqrt(fan_in), 1/sqrt(fan_in))."""
    weights, biases = [], []
    for l in range(N_LAYERS):
        fan_in, fan_out = DIMS[l], DIMS[l + 1]
        key, kw, kb = jax.random.split(key, 3)
        bound = 1.0 / jnp.sqrt(fan_in)
        # Stored as (in, out) so the kernel computes x @ W + b
        # (equivalent to PyTorch's x @ W.T + b with torch weight of shape (out, in)).
        w = jax.random.uniform(kw, (fan_in, fan_out), jnp.float32, -bound, bound)
        b = jax.random.uniform(kb, (1, fan_out), jnp.float32, -bound, bound)
        weights.append(w)
        biases.append(b)
    return weights, biases


def reference_forward(x, weights, biases):
    """Pure-JAX reference, precision-matched to the kernel (bf16 MXU inputs, f32 acc)."""
    h = x
    for i in range(N_LAYERS):
        z = jnp.dot(h.astype(jnp.bfloat16), weights[i].astype(jnp.bfloat16),
                    preferred_element_type=jnp.float32) + biases[i].astype(jnp.float32)
        if _ACTS[i] == "relu":
            z = jnp.maximum(z, 0.0)
        elif _ACTS[i] == "sigmoid":
            z = jax.nn.sigmoid(z)
        h = z
    return h


if __name__ == "__main__":
    key = jax.random.PRNGKey(0)
    kp, kx = jax.random.split(key)
    weights, biases = init_params(kp)
    prepared = prepare_params(weights, biases)     # constant prep, done once & cached

    B = 512
    x = jax.random.uniform(kx, (B, D_IO), jnp.float32)   # MNIST-like flattened input

    # block_b=128 -> grid=(4,): >=2 batch tiles per TensorCore on v7x (megacore) and
    # enough grid steps on v5e/v6e for edge DMAs to pipeline. Sweep {128,256,512} as B grows.
    out = autoencoder_forward(x, prepared, block_b=128)
    out = jax.block_until_ready(out)

    ref = reference_forward(x, weights, biases)
    assert out.shape == (B, D_IO)
    assert out.dtype == jnp.float32
    max_err = float(jnp.max(jnp.abs(out - ref)))
    # bf16 weights/activations => ~1e-2-level deviation vs a true f32 PyTorch forward;
    # here we assert against the precision-matched (bf16-in / f32-acc) reference.
    assert max_err < 5e-3, f"mismatch vs precision-matched reference: max abs err {max_err}"

    print("KERNEL_OK")
</pallas_src>

<mosaic_0001>
module attributes {stable_mosaic.version = 11 : i64} {
  func.func @_autoencoder_kernel(%arg0: i32, %arg1: memref<128x784xf32, #tpu.memory_space<vmem>>, %arg2: memref<784x128xbf16, #tpu.memory_space<vmem>>, %arg3: memref<8x128x128xbf16, #tpu.memory_space<vmem>>, %arg4: memref<128x784xbf16, #tpu.memory_space<vmem>>, %arg5: memref<1x1152xf32, #tpu.memory_space<vmem>>, %arg6: memref<1x784xf32, #tpu.memory_space<vmem>>, %arg7: memref<128x784xf32, #tpu.memory_space<vmem>>) attributes {dimension_semantics = [#tpu.dimension_semantics<parallel>], iteration_bounds = array<i64: 4>, scalar_prefetch = 0 : i64, scratch_operands = 0 : i64, tpu.core_type = #tpu.core_type<tc>, window_params = [{transform_indices = @transform_0, window_bounds = array<i64: 128, 784>}, {pipeline_mode = #tpu.pipeline_mode<synchronous>, transform_indices = @transform_1, window_bounds = array<i64: 784, 128>}, {pipeline_mode = #tpu.pipeline_mode<synchronous>, transform_indices = @transform_2, window_bounds = array<i64: 8, 128, 128>}, {pipeline_mode = #tpu.pipeline_mode<synchronous>, transform_indices = @transform_3, window_bounds = array<i64: 128, 784>}, {pipeline_mode = #tpu.pipeline_mode<synchronous>, transform_indices = @transform_4, window_bounds = array<i64: 1, 1152>}, {pipeline_mode = #tpu.pipeline_mode<synchronous>, transform_indices = @transform_5, window_bounds = array<i64: 1, 784>}, {transform_indices = @transform_6, window_bounds = array<i64: 128, 784>}]} {
    %cst = arith.constant 0.000000e+00 : f32
    %0 = vector.broadcast %cst : f32 to vector<128x128xf32>
    %c0 = arith.constant 0 : index
    %c0_0 = arith.constant 0 : index
    %1 = vector.load %arg1[%c0, %c0_0] : memref<128x784xf32, #tpu.memory_space<vmem>>, vector<128x128xf32>
    %2 = arith.truncf %1 : vector<128x128xf32> to vector<128x128xbf16>
    %c0_1 = arith.constant 0 : index
    %c0_2 = arith.constant 0 : index
    %3 = vector.load %arg2[%c0_1, %c0_2] : memref<784x128xbf16, #tpu.memory_space<vmem>>, vector<128x128xbf16>
    %cst_3 = arith.constant dense<0.000000e+00> : vector<128x128xf32>
    %4 = tpu.matmul %2, %3, %cst_3 {dimension_numbers = #tpu.dot_dimension_numbers<[1], [0], [0], [1], [0, 0, 1, 1], [], []>} : vector<128x128xbf16>, vector<128x128xbf16>, vector<128x128xf32> -> vector<128x128xf32>
    %5 = arith.addf %0, %4 : vector<128x128xf32>
    %c0_4 = arith.constant 0 : index
    %c128 = arith.constant 128 : index
    %6 = vector.load %arg1[%c0_4, %c128] : memref<128x784xf32, #tpu.memory_space<vmem>>, vector<128x128xf32>
    %7 = arith.truncf %6 : vector<128x128xf32> to vector<128x128xbf16>
    %c128_5 = arith.constant 128 : index
    %c0_6 = arith.constant 0 : index
    %8 = vector.load %arg2[%c128_5, %c0_6] : memref<784x128xbf16, #tpu.memory_space<vmem>>, vector<128x128xbf16>
    %cst_7 = arith.constant dense<0.000000e+00> : vector<128x128xf32>
    %9 = tpu.matmul %7, %8, %cst_7 {dimension_numbers = #tpu.dot_dimension_numbers<[1], [0], [0], [1], [0, 0, 1, 1], [], []>} : vector<128x128xbf16>, vector<128x128xbf16>, vector<128x128xf32> -> vector<128x128xf32>
    %10 = arith.addf %5, %9 : vector<128x128xf32>
    %c0_8 = arith.constant 0 : index
    %c256 = arith.constant 256 : index
    %11 = vector.load %arg1[%c0_8, %c256] : memref<128x784xf32, #tpu.memory_space<vmem>>, vector<128x128xf32>
    %12 = arith.truncf %11 : vector<128x128xf32> to vector<128x128xbf16>
    %c256_9 = arith.constant 256 : index
    %c0_10 = arith.constant 0 : index
    %13 = vector.load %arg2[%c256_9, %c0_10] : memref<784x128xbf16, #tpu.memory_space<vmem>>, vector<128x128xbf16>
    %cst_11 = arith.constant dense<0.000000e+00> : vector<128x128xf32>
    %14 = tpu.matmul %12, %13, %cst_11 {dimension_numbers = #tpu.dot_dimension_numbers<[1], [0], [0], [1], [0, 0, 1, 1], [], []>} : vector<128x128xbf16>, vector<128x128xbf16>, vector<128x128xf32> -> vector<128x128xf32>
    %15 = arith.addf %10, %14 : vector<128x128xf32>
    %c0_12 = arith.constant 0 : index
    %c384 = arith.constant 384 : index
    %16 = vector.load %arg1[%c0_12, %c384] : memref<128x784xf32, #tpu.memory_space<vmem>>, vector<128x128xf32>
    %17 = arith.truncf %16 : vector<128x128xf32> to vector<128x128xbf16>
    %c384_13 = arith.constant 384 : index
    %c0_14 = arith.constant 0 : index
    %18 = vector.load %arg2[%c384_13, %c0_14] : memref<784x128xbf16, #tpu.memory_space<vmem>>, vector<128x128xbf16>
    %cst_15 = arith.constant dense<0.000000e+00> : vector<128x128xf32>
    %19 = tpu.matmul %17, %18, %cst_15 {dimension_numbers = #tpu.dot_dimension_numbers<[1], [0], [0], [1], [0, 0, 1, 1], [], []>} : vector<128x128xbf16>, vector<128x128xbf16>, vector<128x128xf32> -> vector<128x128xf32>
    %20 = arith.addf %15, %19 : vector<128x128xf32>
    %c0_16 = arith.constant 0 : index
    %c512 = arith.constant 512 : index
    %21 = vector.load %arg1[%c0_16, %c512] : memref<128x784xf32, #tpu.memory_space<vmem>>, vector<128x128xf32>
    %22 = arith.truncf %21 : vector<128x128xf32> to vector<128x128xbf16>
    %c512_17 = arith.constant 512 : index
    %c0_18 = arith.constant 0 : index
    %23 = vector.load %arg2[%c512_17, %c0_18] : memref<784x128xbf16, #tpu.memory_space<vmem>>, vector<128x128xbf16>
    %cst_19 = arith.constant dense<0.000000e+00> : vector<128x128xf32>
    %24 = tpu.matmul %22, %23, %cst_19 {dimension_numbers = #tpu.dot_dimension_numbers<[1], [0], [0], [1], [0, 0, 1, 1], [], []>} : vector<128x128xbf16>, vector<128x128xbf16>, vector<128x128xf32> -> vector<128x128xf32>
    %25 = arith.addf %20, %24 : vector<128x128xf32>
    %c0_20 = arith.constant 0 : index
    %c640 = arith.constant 640 : index
    %26 = vector.load %arg1[%c0_20, %c640] : memref<128x784xf32, #tpu.memory_space<vmem>>, vector<128x128xf32>
    %27 = arith.truncf %26 : vector<128x128xf32> to vector<128x128xbf16>
    %c640_21 = arith.constant 640 : index
    %c0_22 = arith.constant 0 : index
    %28 = vector.load %arg2[%c640_21, %c0_22] : memref<784x128xbf16, #tpu.memory_space<vmem>>, vector<128x128xbf16>
    %cst_23 = arith.constant dense<0.000000e+00> : vector<128x128xf32>
    %29 = tpu.matmul %27, %28, %cst_23 {dimension_numbers = #tpu.dot_dimension_numbers<[1], [0], [0], [1], [0, 0, 1, 1], [], []>} : vector<128x128xbf16>, vector<128x128xbf16>, vector<128x128xf32> -> vector<128x128xf32>
    %30 = arith.addf %25, %29 : vector<128x128xf32>
    %c0_24 = arith.constant 0 : index
    %c768 = arith.constant 768 : index
    %31 = vector.load %arg1[%c0_24, %c768] : memref<128x784xf32, #tpu.memory_space<vmem>>, vector<128x16xf32>
    %32 = arith.truncf %31 : vector<128x16xf32> to vector<128x16xbf16>
    %c768_25 = arith.constant 768 : index
    %c0_26 = arith.constant 0 : index
    %33 = vector.load %arg2[%c768_25, %c0_26] : memref<784x128xbf16, #tpu.memory_space<vmem>>, vector<16x128xbf16>
    %cst_27 = arith.constant dense<0.000000e+00> : vector<128x128xf32>
    %34 = tpu.matmul %32, %33, %cst_27 {dimension_numbers = #tpu.dot_dimension_numbers<[1], [0], [0], [1], [0, 0, 1, 1], [], []>} : vector<128x16xbf16>, vector<16x128xbf16>, vector<128x128xf32> -> vector<128x128xf32>
    %35 = arith.addf %30, %34 : vector<128x128xf32>
    %c0_28 = arith.constant 0 : index
    %c0_29 = arith.constant 0 : index
    %36 = vector.load %arg5[%c0_28, %c0_29] : memref<1x1152xf32, #tpu.memory_space<vmem>>, vector<1x128xf32>
    %37 = vector.broadcast %36 : vector<1x128xf32> to vector<128x128xf32>
    %38 = arith.addf %35, %37 : vector<128x128xf32>
    %cst_30 = arith.constant 0.000000e+00 : f32
    %39 = vector.broadcast %cst_30 : f32 to vector<128x128xf32>
    %40 = arith.maximumf %38, %39 : vector<128x128xf32>
    %41 = arith.truncf %40 : vector<128x128xf32> to vector<128x128xbf16>
    %c0_31 = arith.constant 0 : index
    %c0_32 = arith.constant 0 : index
    %c0_33 = arith.constant 0 : index
    %42 = vector.load %arg3[%c0_31, %c0_32, %c0_33] : memref<8x128x128xbf16, #tpu.memory_space<vmem>>, vector<1x128x128xbf16>
    %43 = vector.shape_cast %42 : vector<1x128x128xbf16> to vector<128x128xbf16>
    %cst_34 = arith.constant dense<0.000000e+00> : vector<128x128xf32>
    %44 = tpu.matmul %41, %43, %cst_34 {dimension_numbers = #tpu.dot_dimension_numbers<[1], [0], [0], [1], [0, 0, 1, 1], [], []>} : vector<128x128xbf16>, vector<128x128xbf16>, vector<128x128xf32> -> vector<128x128xf32>
    %c0_35 = arith.constant 0 : index
    %c128_36 = arith.constant 128 : index
    %45 = vector.load %arg5[%c0_35, %c128_36] : memref<1x1152xf32, #tpu.memory_space<vmem>>, vector<1x128xf32>
    %46 = vector.broadcast %45 : vector<1x128xf32> to vector<128x128xf32>
    %47 = arith.addf %44, %46 : vector<128x128xf32>
    %cst_37 = arith.constant 0.000000e+00 : f32
    %48 = vector.broadcast %cst_37 : f32 to vector<128x128xf32>
    %49 = arith.maximumf %47, %48 : vector<128x128xf32>
    %50 = arith.truncf %49 : vector<128x128xf32> to vector<128x128xbf16>
    %c1 = arith.constant 1 : index
    %c0_38 = arith.constant 0 : index
    %c0_39 = arith.constant 0 : index
    %51 = vector.load %arg3[%c1, %c0_38, %c0_39] : memref<8x128x128xbf16, #tpu.memory_space<vmem>>, vector<1x128x128xbf16>
    %52 = vector.shape_cast %51 : vector<1x128x128xbf16> to vector<128x128xbf16>
    %cst_40 = arith.constant dense<0.000000e+00> : vector<128x128xf32>
    %53 = tpu.matmul %50, %52, %cst_40 {dimension_numbers = #tpu.dot_dimension_numbers<[1], [0], [0], [1], [0, 0, 1, 1], [], []>} : vector<128x128xbf16>, vector<128x128xbf16>, vector<128x128xf32> -> vector<128x128xf32>
    %c0_41 = arith.constant 0 : index
    %c256_42 = arith.constant 256 : index
    %54 = vector.load %arg5[%c0_41, %c256_42] : memref<1x1152xf32, #tpu.memory_space<vmem>>, vector<1x128xf32>
    %55 = vector.broadcast %54 : vector<1x128xf32> to vector<128x128xf32>
    %56 = arith.addf %53, %55 : vector<128x128xf32>
    %cst_43 = arith.constant 0.000000e+00 : f32
    %57 = vector.broadcast %cst_43 : f32 to vector<128x128xf32>
    %58 = arith.maximumf %56, %57 : vector<128x128xf32>
    %59 = arith.truncf %58 : vector<128x128xf32> to vector<128x128xbf16>
    %c2 = arith.constant 2 : index
    %c0_44 = arith.constant 0 : index
    %c0_45 = arith.constant 0 : index
    %60 = vector.load %arg3[%c2, %c0_44, %c0_45] : memref<8x128x128xbf16, #tpu.memory_space<vmem>>, vector<1x128x128xbf16>
    %61 = vector.shape_cast %60 : vector<1x128x128xbf16> to vector<128x128xbf16>
    %cst_46 = arith.constant dense<0.000000e+00> : vector<128x128xf32>
    %62 = tpu.matmul %59, %61, %cst_46 {dimension_numbers = #tpu.dot_dimension_numbers<[1], [0], [0], [1], [0, 0, 1, 1], [], []>} : vector<128x128xbf16>, vector<128x128xbf16>, vector<128x128xf32> -> vector<128x128xf32>
    %c0_47 = arith.constant 0 : index
    %c384_48 = arith.constant 384 : index
    %63 = vector.load %arg5[%c0_47, %c384_48] : memref<1x1152xf32, #tpu.memory_space<vmem>>, vector<1x128xf32>
    %64 = vector.broadcast %63 : vector<1x128xf32> to vector<128x128xf32>
    %65 = arith.addf %62, %64 : vector<128x128xf32>
    %cst_49 = arith.constant 0.000000e+00 : f32
    %66 = vector.broadcast %cst_49 : f32 to vector<128x128xf32>
    %67 = arith.maximumf %65, %66 : vector<128x128xf32>
    %68 = arith.truncf %67 : vector<128x128xf32> to vector<128x128xbf16>
    %c3 = arith.constant 3 : index
    %c0_50 = arith.constant 0 : index
    %c0_51 = arith.constant 0 : index
    %69 = vector.load %arg3[%c3, %c0_50, %c0_51] : memref<8x128x128xbf16, #tpu.memory_space<vmem>>, vector<1x128x128xbf16>
    %70 = vector.shape_cast %69 : vector<1x128x128xbf16> to vector<128x128xbf16>
    %cst_52 = arith.constant dense<0.000000e+00> : vector<128x128xf32>
    %71 = tpu.matmul %68, %70, %cst_52 {dimension_numbers = #tpu.dot_dimension_numbers<[1], [0], [0], [1], [0, 0, 1, 1], [], []>} : vector<128x128xbf16>, vector<128x128xbf16>, vector<128x128xf32> -> vector<128x128xf32>
    %c0_53 = arith.constant 0 : index
    %c512_54 = arith.constant 512 : index
    %72 = vector.load %arg5[%c0_53, %c512_54] : memref<1x1152xf32, #tpu.memory_space<vmem>>, vector<1x128xf32>
    %73 = vector.broadcast %72 : vector<1x128xf32> to vector<128x128xf32>
    %74 = arith.addf %71, %73 : vector<128x128xf32>
    %75 = arith.truncf %74 : vector<128x128xf32> to vector<128x128xbf16>
    %c4 = arith.constant 4 : index
    %c0_55 = arith.constant 0 : index
    %c0_56 = arith.constant 0 : index
    %76 = vector.load %arg3[%c4, %c0_55, %c0_56] : memref<8x128x128xbf16, #tpu.memory_space<vmem>>, vector<1x128x128xbf16>
    %77 = vector.shape_cast %76 : vector<1x128x128xbf16> to vector<128x128xbf16>
    %cst_57 = arith.constant dense<0.000000e+00> : vector<128x128xf32>
    %78 = tpu.matmul %75, %77, %cst_57 {dimension_numbers = #tpu.dot_dimension_numbers<[1], [0], [0], [1], [0, 0, 1, 1], [], []>} : vector<128x128xbf16>, vector<128x128xbf16>, vector<128x128xf32> -> vector<128x128xf32>
    %c0_58 = arith.constant 0 : index
    %c640_59 = arith.constant 640 : index
    %79 = vector.load %arg5[%c0_58, %c640_59] : memref<1x1152xf32, #tpu.memory_space<vmem>>, vector<1x128xf32>
    %80 = vector.broadcast %79 : vector<1x128xf32> to vector<128x128xf32>
    %81 = arith.addf %78, %80 : vector<128x128xf32>
    %cst_60 = arith.constant 0.000000e+00 : f32
    %82 = vector.broadcast %cst_60 : f32 to vector<128x128xf32>
    %83 = arith.maximumf %81, %82 : vector<128x128xf32>
    %84 = arith.truncf %83 : vector<128x128xf32> to vector<128x128xbf16>
    %c5 = arith.constant 5 : index
    %c0_61 = arith.constant 0 : index
    %c0_62 = arith.constant 0 : index
    %85 = vector.load %arg3[%c5, %c0_61, %c0_62] : memref<8x128x128xbf16, #tpu.memory_space<vmem>>, vector<1x128x128xbf16>
    %86 = vector.shape_cast %85 : vector<1x128x128xbf16> to vector<128x128xbf16>
    %cst_63 = arith.constant dense<0.000000e+00> : vector<128x128xf32>
    %87 = tpu.matmul %84, %86, %cst_63 {dimension_numbers = #tpu.dot_dimension_numbers<[1], [0], [0], [1], [0, 0, 1, 1], [], []>} : vector<128x128xbf16>, vector<128x128xbf16>, vector<128x128xf32> -> vector<128x128xf32>
    %c0_64 = arith.constant 0 : index
    %c768_65 = arith.constant 768 : index
    %88 = vector.load %arg5[%c0_64, %c768_65] : memref<1x1152xf32, #tpu.memory_space<vmem>>, vector<1x128xf32>
    %89 = vector.broadcast %88 : vector<1x128xf32> to vector<128x128xf32>
    %90 = arith.addf %87, %89 : vector<128x128xf32>
    %cst_66 = arith.constant 0.000000e+00 : f32
    %91 = vector.broadcast %cst_66 : f32 to vector<128x128xf32>
    %92 = arith.maximumf %90, %91 : vector<128x128xf32>
    %93 = arith.truncf %92 : vector<128x128xf32> to vector<128x128xbf16>
    %c6 = arith.constant 6 : index
    %c0_67 = arith.constant 0 : index
    %c0_68 = arith.constant 0 : index
    %94 = vector.load %arg3[%c6, %c0_67, %c0_68] : memref<8x128x128xbf16, #tpu.memory_space<vmem>>, vector<1x128x128xbf16>
    %95 = vector.shape_cast %94 : vector<1x128x128xbf16> to vector<128x128xbf16>
    %cst_69 = arith.constant dense<0.000000e+00> : vector<128x128xf32>
    %96 = tpu.matmul %93, %95, %cst_69 {dimension_numbers = #tpu.dot_dimension_numbers<[1], [0], [0], [1], [0, 0, 1, 1], [], []>} : vector<128x128xbf16>, vector<128x128xbf16>, vector<128x128xf32> -> vector<128x128xf32>
    %c0_70 = arith.constant 0 : index
    %c896 = arith.constant 896 : index
    %97 = vector.load %arg5[%c0_70, %c896] : memref<1x1152xf32, #tpu.memory_space<vmem>>, vector<1x128xf32>
    %98 = vector.broadcast %97 : vector<1x128xf32> to vector<128x128xf32>
    %99 = arith.addf %96, %98 : vector<128x128xf32>
    %cst_71 = arith.constant 0.000000e+00 : f32
    %100 = vector.broadcast %cst_71 : f32 to vector<128x128xf32>
    %101 = arith.maximumf %99, %100 : vector<128x128xf32>
    %102 = arith.truncf %101 : vector<128x128xf32> to vector<128x128xbf16>
    %c7 = arith.constant 7 : index
    %c0_72 = arith.constant 0 : index
    %c0_73 = arith.constant 0 : index
    %103 = vector.load %arg3[%c7, %c0_72, %c0_73] : memref<8x128x128xbf16, #tpu.memory_space<vmem>>, vector<1x128x128xbf16>
    %104 = vector.shape_cast %103 : vector<1x128x128xbf16> to vector<128x128xbf16>
    %cst_74 = arith.constant dense<0.000000e+00> : vector<128x128xf32>
    %105 = tpu.matmul %102, %104, %cst_74 {dimension_numbers = #tpu.dot_dimension_numbers<[1], [0], [0], [1], [0, 0, 1, 1], [], []>} : vector<128x128xbf16>, vector<128x128xbf16>, vector<128x128xf32> -> vector<128x128xf32>
    %c0_75 = arith.constant 0 : index
    %c1024 = arith.constant 1024 : index
    %106 = vector.load %arg5[%c0_75, %c1024] : memref<1x1152xf32, #tpu.memory_space<vmem>>, vector<1x128xf32>
    %107 = vector.broadcast %106 : vector<1x128xf32> to vector<128x128xf32>
    %108 = arith.addf %105, %107 : vector<128x128xf32>
    %cst_76 = arith.constant 0.000000e+00 : f32
    %109 = vector.broadcast %cst_76 : f32 to vector<128x128xf32>
    %110 = arith.maximumf %108, %109 : vector<128x128xf32>
    %111 = arith.truncf %110 : vector<128x128xf32> to vector<128x128xbf16>
    %c0_77 = arith.constant 0 : index
    %c0_78 = arith.constant 0 : index
    %112 = vector.load %arg4[%c0_77, %c0_78] : memref<128x784xbf16, #tpu.memory_space<vmem>>, vector<128x128xbf16>
    %cst_79 = arith.constant dense<0.000000e+00> : vector<128x128xf32>
    %113 = tpu.matmul %111, %112, %cst_79 {dimension_numbers = #tpu.dot_dimension_numbers<[1], [0], [0], [1], [0, 0, 1, 1], [], []>} : vector<128x128xbf16>, vector<128x128xbf16>, vector<128x128xf32> -> vector<128x128xf32>
    %c0_80 = arith.constant 0 : index
    %c0_81 = arith.constant 0 : index
    %114 = vector.load %arg6[%c0_80, %c0_81] : memref<1x784xf32, #tpu.memory_space<vmem>>, vector<1x128xf32>
    %115 = vector.broadcast %114 : vector<1x128xf32> to vector<128x128xf32>
    %116 = arith.addf %113, %115 : vector<128x128xf32>
    %cst_82 = arith.constant 5.000000e-01 : f32
    %117 = vector.broadcast %cst_82 : f32 to vector<128x128xf32>
    %118 = arith.mulf %117, %116 : vector<128x128xf32>
    %119 = math.tanh %118 : vector<128x128xf32>
    %cst_83 = arith.constant 5.000000e-01 : f32
    %120 = vector.broadcast %cst_83 : f32 to vector<128x128xf32>
    %121 = arith.mulf %120, %119 : vector<128x128xf32>
    %cst_84 = arith.constant 5.000000e-01 : f32
    %122 = vector.broadcast %cst_84 : f32 to vector<128x128xf32>
    %123 = arith.addf %121, %122 : vector<128x128xf32>
    %c0_85 = arith.constant 0 : index
    %c0_86 = arith.constant 0 : index
    %124 = vector.load %arg7[%c0_85, %c0_86] : memref<128x784xf32, #tpu.memory_space<vmem>>, vector<128x128xf32>
    tpu.vector_store %arg7[%c0_85, %c0_86], %123 {strides = array<i32>} : memref<128x784xf32, #tpu.memory_space<vmem>>, vector<128x128xf32>,
    %c0_87 = arith.constant 0 : index
    %c128_88 = arith.constant 128 : index
    %125 = vector.load %arg4[%c0_87, %c128_88] : memref<128x784xbf16, #tpu.memory_space<vmem>>, vector<128x128xbf16>
    %cst_89 = arith.constant dense<0.000000e+00> : vector<128x128xf32>
    %126 = tpu.matmul %111, %125, %cst_89 {dimension_numbers = #tpu.dot_dimension_numbers<[1], [0], [0], [1], [0, 0, 1, 1], [], []>} : vector<128x128xbf16>, vector<128x128xbf16>, vector<128x128xf32> -> vector<128x128xf32>
    %c0_90 = arith.constant 0 : index
    %c128_91 = arith.constant 128 : index
    %127 = vector.load %arg6[%c0_90, %c128_91] : memref<1x784xf32, #tpu.memory_space<vmem>>, vector<1x128xf32>
    %128 = vector.broadcast %127 : vector<1x128xf32> to vector<128x128xf32>
    %129 = arith.addf %126, %128 : vector<128x128xf32>
    %cst_92 = arith.constant 5.000000e-01 : f32
    %130 = vector.broadcast %cst_92 : f32 to vector<128x128xf32>
    %131 = arith.mulf %130, %129 : vector<128x128xf32>
    %132 = math.tanh %131 : vector<128x128xf32>
    %cst_93 = arith.constant 5.000000e-01 : f32
    %133 = vector.broadcast %cst_93 : f32 to vector<128x128xf32>
    %134 = arith.mulf %133, %132 : vector<128x128xf32>
    %cst_94 = arith.constant 5.000000e-01 : f32
    %135 = vector.broadcast %cst_94 : f32 to vector<128x128xf32>
    %136 = arith.addf %134, %135 : vector<128x128xf32>
    %c0_95 = arith.constant 0 : index
    %c128_96 = arith.constant 128 : index
    %137 = vector.load %arg7[%c0_95, %c128_96] : memref<128x784xf32, #tpu.memory_space<vmem>>, vector<128x128xf32>
    tpu.vector_store %arg7[%c0_95, %c128_96], %136 {strides = array<i32>} : memref<128x784xf32, #tpu.memory_space<vmem>>, vector<128x128xf32>,
    %c0_97 = arith.constant 0 : index
    %c256_98 = arith.constant 256 : index
    %138 = vector.load %arg4[%c0_97, %c256_98] : memref<128x784xbf16, #tpu.memory_space<vmem>>, vector<128x128xbf16>
    %cst_99 = arith.constant dense<0.000000e+00> : vector<128x128xf32>
    %139 = tpu.matmul %111, %138, %cst_99 {dimension_numbers = #tpu.dot_dimension_numbers<[1], [0], [0], [1], [0, 0, 1, 1], [], []>} : vector<128x128xbf16>, vector<128x128xbf16>, vector<128x128xf32> -> vector<128x128xf32>
    %c0_100 = arith.constant 0 : index
    %c256_101 = arith.constant 256 : index
    %140 = vector.load %arg6[%c0_100, %c256_101] : memref<1x784xf32, #tpu.memory_space<vmem>>, vector<1x128xf32>
    %141 = vector.broadcast %140 : vector<1x128xf32> to vector<128x128xf32>
    %142 = arith.addf %139, %141 : vector<128x128xf32>
    %cst_102 = arith.constant 5.000000e-01 : f32
    %143 = vector.broadcast %cst_102 : f32 to vector<128x128xf32>
    %144 = arith.mulf %143, %142 : vector<128x128xf32>
    %145 = math.tanh %144 : vector<128x128xf32>
    %cst_103 = arith.constant 5.000000e-01 : f32
    %146 = vector.broadcast %cst_103 : f32 to vector<128x128xf32>
    %147 = arith.mulf %146, %145 : vector<128x128xf32>
    %cst_104 = arith.constant 5.000000e-01 : f32
    %148 = vector.broadcast %cst_104 : f32 to vector<128x128xf32>
    %149 = arith.addf %147, %148 : vector<128x128xf32>
    %c0_105 = arith.constant 0 : index
    %c256_106 = arith.constant 256 : index
    %150 = vector.load %arg7[%c0_105, %c256_106] : memref<128x784xf32, #tpu.memory_space<vmem>>, vector<128x128xf32>
    tpu.vector_store %arg7[%c0_105, %c256_106], %149 {strides = array<i32>} : memref<128x784xf32, #tpu.memory_space<vmem>>, vector<128x128xf32>,
    %c0_107 = arith.constant 0 : index
    %c384_108 = arith.constant 384 : index
    %151 = vector.load %arg4[%c0_107, %c384_108] : memref<128x784xbf16, #tpu.memory_space<vmem>>, vector<128x128xbf16>
    %cst_109 = arith.constant dense<0.000000e+00> : vector<128x128xf32>
    %152 = tpu.matmul %111, %151, %cst_109 {dimension_numbers = #tpu.dot_dimension_numbers<[1], [0], [0], [1], [0, 0, 1, 1], [], []>} : vector<128x128xbf16>, vector<128x128xbf16>, vector<128x128xf32> -> vector<128x128xf32>
    %c0_110 = arith.constant 0 : index
    %c384_111 = arith.constant 384 : index
    %153 = vector.load %arg6[%c0_110, %c384_111] : memref<1x784xf32, #tpu.memory_space<vmem>>, vector<1x128xf32>
    %154 = vector.broadcast %153 : vector<1x128xf32> to vector<128x128xf32>
    %155 = arith.addf %152, %154 : vector<128x128xf32>
    %cst_112 = arith.constant 5.000000e-01 : f32
    %156 = vector.broadcast %cst_112 : f32 to vector<128x128xf32>
    %157 = arith.mulf %156, %155 : vector<128x128xf32>
    %158 = math.tanh %157 : vector<128x128xf32>
    %cst_113 = arith.constant 5.000000e-01 : f32
    %159 = vector.broadcast %cst_113 : f32 to vector<128x128xf32>
    %160 = arith.mulf %159, %158 : vector<128x128xf32>
    %cst_114 = arith.constant 5.000000e-01 : f32
    %161 = vector.broadcast %cst_114 : f32 to vector<128x128xf32>
    %162 = arith.addf %160, %161 : vector<128x128xf32>
    %c0_115 = arith.constant 0 : index
    %c384_116 = arith.constant 384 : index
    %163 = vector.load %arg7[%c0_115, %c384_116] : memref<128x784xf32, #tpu.memory_space<vmem>>, vector<128x128xf32>
    tpu.vector_store %arg7[%c0_115, %c384_116], %162 {strides = array<i32>} : memref<128x784xf32, #tpu.memory_space<vmem>>, vector<128x128xf32>,
    %c0_117 = arith.constant 0 : index
    %c512_118 = arith.constant 512 : index
    %164 = vector.load %arg4[%c0_117, %c512_118] : memref<128x784xbf16, #tpu.memory_space<vmem>>, vector<128x128xbf16>
    %cst_119 = arith.constant dense<0.000000e+00> : vector<128x128xf32>
    %165 = tpu.matmul %111, %164, %cst_119 {dimension_numbers = #tpu.dot_dimension_numbers<[1], [0], [0], [1], [0, 0, 1, 1], [], []>} : vector<128x128xbf16>, vector<128x128xbf16>, vector<128x128xf32> -> vector<128x128xf32>
    %c0_120 = arith.constant 0 : index
    %c512_121 = arith.constant 512 : index
    %166 = vector.load %arg6[%c0_120, %c512_121] : memref<1x784xf32, #tpu.memory_space<vmem>>, vector<1x128xf32>
    %167 = vector.broadcast %166 : vector<1x128xf32> to vector<128x128xf32>
    %168 = arith.addf %165, %167 : vector<128x128xf32>
    %cst_122 = arith.constant 5.000000e-01 : f32
    %169 = vector.broadcast %cst_122 : f32 to vector<128x128xf32>
    %170 = arith.mulf %169, %168 : vector<128x128xf32>
    %171 = math.tanh %170 : vector<128x128xf32>
    %cst_123 = arith.constant 5.000000e-01 : f32
    %172 = vector.broadcast %cst_123 : f32 to vector<128x128xf32>
    %173 = arith.mulf %172, %171 : vector<128x128xf32>
    %cst_124 = arith.constant 5.000000e-01 : f32
    %174 = vector.broadcast %cst_124 : f32 to vector<128x128xf32>
    %175 = arith.addf %173, %174 : vector<128x128xf32>
    %c0_125 = arith.constant 0 : index
    %c512_126 = arith.constant 512 : index
    %176 = vector.load %arg7[%c0_125, %c512_126] : memref<128x784xf32, #tpu.memory_space<vmem>>, vector<128x128xf32>
    tpu.vector_store %arg7[%c0_125, %c512_126], %175 {strides = array<i32>} : memref<128x784xf32, #tpu.memory_space<vmem>>, vector<128x128xf32>,
    %c0_127 = arith.constant 0 : index
    %c640_128 = arith.constant 640 : index
    %177 = vector.load %arg4[%c0_127, %c640_128] : memref<128x784xbf16, #tpu.memory_space<vmem>>, vector<128x128xbf16>
    %cst_129 = arith.constant dense<0.000000e+00> : vector<128x128xf32>
    %178 = tpu.matmul %111, %177, %cst_129 {dimension_numbers = #tpu.dot_dimension_numbers<[1], [0], [0], [1], [0, 0, 1, 1], [], []>} : vector<128x128xbf16>, vector<128x128xbf16>, vector<128x128xf32> -> vector<128x128xf32>
    %c0_130 = arith.constant 0 : index
    %c640_131 = arith.constant 640 : index
    %179 = vector.load %arg6[%c0_130, %c640_131] : memref<1x784xf32, #tpu.memory_space<vmem>>, vector<1x128xf32>
    %180 = vector.broadcast %179 : vector<1x128xf32> to vector<128x128xf32>
    %181 = arith.addf %178, %180 : vector<128x128xf32>
    %cst_132 = arith.constant 5.000000e-01 : f32
    %182 = vector.broadcast %cst_132 : f32 to vector<128x128xf32>
    %183 = arith.mulf %182, %181 : vector<128x128xf32>
    %184 = math.tanh %183 : vector<128x128xf32>
    %cst_133 = arith.constant 5.000000e-01 : f32
    %185 = vector.broadcast %cst_133 : f32 to vector<128x128xf32>
    %186 = arith.mulf %185, %184 : vector<128x128xf32>
    %cst_134 = arith.constant 5.000000e-01 : f32
    %187 = vector.broadcast %cst_134 : f32 to vector<128x128xf32>
    %188 = arith.addf %186, %187 : vector<128x128xf32>
    %c0_135 = arith.constant 0 : index
    %c640_136 = arith.constant 640 : index
    %189 = vector.load %arg7[%c0_135, %c640_136] : memref<128x784xf32, #tpu.memory_space<vmem>>, vector<128x128xf32>
    tpu.vector_store %arg7[%c0_135, %c640_136], %188 {strides = array<i32>} : memref<128x784xf32, #tpu.memory_space<vmem>>, vector<128x128xf32>,
    %c0_137 = arith.constant 0 : index
    %c768_138 = arith.constant 768 : index
    %190 = vector.load %arg4[%c0_137, %c768_138] : memref<128x784xbf16, #tpu.memory_space<vmem>>, vector<128x16xbf16>
    %cst_139 = arith.constant dense<0.000000e+00> : vector<128x16xf32>
    %191 = tpu.matmul %111, %190, %cst_139 {dimension_numbers = #tpu.dot_dimension_numbers<[1], [0], [0], [1], [0, 0, 1, 1], [], []>} : vector<128x128xbf16>, vector<128x16xbf16>, vector<128x16xf32> -> vector<128x16xf32>
    %c0_140 = arith.constant 0 : index
    %c768_141 = arith.constant 768 : index
    %192 = vector.load %arg6[%c0_140, %c768_141] : memref<1x784xf32, #tpu.memory_space<vmem>>, vector<1x16xf32>
    %193 = vector.broadcast %192 : vector<1x16xf32> to vector<128x16xf32>
    %194 = arith.addf %191, %193 : vector<128x16xf32>
    %cst_142 = arith.constant 5.000000e-01 : f32
    %195 = vector.broadcast %cst_142 : f32 to vector<128x16xf32>
    %196 = arith.mulf %195, %194 : vector<128x16xf32>
    %197 = math.tanh %196 : vector<128x16xf32>
    %cst_143 = arith.constant 5.000000e-01 : f32
    %198 = vector.broadcast %cst_143 : f32 to vector<128x16xf32>
    %199 = arith.mulf %198, %197 : vector<128x16xf32>
    %cst_144 = arith.constant 5.000000e-01 : f32
    %200 = vector.broadcast %cst_144 : f32 to vector<128x16xf32>
    %201 = arith.addf %199, %200 : vector<128x16xf32>
    %c0_145 = arith.constant 0 : index
    %c768_146 = arith.constant 768 : index
    %202 = vector.load %arg7[%c0_145, %c768_146] : memref<128x784xf32, #tpu.memory_space<vmem>>, vector<128x16xf32>
    tpu.vector_store %arg7[%c0_145, %c768_146], %201 {strides = array<i32>} : memref<128x784xf32, #tpu.memory_space<vmem>>, vector<128x16xf32>,
    return
  }
  func.func @transform_0(%arg0: i32) -> (i32, i32) {
    %c0_i32 = arith.constant 0 : i32
    %c0_i32_0 = arith.constant 0 : i32
    return %arg0, %c0_i32 : i32, i32
  }
  func.func @transform_1(%arg0: i32) -> (i32, i32) {
    %c0_i32 = arith.constant 0 : i32
    %c0_i32_0 = arith.constant 0 : i32
    %c0_i32_1 = arith.constant 0 : i32
    return %c0_i32, %c0_i32_0 : i32, i32
  }
  func.func @transform_2(%arg0: i32) -> (i32, i32, i32) {
    %c0_i32 = arith.constant 0 : i32
    %c0_i32_0 = arith.constant 0 : i32
    %c0_i32_1 = arith.constant 0 : i32
    %c0_i32_2 = arith.constant 0 : i32
    return %c0_i32, %c0_i32_0, %c0_i32_1 : i32, i32, i32
  }
  func.func @transform_3(%arg0: i32) -> (i32, i32) {
    %c0_i32 = arith.constant 0 : i32
    %c0_i32_0 = arith.constant 0 : i32
    %c0_i32_1 = arith.constant 0 : i32
    return %c0_i32, %c0_i32_0 : i32, i32
  }
  func.func @transform_4(%arg0: i32) -> (i32, i32) {
    %c0_i32 = arith.constant 0 : i32
    %c0_i32_0 = arith.constant 0 : i32
    %c0_i32_1 = arith.constant 0 : i32
    return %c0_i32, %c0_i32_0 : i32, i32
  }
  func.func @transform_5(%arg0: i32) -> (i32, i32) {
    %c0_i32 = arith.constant 0 : i32
    %c0_i32_0 = arith.constant 0 : i32
    %c0_i32_1 = arith.constant 0 : i32
    return %c0_i32, %c0_i32_0 : i32, i32
  }
  func.func @transform_6(%arg0: i32) -> (i32, i32) {
    %c0_i32 = arith.constant 0 : i32
    %c0_i32_0 = arith.constant 0 : i32
    return %arg0, %c0_i32 : i32, i32
  }
}

</mosaic_0001>

<llo_original>
// kernel: autoencoder_forward.1
$region0: #{autoencoder_forward.1}
  #allocation0 [shape = 'u32[]', space=smem, size = 0x4, offset = 0x4, fixed_abs, tag = 'smem constant byte address 0x4 - core index']
  #allocation1 [shape = 'u32[144,128]{1,0:T(1,128)}', space=vmem, size = 0x12000, scoped, tag = 'internal scratch']
  %s0 = inlined_call_operand.vmem [shape: f32[512,784], index: 0, kind: input, shape index: {}]
  %s1 = inlined_call_operand.vmem [shape: bf16[784,128], index: 1, kind: input, shape index: {}]
  %s2 = inlined_call_operand.vmem [shape: bf16[8,128,128], index: 2, kind: input, shape index: {}]
  %s3 = inlined_call_operand.vmem [shape: bf16[128,784], index: 3, kind: input, shape index: {}]
  %s4 = inlined_call_operand.vmem [shape: f32[1,1152], index: 4, kind: input, shape index: {}]
  %s5 = inlined_call_operand.vmem [shape: f32[1,784], index: 5, kind: input, shape index: {}]
  %s6 = inlined_call_operand.vmem [shape: f32[512,784], index: 6, kind: output, shape index: {}]
  %s7 = sld [smem:[#allocation0]]
  $region57: #{autoencoder_forward.1} parent=0
    _
  %s9 = ssub.s32 1, %s7
  %s10 = scalar_select 0, %s9, %s7
  loop: start=0, step=1, limit=6
  $region2: #{autoencoder_forward.1} parent=0 // loop_pre_header
    _
  $region3: #{autoencoder_forward.1} parent=0 // loop_header
    %s12 = sphi 0, %s16
    %p13 = scmp.ge.s32.totalorder %s12, 6
    %s22 = sphi 0, %s24
    %s25 = sphi 0, %s22
    %s26 = sphi 0, %s25
    %s42 = sphi 0, %s26
    %s46 = sphi 0, %s46
    %s48 = sphi 0, %s46
    %s49 = sphi 0, %s48
    %s63 = sphi 0, %s49
    %s67 = sphi 0, %s67
    %s69 = sphi 0, %s67
    %s70 = sphi 0, %s69
    %s84 = sphi 0, %s70
    %s88 = sphi 0, %s88
    %s90 = sphi 0, %s88
    %s91 = sphi 0, %s90
    %s105 = sphi 0, %s91
    %s109 = sphi 0, %s109
    %s111 = sphi 0, %s109
    %s112 = sphi 0, %s111
    %s126 = sphi 0, %s112
    %s130 = sphi 0, %s130
    %s132 = sphi 0, %s130
    %s133 = sphi 0, %s132
    %s147 = sphi 0, %s133
    %s153 = sphi 0, %s155
    %s156 = sphi 0, %s153
    %s157 = sphi 0, %s156
    %s173 = sphi 0, %s157
  $region4: #{autoencoder_forward.1} parent=0 // loop_header_branch
    %15 = sbr.rel (%p13) target = $region8
  $region5: #{autoencoder_forward.1} parent=0 // loop_body
    %s17 = ssub.s32 %s12, 1
    %s18 = ssub.s32 %s12, 2
    %s19 = sadd.s32 %s12, 1
    %s20 = ssub.s32 %s12, %s19
    %p21 = scmp.eq.s32.totalorder %s20, 0
    %s23 = sadd.s32 %s22, 1
    %s24 = scalar_select %p21, %s22, %s23
    %p27 = pneg %p21
    %p28 = scmp.eq.s32.totalorder %s12, 3
    %p29 = por %p27, %p28
    %p30 = scmp.ne.s32.totalorder %s22, %s25
    %p31 = scmp.eq.s32.totalorder %s12, 0
    %p32 = por %p30, %p31
    %p33 = scmp.ne.s32.totalorder %s22, %s25
    %p34 = scmp.eq.s32.totalorder %s17, 3
    %p35 = por %p33, %p34
    %p36 = scmp.ne.s32.totalorder %s25, %s26
    %p37 = scmp.eq.s32.totalorder %s17, 0
    %p38 = por %p36, %p37
    %p39 = scmp.ne.s32.totalorder %s25, %s26
    %p40 = scmp.eq.s32.totalorder %s18, 3
    %p41 = por %p39, %p40
    %p43 = scmp.ne.s32.totalorder %s26, %s42
    %p44 = scmp.eq.s32.totalorder %s18, 0
    %p45 = por %p43, %p44
    %s47 = sadd.s32 %s46, 1
    %p50 = scmp.eq.s32.totalorder %s12, 3
    %p51 = scmp.ne.s32.totalorder %s46, %s48
    %p52 = scmp.eq.s32.totalorder %s12, 0
    %p53 = por %p51, %p52
    %p54 = scmp.ne.s32.totalorder %s46, %s48
    %p55 = scmp.eq.s32.totalorder %s17, 3
    %p56 = por %p54, %p55
    %p57 = scmp.ne.s32.totalorder %s48, %s49
    %p58 = scmp.eq.s32.totalorder %s17, 0
    %p59 = por %p57, %p58
    %p60 = scmp.ne.s32.totalorder %s48, %s49
    %p61 = scmp.eq.s32.totalorder %s18, 3
    %p62 = por %p60, %p61
    %p64 = scmp.ne.s32.totalorder %s49, %s63
    %p65 = scmp.eq.s32.totalorder %s18, 0
    %p66 = por %p64, %p65
    %s68 = sadd.s32 %s67, 1
    %p71 = scmp.eq.s32.totalorder %s12, 3
    %p72 = scmp.ne.s32.totalorder %s67, %s69
    %p73 = scmp.eq.s32.totalorder %s12, 0
    %p74 = por %p72, %p73
    %p75 = scmp.ne.s32.totalorder %s67, %s69
    %p76 = scmp.eq.s32.totalorder %s17, 3
    %p77 = por %p75, %p76
    %p78 = scmp.ne.s32.totalorder %s69, %s70
    %p79 = scmp.eq.s32.totalorder %s17, 0
    %p80 = por %p78, %p79
    %p81 = scmp.ne.s32.totalorder %s69, %s70
    %p82 = scmp.eq.s32.totalorder %s18, 3
    %p83 = por %p81, %p82
    %p85 = scmp.ne.s32.totalorder %s70, %s84
    %p86 = scmp.eq.s32.totalorder %s18, 0
    %p87 = por %p85, %p86
    %s89 = sadd.s32 %s88, 1
    %p92 = scmp.eq.s32.totalorder %s12, 3
    %p93 = scmp.ne.s32.totalorder %s88, %s90
    %p94 = scmp.eq.s32.totalorder %s12, 0
    %p95 = por %p93, %p94
    %p96 = scmp.ne.s32.totalorder %s88, %s90
    %p97 = scmp.eq.s32.totalorder %s17, 3
    %p98 = por %p96, %p97
    %p99 = scmp.ne.s32.totalorder %s90, %s91
    %p100 = scmp.eq.s32.totalorder %s17, 0
    %p101 = por %p99, %p100
    %p102 = scmp.ne.s32.totalorder %s90, %s91
    %p103 = scmp.eq.s32.totalorder %s18, 3
    %p104 = por %p102, %p103
    %p106 = scmp.ne.s32.totalorder %s91, %s105
    %p107 = scmp.eq.s32.totalorder %s18, 0
    %p108 = por %p106, %p107
    %s110 = sadd.s32 %s109, 1
    %p113 = scmp.eq.s32.totalorder %s12, 3
    %p114 = scmp.ne.s32.totalorder %s109, %s111
    %p115 = scmp.eq.s32.totalorder %s12, 0
    %p116 = por %p114, %p115
    %p117 = scmp.ne.s32.totalorder %s109, %s111
    %p118 = scmp.eq.s32.totalorder %s17, 3
    %p119 = por %p117, %p118
    %p120 = scmp.ne.s32.totalorder %s111, %s112
    %p121 = scmp.eq.s32.totalorder %s17, 0
    %p122 = por %p120, %p121
    %p123 = scmp.ne.s32.totalorder %s111, %s112
    %p124 = scmp.eq.s32.totalorder %s18, 3
    %p125 = por %p123, %p124
    %p127 = scmp.ne.s32.totalorder %s112, %s126
    %p128 = scmp.eq.s32.totalorder %s18, 0
    %p129 = por %p127, %p128
    %s131 = sadd.s32 %s130, 1
    %p134 = scmp.eq.s32.totalorder %s12, 3
    %p135 = scmp.ne.s32.totalorder %s130, %s132
    %p136 = scmp.eq.s32.totalorder %s12, 0
    %p137 = por %p135, %p136
    %p138 = scmp.ne.s32.totalorder %s130, %s132
    %p139 = scmp.eq.s32.totalorder %s17, 3
    %p140 = por %p138, %p139
    %p141 = scmp.ne.s32.totalorder %s132, %s133
    %p142 = scmp.eq.s32.totalorder %s17, 0
    %p143 = por %p141, %p142
    %p144 = scmp.ne.s32.totalorder %s132, %s133
    %p145 = scmp.eq.s32.totalorder %s18, 3
    %p146 = por %p144, %p145
    %p148 = scmp.ne.s32.totalorder %s133, %s147
    %p149 = scmp.eq.s32.totalorder %s18, 0
    %p150 = por %p148, %p149
    %s151 = ssub.s32 %s12, %s19
    %p152 = scmp.eq.s32.totalorder %s151, 0
    %s154 = sadd.s32 %s153, 1
    %s155 = scalar_select %p152, %s153, %s154
    %p158 = pneg %p152
    %p159 = scmp.eq.s32.totalorder %s12, 3
    %p160 = por %p158, %p159
    %p161 = scmp.ne.s32.totalorder %s153, %s156
    %p162 = scmp.eq.s32.totalorder %s12, 0
    %p163 = por %p161, %p162
    %p164 = scmp.ne.s32.totalorder %s153, %s156
    %p165 = scmp.eq.s32.totalorder %s17, 3
    %p166 = por %p164, %p165
    %p167 = scmp.ne.s32.totalorder %s156, %s157
    %p168 = scmp.eq.s32.totalorder %s17, 0
    %p169 = por %p167, %p168
    %p170 = scmp.ne.s32.totalorder %s156, %s157
    %p171 = scmp.eq.s32.totalorder %s18, 3
    %p172 = por %p170, %p171
    %p174 = scmp.ne.s32.totalorder %s157, %s173
    %p175 = scmp.eq.s32.totalorder %s18, 0
    %p176 = por %p174, %p175
    %p177 = scmp.le.s32.totalorder 1, %s12
    %p178 = scmp.lt.s32.totalorder %s12, 5
    %p179 = pnand %p177, %p178
    %p180 = pneg %p179
    // Predicated region
    $region9: #{autoencoder_forward.1} parent=5 // pred_check
      _
    $region10: #{autoencoder_forward.1} parent=5 // pred_check_branch
      %182 = sbr.rel (%p179) target = $region12
    $region11: #{autoencoder_forward.1} parent=5 // pred_region
      %s183 = ssub.s32 %s12, 1
      // Predicated region
      $region13: #{autoencoder_forward.1} parent=11 // pred_check
        %p184 = pneg %p59
      $region14: #{autoencoder_forward.1} parent=11 // pred_check_branch
        %186 = sbr.rel (%p184) target = $region16
      $region15: #{autoencoder_forward.1} parent=11 // pred_region
        _
      $region16: #{autoencoder_forward.1} parent=11 // pred_fallthru
        _
      // Predicated region
      $region17: #{autoencoder_forward.1} parent=11 // pred_check
        %p187 = pneg %p80
      $region18: #{autoencoder_forward.1} parent=11 // pred_check_branch
        %189 = sbr.rel (%p187) target = $region20
      $region19: #{autoencoder_forward.1} parent=11 // pred_region
        _
      $region20: #{autoencoder_forward.1} parent=11 // pred_fallthru
        _
      // Predicated region
      $region21: #{autoencoder_forward.1} parent=11 // pred_check
        %p190 = pneg %p101
      $region22: #{autoencoder_forward.1} parent=11 // pred_check_branch
        %192 = sbr.rel (%p190) target = $region24
      $region23: #{autoencoder_forward.1} parent=11 // pred_region
        _
      $region24: #{autoencoder_forward.1} parent=11 // pred_fallthru
        _
      // Predicated region
      $region25: #{autoencoder_forward.1} parent=11 // pred_check
        %p193 = pneg %p122
      $region26: #{autoencoder_forward.1} parent=11 // pred_check_branch
        %195 = sbr.rel (%p193) target = $region28
      $region27: #{autoencoder_forward.1} parent=11 // pred_region
        _
      $region28: #{autoencoder_forward.1} parent=11 // pred_fallthru
        _
      // Predicated region
      $region29: #{autoencoder_forward.1} parent=11 // pred_check
        %p196 = pneg %p143
      $region30: #{autoencoder_forward.1} parent=11 // pred_check_branch
        %198 = sbr.rel (%p196) target = $region32
      $region31: #{autoencoder_forward.1} parent=11 // pred_region
        _
      $region32: #{autoencoder_forward.1} parent=11 // pred_fallthru
        _
    $region12: #{autoencoder_forward.1} parent=5 // pred_fallthru
      _
    %p199 = scmp.lt.s32.totalorder %s12, 4
    // Predicated region
    $region33: #{autoencoder_forward.1} parent=5 // pred_check
      %p200 = pneg %p199
    $region34: #{autoencoder_forward.1} parent=5 // pred_check_branch
      %202 = sbr.rel (%p200) target = $region36
    $region35: #{autoencoder_forward.1} parent=5 // pred_region
      // Predicated region
      $region37: #{autoencoder_forward.1} parent=35 // pred_check
        %p203 = pneg %p32
      $region38: #{autoencoder_forward.1} parent=35 // pred_check_branch
        %205 = sbr.rel (%p203) target = $region40
      $region39: #{autoencoder_forward.1} parent=35 // pred_region
        %s206 = smul.u32 16, %s12
        %p207 = scmp.lt.s32.totalorder %s206, 63
        %s208 = scalar_select %p207, %s206, 63
        %s209 = smul.addr %s208, 7
        %s210 = smul.addr %s209, 8
        %s211 = scalar_lea.vmem %s0, %s210
        %s212 = smul.u32 16, %s12
      $region40: #{autoencoder_forward.1} parent=35 // pred_fallthru
        _
    $region36: #{autoencoder_forward.1} parent=5 // pred_fallthru
      _
    %p213 = scmp.le.s32.totalorder 1, %s12
    %p214 = scmp.lt.s32.totalorder %s12, 5
    %p215 = pnand %p213, %p214
    %p216 = pneg %p215
    // Predicated region
    $region41: #{autoencoder_forward.1} parent=5 // pred_check
      _
    $region42: #{autoencoder_forward.1} parent=5 // pred_check_branch
      %218 = sbr.rel (%p215) target = $region44
    $region43: #{autoencoder_forward.1} parent=5 // pred_region
      %s219 = ssub.s32 %s12, 1
      %s220 = smul.u32 16, %s17
      %p221 = scmp.lt.s32.totalorder %s220, 63
      %s222 = scalar_select %p221, %s220, 63
      %s223 = smul.addr %s222, 7
      %s224 = smul.addr %s223, 8
      %s225 = scalar_lea.vmem %s0, %s224
      %p226 = pneg %p38
      %p227 = pneg %p35
      %p228 = pneg %p59
      %p229 = pneg %p56
      %p230 = pneg %p80
      %p231 = pneg %p77
      %p232 = pneg %p101
      %p233 = pneg %p98
      %p234 = pneg %p122
      %p235 = pneg %p119
      %p236 = pneg %p143
      %p237 = pneg %p140
      %p238 = pneg %p169
      %p239 = pneg %p166
      %s240 = smul.u32 16, %s17
      %p241 = scmp.lt.s32.totalorder %s240, 63
      %s242 = scalar_select %p241, %s240, 63
      %s243 = smul.addr %s242, 7
      %s244 = smul.addr %s243, 8
      %s245 = scalar_lea.vmem %s6, %s244
      %s246 = smul.u32 16, %s17
      %p247 = scmp.lt.s32.totalorder %s246, 63
      %s248 = scalar_select %p247, %s246, 63
      %s249 = smul.addr %s248, 7
      %s250 = smul.addr %s249, 8
      %s251 = scalar_lea.vmem %s0, %s250
      %s252 = smul.u32 16, %s17
      %s253 = smul.u32 16, %s17
      %p254 = scmp.lt.s32.totalorder %s253, 63
      %s255 = scalar_select %p254, %s253, 63
      %s256 = smul.addr %s255, 7
      %s257 = smul.addr %s256, 8
      %s258 = scalar_lea.vmem %s6, %s257
      %s259 = smul.u32 16, %s17
      %v261 = vld [vmem:[%s251] sm:$0xff]
      %v262 = vld [vmem:[%s251 + $0x38] sm:$0xff]
      %v263 = vld [vmem:[%s251 + $0x70] sm:$0xff]
      %v264 = vld [vmem:[%s251 + $0xa8] sm:$0xff]
      %v265 = vld [vmem:[%s251 + $0xe0] sm:$0xff]
      %v266 = vld [vmem:[%s251 + $0x118] sm:$0xff]
      %v267 = vld [vmem:[%s251 + $0x150] sm:$0xff]
      %v268 = vld [vmem:[%s251 + $0x188] sm:$0xff]
      %v269 = vld [vmem:[%s251 + $0x1c0] sm:$0xff]
      %v270 = vld [vmem:[%s251 + $0x1f8] sm:$0xff]
      %v271 = vld [vmem:[%s251 + $0x230] sm:$0xff]
      %v272 = vld [vmem:[%s251 + $0x268] sm:$0xff]
      %v273 = vld [vmem:[%s251 + $0x2a0] sm:$0xff]
      %v274 = vld [vmem:[%s251 + $0x2d8] sm:$0xff]
      %v275 = vld [vmem:[%s251 + $0x310] sm:$0xff]
      %v276 = vld [vmem:[%s251 + $0x348] sm:$0xff]
      %v277 = vpack.c.bf16 %v262, %v261
      %v278 = vpack.c.bf16 %v264, %v263
      %v279 = vpack.c.bf16 %v266, %v265
      %v280 = vpack.c.bf16 %v268, %v267
      %v281 = vpack.c.bf16 %v270, %v269
      %v282 = vpack.c.bf16 %v272, %v271
      %v283 = vpack.c.bf16 %v274, %v273
      %v284 = vpack.c.bf16 %v276, %v275
      %v285 = vld [vmem:[%s1] sm:$0xf]
      %v286 = vld [vmem:[%s1 + $0x4] sm:$0xf]
      %v287 = vld [vmem:[%s1 + $0x8] sm:$0xf]
      %v288 = vld [vmem:[%s1 + $0xc] sm:$0xf]
      %v289 = vld [vmem:[%s1 + $0x10] sm:$0xf]
      %v290 = vld [vmem:[%s1 + $0x14] sm:$0xf]
      %v291 = vld [vmem:[%s1 + $0x18] sm:$0xf]
      %v292 = vld [vmem:[%s1 + $0x1c] sm:$0xf]
      %v293 = vld [vmem:[%s1 + $0x20] sm:$0xf]
      %v294 = vld [vmem:[%s1 + $0x24] sm:$0xf]
      %v295 = vld [vmem:[%s1 + $0x28] sm:$0xf]
      %v296 = vld [vmem:[%s1 + $0x2c] sm:$0xf]
      %v297 = vld [vmem:[%s1 + $0x30] sm:$0xf]
      %v298 = vld [vmem:[%s1 + $0x34] sm:$0xf]
      %v299 = vld [vmem:[%s1 + $0x38] sm:$0xf]
      %v300 = vld [vmem:[%s1 + $0x3c] sm:$0xf]
      %v301 = vld [vmem:[%s251 + $0x8] sm:$0xff]
      %v302 = vld [vmem:[%s251 + $0x40] sm:$0xff]
      %v303 = vld [vmem:[%s251 + $0x78] sm:$0xff]
      %v304 = vld [vmem:[%s251 + $0xb0] sm:$0xff]
      %v305 = vld [vmem:[%s251 + $0xe8] sm:$0xff]
      %v306 = vld [vmem:[%s251 + $0x120] sm:$0xff]
      %v307 = vld [vmem:[%s251 + $0x158] sm:$0xff]
      %v308 = vld [vmem:[%s251 + $0x190] sm:$0xff]
      %v309 = vld [vmem:[%s251 + $0x1c8] sm:$0xff]
      %v310 = vld [vmem:[%s251 + $0x200] sm:$0xff]
      %v311 = vld [vmem:[%s251 + $0x238] sm:$0xff]
      %v312 = vld [vmem:[%s251 + $0x270] sm:$0xff]
      %v313 = vld [vmem:[%s251 + $0x2a8] sm:$0xff]
      %v314 = vld [vmem:[%s251 + $0x2e0] sm:$0xff]
      %v315 = vld [vmem:[%s251 + $0x318] sm:$0xff]
      %v316 = vld [vmem:[%s251 + $0x350] sm:$0xff]
      %v317 = vpack.c.bf16 %v302, %v301
      %v318 = vpack.c.bf16 %v304, %v303
      %v319 = vpack.c.bf16 %v306, %v305
      %v320 = vpack.c.bf16 %v308, %v307
      %v321 = vpack.c.bf16 %v310, %v309
      %v322 = vpack.c.bf16 %v312, %v311
      %v323 = vpack.c.bf16 %v314, %v313
      %v324 = vpack.c.bf16 %v316, %v315
      %v325 = vld [vmem:[%s1 + $0x40] sm:$0xf]
      %v326 = vld [vmem:[%s1 + $0x44] sm:$0xf]
      %v327 = vld [vmem:[%s1 + $0x48] sm:$0xf]
      %v328 = vld [vmem:[%s1 + $0x4c] sm:$0xf]
      %v329 = vld [vmem:[%s1 + $0x50] sm:$0xf]
      %v330 = vld [vmem:[%s1 + $0x54] sm:$0xf]
      %v331 = vld [vmem:[%s1 + $0x58] sm:$0xf]
      %v332 = vld [vmem:[%s1 + $0x5c] sm:$0xf]
      %v333 = vld [vmem:[%s1 + $0x60] sm:$0xf]
      %v334 = vld [vmem:[%s1 + $0x64] sm:$0xf]
      %v335 = vld [vmem:[%s1 + $0x68] sm:$0xf]
      %v336 = vld [vmem:[%s1 + $0x6c] sm:$0xf]
      %v337 = vld [vmem:[%s1 + $0x70] sm:$0xf]
      %v338 = vld [vmem:[%s1 + $0x74] sm:$0xf]
      %v339 = vld [vmem:[%s1 + $0x78] sm:$0xf]
      %v340 = vld [vmem:[%s1 + $0x7c] sm:$0xf]
      %v357 = vunpack.c.l.b16 %v325
      %v358 = vunpack.c.l.b16 %v326
      %v359 = vunpack.c.l.b16 %v327
      %v360 = vunpack.c.l.b16 %v328
      %v361 = vunpack.c.l.b16 %v329
      %v362 = vunpack.c.l.b16 %v330
      %v363 = vunpack.c.l.b16 %v331
      %v364 = vunpack.c.l.b16 %v332
      %v365 = vunpack.c.l.b16 %v333
      %v366 = vunpack.c.l.b16 %v334
      %v367 = vunpack.c.l.b16 %v335
      %v368 = vunpack.c.l.b16 %v336
      %v369 = vunpack.c.l.b16 %v337
      %v370 = vunpack.c.l.b16 %v338
      %v371 = vunpack.c.l.b16 %v339
      %v372 = vunpack.c.l.b16 %v340
      %v373 = vpack.c.b16 %v358, %v357
      %v374 = vpack.c.b16 %v360, %v359
      %v375 = vpack.c.b16 %v362, %v361
      %v376 = vpack.c.b16 %v364, %v363
      %v377 = vpack.c.b16 %v366, %v365
      %v378 = vpack.c.b16 %v368, %v367
      %v379 = vpack.c.b16 %v370, %v369
      %v380 = vpack.c.b16 %v372, %v371
      %389 = vmatprep.subr.bf16.mxu0 0
      %390 = vmatpush1.bf16.msra.mxu0 %v373
      %391 = vmatprep.subr.bf16.mxu0 0
      %392 = vmatpush1.bf16.msra.mxu0 %v374
      %393 = vmatprep.subr.bf16.mxu0 0
      %394 = vmatpush1.bf16.msra.mxu0 %v375
      %395 = vmatprep.subr.bf16.mxu0 0
      %396 = vmatpush1.bf16.msra.mxu0 %v376
      %397 = vmatprep.subr.bf16.mxu0 0
      %398 = vmatpush1.bf16.msra.mxu0 %v377
      %399 = vmatprep.subr.bf16.mxu0 0
      %400 = vmatpush1.bf16.msra.mxu0 %v378
      %401 = vmatprep.subr.bf16.mxu0 0
      %402 = vmatpush1.bf16.msra.mxu0 %v379
      %403 = vmatprep.subr.bf16.mxu0 0
      %404 = vmatpush1.bf16.msra.mxu0 %v380
      %405 = vmatprep.subr.bf16.mxu0 0
      %406 = vmatpush1.bf16.msra.mxu0 0
      %407 = vmatprep.subr.bf16.mxu0 0
      %408 = vmatpush1.bf16.msra.mxu0 0
      %409 = vmatprep.subr.bf16.mxu0 0
      %410 = vmatpush1.bf16.msra.mxu0 0
      %411 = vmatprep.subr.bf16.mxu0 0
      %412 = vmatpush1.bf16.msra.mxu0 0
      %413 = vmatprep.subr.bf16.mxu0 0
      %414 = vmatpush1.bf16.msra.mxu0 0
      %415 = vmatprep.subr.bf16.mxu0 0
      %416 = vmatpush1.bf16.msra.mxu0 0
      %417 = vmatprep.subr.bf16.mxu0 0
      %418 = vmatpush1.bf16.msra.mxu0 0
      %419 = vmatprep.subr.bf16.mxu0 0
      %420 = vmatpush1.bf16.msra.mxu0 0
      %421 = vmatprep.mubr.bf16.mxu0 0
      %422 = vmatmul.mubr.bf16.gmra.mrb[0].mxu0 %v317
      %v423 = vpop.f32.mrb[0].mxu0
      %v424 = vadd.f32 0.0, %v423
      %v425 = vpop.f32.mrb[0].mxu0
      %v426 = vpop.f32.mrb[0].mxu0
      %v427 = vadd.f32 0.0, %v426
      %v428 = vpop.f32.mrb[0].mxu0
      %429 = vmatprep.mubr.bf16.mxu0 0
      %430 = vmatmul.mubr.bf16.gmra.mrb[0].mxu0 %v318
      %v431 = vpop.f32.mrb[0].mxu0
      %v432 = vadd.f32 0.0, %v431
      %v433 = vpop.f32.mrb[0].mxu0
      %v434 = vpop.f32.mrb[0].mxu0
      %v435 = vadd.f32 0.0, %v434
      %v436 = vpop.f32.mrb[0].mxu0
      %437 = vmatprep.mubr.bf16.mxu0 0
      %438 = vmatmul.mubr.bf16.gmra.mrb[0].mxu0 %v319
      %v439 = vpop.f32.mrb[0].mxu0
      %v440 = vadd.f32 0.0, %v439
      %v441 = vpop.f32.mrb[0].mxu0
      %v442 = vpop.f32.mrb[0].mxu0
      %v443 = vadd.f32 0.0, %v442
      %v444 = vpop.f32.mrb[0].mxu0
      %445 = vmatprep.mubr.bf16.mxu0 0
      %446 = vmatmul.mubr.bf16.gmra.mrb[0].mxu0 %v320
      %v447 = vpop.f32.mrb[0].mxu0
      %v448 = vadd.f32 0.0, %v447
      %v449 = vpop.f32.mrb[0].mxu0
      %v450 = vpop.f32.mrb[0].mxu0
      %v451 = vadd.f32 0.0, %v450
      %v452 = vpop.f32.mrb[0].mxu0
      %453 = vmatprep.mubr.bf16.mxu0 0
      %454 = vmatmul.mubr.bf16.gmra.mrb[0].mxu0 %v321
      %v455 = vpop.f32.mrb[0].mxu0
      %v456 = vadd.f32 0.0, %v455
      %v457 = vpop.f32.mrb[0].mxu0
      %v458 = vpop.f32.mrb[0].mxu0
      %v459 = vadd.f32 0.0, %v458
      %v460 = vpop.f32.mrb[0].mxu0
      %461 = vmatprep.mubr.bf16.mxu0 0
      %462 = vmatmul.mubr.bf16.gmra.mrb[0].mxu0 %v322
      %v463 = vpop.f32.mrb[0].mxu0
      %v464 = vadd.f32 0.0, %v463
      %v465 = vpop.f32.mrb[0].mxu0
      %v466 = vpop.f32.mrb[0].mxu0
      %v467 = vadd.f32 0.0, %v466
      %v468 = vpop.f32.mrb[0].mxu0
      %469 = vmatprep.mubr.bf16.mxu0 0
      %470 = vmatmul.mubr.bf16.gmra.mrb[0].mxu0 %v323
      %v471 = vpop.f32.mrb[0].mxu0
      %v472 = vadd.f32 0.0, %v471
      %v473 = vpop.f32.mrb[0].mxu0
      %v474 = vpop.f32.mrb[0].mxu0
      %v475 = vadd.f32 0.0, %v474
      %v476 = vpop.f32.mrb[0].mxu0
      %477 = vmatprep.mubr.bf16.mxu0 0
      %478 = vmatmul.mubr.bf16.gmra.mrb[0].mxu0 %v324
      %v479 = vpop.f32.mrb[0].mxu0
      %v480 = vadd.f32 0.0, %v479
      %v481 = vpop.f32.mrb[0].mxu0
      %v482 = vpop.f32.mrb[0].mxu0
      %v483 = vadd.f32 0.0, %v482
      %v484 = vpop.f32.mrb[0].mxu0
      %485 = vdwg.mxu0
      %v502 = vunpack.c.l.b16 %v285
      %v503 = vunpack.c.l.b16 %v286
      %v504 = vunpack.c.l.b16 %v287
      %v505 = vunpack.c.l.b16 %v288
      %v506 = vunpack.c.l.b16 %v289
      %v507 = vunpack.c.l.b16 %v290
      %v508 = vunpack.c.l.b16 %v291
      %v509 = vunpack.c.l.b16 %v292
      %v510 = vunpack.c.l.b16 %v293
      %v511 = vunpack.c.l.b16 %v294
      %v512 = vunpack.c.l.b16 %v295
      %v513 = vunpack.c.l.b16 %v296
      %v514 = vunpack.c.l.b16 %v297
      %v515 = vunpack.c.l.b16 %v298
      %v516 = vunpack.c.l.b16 %v299
      %v517 = vunpack.c.l.b16 %v300
      %v518 = vpack.c.b16 %v503, %v502
      %v519 = vpack.c.b16 %v505, %v504
      %v520 = vpack.c.b16 %v507, %v506
      %v521 = vpack.c.b16 %v509, %v508
      %v522 = vpack.c.b16 %v511, %v510
      %v523 = vpack.c.b16 %v513, %v512
      %v524 = vpack.c.b16 %v515, %v514
      %v525 = vpack.c.b16 %v517, %v516
      %534 = vmatprep.subr.bf16.mxu0 0
      %535 = vmatpush1.bf16.msra.mxu0 %v518
      %536 = vmatprep.subr.bf16.mxu0 0
      %537 = vmatpush1.bf16.msra.mxu0 %v519
      %538 = vmatprep.subr.bf16.mxu0 0
      %539 = vmatpush1.bf16.msra.mxu0 %v520
      %540 = vmatprep.subr.bf16.mxu0 0
      %541 = vmatpush1.bf16.msra.mxu0 %v521
      %542 = vmatprep.subr.bf16.mxu0 0
      %543 = vmatpush1.bf16.msra.mxu0 %v522
      %544 = vmatprep.subr.bf16.mxu0 0
      %545 = vmatpush1.bf16.msra.mxu0 %v523
      %546 = vmatprep.subr.bf16.mxu0 0
      %547 = vmatpush1.bf16.msra.mxu0 %v524
      %548 = vmatprep.subr.bf16.mxu0 0
      %549 = vmatpush1.bf16.msra.mxu0 %v525
      %550 = vmatprep.subr.bf16.mxu0 0
      %551 = vmatpush1.bf16.msra.mxu0 0
      %552 = vmatprep.subr.bf16.mxu0 0
      %553 = vmatpush1.bf16.msra.mxu0 0
      %554 = vmatprep.subr.bf16.mxu0 0
      %555 = vmatpush1.bf16.msra.mxu0 0
      %556 = vmatprep.subr.bf16.mxu0 0
      %557 = vmatpush1.bf16.msra.mxu0 0
      %558 = vmatprep.subr.bf16.mxu0 0
      %559 = vmatpush1.bf16.msra.mxu0 0
      %560 = vmatprep.subr.bf16.mxu0 0
      %561 = vmatpush1.bf16.msra.mxu0 0
      %562 = vmatprep.subr.bf16.mxu0 0
      %563 = vmatpush1.bf16.msra.mxu0 0
      %564 = vmatprep.subr.bf16.mxu0 0
      %565 = vmatpush1.bf16.msra.mxu0 0
      %566 = vmatprep.mubr.bf16.mxu0 0
      %567 = vmatmul.mubr.bf16.gmra.mrb[0].mxu0 %v277
      %v568 = vpop.f32.mrb[0].mxu0
      %v569 = vadd.f32 %v424, %v568
      %v570 = vpop.f32.mrb[0].mxu0
      %v571 = vpop.f32.mrb[0].mxu0
      %v572 = vadd.f32 %v427, %v571
      %v573 = vpop.f32.mrb[0].mxu0
      %574 = vmatprep.mubr.bf16.mxu0 0
      %575 = vmatmul.mubr.bf16.gmra.mrb[0].mxu0 %v278
      %v576 = vpop.f32.mrb[0].mxu0
      %v577 = vadd.f32 %v432, %v576
      %v578 = vpop.f32.mrb[0].mxu0
      %v579 = vpop.f32.mrb[0].mxu0
      %v580 = vadd.f32 %v435, %v579
      %v581 = vpop.f32.mrb[0].mxu0
      %582 = vmatprep.mubr.bf16.mxu0 0
      %583 = vmatmul.mubr.bf16.gmra.mrb[0].mxu0 %v279
      %v584 = vpop.f32.mrb[0].mxu0
      %v585 = vadd.f32 %v440, %v584
      %v586 = vpop.f32.mrb[0].mxu0
      %v587 = vpop.f32.mrb[0].mxu0
      %v588 = vadd.f32 %v443, %v587
      %v589 = vpop.f32.mrb[0].mxu0
      %590 = vmatprep.mubr.bf16.mxu0 0
      %591 = vmatmul.mubr.bf16.gmra.mrb[0].mxu0 %v280
      %v592 = vpop.f32.mrb[0].mxu0
      %v593 = vadd.f32 %v448, %v592
      %v594 = vpop.f32.mrb[0].mxu0
      %v595 = vpop.f32.mrb[0].mxu0
      %v596 = vadd.f32 %v451, %v595
      %v597 = vpop.f32.mrb[0].mxu0
      %598 = vmatprep.mubr.bf16.mxu0 0
      %599 = vmatmul.mubr.bf16.gmra.mrb[0].mxu0 %v281
      %v600 = vpop.f32.mrb[0].mxu0
      %v601 = vadd.f32 %v456, %v600
      %v602 = vpop.f32.mrb[0].mxu0
      %v603 = vpop.f32.mrb[0].mxu0
      %v604 = vadd.f32 %v459, %v603
      %v605 = vpop.f32.mrb[0].mxu0
      %606 = vmatprep.mubr.bf16.mxu0 0
      %607 = vmatmul.mubr.bf16.gmra.mrb[0].mxu0 %v282
      %v608 = vpop.f32.mrb[0].mxu0
      %v609 = vadd.f32 %v464, %v608
      %v610 = vpop.f32.mrb[0].mxu0
      %v611 = vpop.f32.mrb[0].mxu0
      %v612 = vadd.f32 %v467, %v611
      %v613 = vpop.f32.mrb[0].mxu0
      %614 = vmatprep.mubr.bf16.mxu0 0
      %615 = vmatmul.mubr.bf16.gmra.mrb[0].mxu0 %v283
      %v616 = vpop.f32.mrb[0].mxu0
      %v617 = vadd.f32 %v472, %v616
      %v618 = vpop.f32.mrb[0].mxu0
      %v619 = vpop.f32.mrb[0].mxu0
      %v620 = vadd.f32 %v475, %v619
      %v621 = vpop.f32.mrb[0].mxu0
      %622 = vmatprep.mubr.bf16.mxu0 0
      %623 = vmatmul.mubr.bf16.gmra.mrb[0].mxu0 %v284
      %v624 = vpop.f32.mrb[0].mxu0
      %v625 = vadd.f32 %v480, %v624
      %v626 = vpop.f32.mrb[0].mxu0
      %v627 = vpop.f32.mrb[0].mxu0
      %v628 = vadd.f32 %v483, %v627
      %v629 = vpop.f32.mrb[0].mxu0
      %630 = vdwg.mxu0
      %v631 = vld [vmem:[%s251 + $0x10] sm:$0xff]
      %v632 = vld [vmem:[%s251 + $0x48] sm:$0xff]
      %v633 = vld [vmem:[%s251 + $0x80] sm:$0xff]
      %v634 = vld [vmem:[%s251 + $0xb8] sm:$0xff]
      %v635 = vld [vmem:[%s251 + $0xf0] sm:$0xff]
      %v636 = vld [vmem:[%s251 + $0x128] sm:$0xff]
      %v637 = vld [vmem:[%s251 + $0x160] sm:$0xff]
      %v638 = vld [vmem:[%s251 + $0x198] sm:$0xff]
      %v639 = vld [vmem:[%s251 + $0x1d0] sm:$0xff]
      %v640 = vld [vmem:[%s251 + $0x208] sm:$0xff]
      %v641 = vld [vmem:[%s251 + $0x240] sm:$0xff]
      %v642 = vld [vmem:[%s251 + $0x278] sm:$0xff]
      %v643 = vld [vmem:[%s251 + $0x2b0] sm:$0xff]
      %v644 = vld [vmem:[%s251 + $0x2e8] sm:$0xff]
      %v645 = vld [vmem:[%s251 + $0x320] sm:$0xff]
      %v646 = vld [vmem:[%s251 + $0x358] sm:$0xff]
      %v647 = vpack.c.bf16 %v632, %v631
      %v648 = vpack.c.bf16 %v634, %v633
      %v649 = vpack.c.bf16 %v636, %v635
      %v650 = vpack.c.bf16 %v638, %v637
      %v651 = vpack.c.bf16 %v640, %v639
      %v652 = vpack.c.bf16 %v642, %v641
      %v653 = vpack.c.bf16 %v644, %v643
      %v654 = vpack.c.bf16 %v646, %v645
      %v655 = vld [vmem:[%s1 + $0x80] sm:$0xf]
      %v656 = vld [vmem:[%s1 + $0x84] sm:$0xf]
      %v657 = vld [vmem:[%s1 + $0x88] sm:$0xf]
      %v658 = vld [vmem:[%s1 + $0x8c] sm:$0xf]
      %v659 = vld [vmem:[%s1 + $0x90] sm:$0xf]
      %v660 = vld [vmem:[%s1 + $0x94] sm:$0xf]
      %v661 = vld [vmem:[%s1 + $0x98] sm:$0xf]
      %v662 = vld [vmem:[%s1 + $0x9c] sm:$0xf]
      %v663 = vld [vmem:[%s1 + $0xa0] sm:$0xf]
      %v664 = vld [vmem:[%s1 + $0xa4] sm:$0xf]
      %v665 = vld [vmem:[%s1 + $0xa8] sm:$0xf]
      %v666 = vld [vmem:[%s1 + $0xac] sm:$0xf]
      %v667 = vld [vmem:[%s1 + $0xb0] sm:$0xf]
      %v668 = vld [vmem:[%s1 + $0xb4] sm:$0xf]
      %v669 = vld [vmem:[%s1 + $0xb8] sm:$0xf]
      %v670 = vld [vmem:[%s1 + $0xbc] sm:$0xf]
      %v687 = vunpack.c.l.b16 %v655
      %v688 = vunpack.c.l.b16 %v656
      %v689 = vunpack.c.l.b16 %v657
      %v690 = vunpack.c.l.b16 %v658
      %v691 = vunpack.c.l.b16 %v659
      %v692 = vunpack.c.l.b16 %v660
      %v693 = vunpack.c.l.b16 %v661
      %v694 = vunpack.c.l.b16 %v662
      %v695 = vunpack.c.l.b16 %v663
      %v696 = vunpack.c.l.b16 %v664
      %v697 = vunpack.c.l.b16 %v665
      %v698 = vunpack.c.l.b16 %v666
      %v699 = vunpack.c.l.b16 %v667
      %v700 = vunpack.c.l.b16 %v668
      %v701 = vunpack.c.l.b16 %v669
      %v702 = vunpack.c.l.b16 %v670
      %v703 = vpack.c.b16 %v688, %v687
      %v704 = vpack.c.b16 %v690, %v689
      %v705 = vpack.c.b16 %v692, %v691
      %v706 = vpack.c.b16 %v694, %v693
      %v707 = vpack.c.b16 %v696, %v695
      %v708 = vpack.c.b16 %v698, %v697
      %v709 = vpack.c.b16 %v700, %v699
      %v710 = vpack.c.b16 %v702, %v701
      %719 = vmatprep.subr.bf16.mxu0 0
      %720 = vmatpush1.bf16.msra.mxu0 %v703
      %721 = vmatprep.subr.bf16.mxu0 0
      %722 = vmatpush1.bf16.msra.mxu0 %v704
      %723 = vmatprep.subr.bf16.mxu0 0
      %724 = vmatpush1.bf16.msra.mxu0 %v705
      %725 = vmatprep.subr.bf16.mxu0 0
      %726 = vmatpush1.bf16.msra.mxu0 %v706
      %727 = vmatprep.subr.bf16.mxu0 0
      %728 = vmatpush1.bf16.msra.mxu0 %v707
      %729 = vmatprep.subr.bf16.mxu0 0
      %730 = vmatpush1.bf16.msra.mxu0 %v708
      %731 = vmatprep.subr.bf16.mxu0 0
      %732 = vmatpush1.bf16.msra.mxu0 %v709
      %733 = vmatprep.subr.bf16.mxu0 0
      %734 = vmatpush1.bf16.msra.mxu0 %v710
      %735 = vmatprep.subr.bf16.mxu0 0
      %736 = vmatpush1.bf16.msra.mxu0 0
      %737 = vmatprep.subr.bf16.mxu0 0
      %738 = vmatpush1.bf16.msra.mxu0 0
      %739 = vmatprep.subr.bf16.mxu0 0
      %740 = vmatpush1.bf16.msra.mxu0 0
      %741 = vmatprep.subr.bf16.mxu0 0
      %742 = vmatpush1.bf16.msra.mxu0 0
      %743 = vmatprep.subr.bf16.mxu0 0
      %744 = vmatpush1.bf16.msra.mxu0 0
      %745 = vmatprep.subr.bf16.mxu0 0
      %746 = vmatpush1.bf16.msra.mxu0 0
      %747 = vmatprep.subr.bf16.mxu0 0
      %748 = vmatpush1.bf16.msra.mxu0 0
      %749 = vmatprep.subr.bf16.mxu0 0
      %750 = vmatpush1.bf16.msra.mxu0 0
      %751 = vmatprep.mubr.bf16.mxu0 0
      %752 = vmatmul.mubr.bf16.gmra.mrb[0].mxu0 %v647
      %v753 = vpop.f32.mrb[0].mxu0
      %v754 = vadd.f32 0.0, %v753
      %v755 = vpop.f32.mrb[0].mxu0
      %v756 = vpop.f32.mrb[0].mxu0
      %v757 = vadd.f32 0.0, %v756
      %v758 = vpop.f32.mrb[0].mxu0
      %759 = vmatprep.mubr.bf16.mxu0 0
      %760 = vmatmul.mubr.bf16.gmra.mrb[0].mxu0 %v648
      %v761 = vpop.f32.mrb[0].mxu0
      %v762 = vadd.f32 0.0, %v761
      %v763 = vpop.f32.mrb[0].mxu0
      %v764 = vpop.f32.mrb[0].mxu0
      %v765 = vadd.f32 0.0, %v764
      %v766 = vpop.f32.mrb[0].mxu0
      %767 = vmatprep.mubr.bf16.mxu0 0
      %768 = vmatmul.mubr.bf16.gmra.mrb[0].mxu0 %v649
      %v769 = vpop.f32.mrb[0].mxu0
      %v770 = vadd.f32 0.0, %v769
      %v771 = vpop.f32.mrb[0].mxu0
      %v772 = vpop.f32.mrb[0].mxu0
      %v773 = vadd.f32 0.0, %v772
      %v774 = vpop.f32.mrb[0].mxu0
      %775 = vmatprep.mubr.bf16.mxu0 0
      %776 = vmatmul.mubr.bf16.gmra.mrb[0].mxu0 %v650
      %v777 = vpop.f32.mrb[0].mxu0
      %v778 = vadd.f32 0.0, %v777
      %v779 = vpop.f32.mrb[0].mxu0
      %v780 = vpop.f32.mrb[0].mxu0
      %v781 = vadd.f32 0.0, %v780
      %v782 = vpop.f32.mrb[0].mxu0
      %783 = vmatprep.mubr.bf16.mxu0 0
      %784 = vmatmul.mubr.bf16.gmra.mrb[0].mxu0 %v651
      %v785 = vpop.f32.mrb[0].mxu0
      %v786 = vadd.f32 0.0, %v785
      %v787 = vpop.f32.mrb[0].mxu0
      %v788 = vpop.f32.mrb[0].mxu0
      %v789 = vadd.f32 0.0, %v788
      %v790 = vpop.f32.mrb[0].mxu0
      %791 = vmatprep.mubr.bf16.mxu0 0
      %792 = vmatmul.mubr.bf16.gmra.mrb[0].mxu0 %v652
      %v793 = vpop.f32.mrb[0].mxu0
      %v794 = vadd.f32 0.0, %v793
      %v795 = vpop.f32.mrb[0].mxu0
      %v796 = vpop.f32.mrb[0].mxu0
      %v797 = vadd.f32 0.0, %v796
      %v798 = vpop.f32.mrb[0].mxu0
      %799 = vmatprep.mubr.bf16.mxu0 0
      %800 = vmatmul.mubr.bf16.gmra.mrb[0].mxu0 %v653
      %v801 = vpop.f32.mrb[0].mxu0
      %v802 = vadd.f32 0.0, %v801
      %v803 = vpop.f32.mrb[0].mxu0
      %v804 = vpop.f32.mrb[0].mxu0
      %v805 = vadd.f32 0.0, %v804
      %v806 = vpop.f32.mrb[0].mxu0
      %807 = vmatprep.mubr.bf16.mxu0 0
      %808 = vmatmul.mubr.bf16.gmra.mrb[0].mxu0 %v654
      %v809 = vpop.f32.mrb[0].mxu0
      %v810 = vadd.f32 0.0, %v809
      %v811 = vpop.f32.mrb[0].mxu0
      %v812 = vpop.f32.mrb[0].mxu0
      %v813 = vadd.f32 0.0, %v812
      %v814 = vpop.f32.mrb[0].mxu0
      %815 = vdwg.mxu0
      %v816 = vadd.f32 %v569, %v754
      %v817 = vadd.f32 %v572, %v757
      %v818 = vadd.f32 %v577, %v762
      %v819 = vadd.f32 %v580, %v765
      %v820 = vadd.f32 %v585, %v770
      %v821 = vadd.f32 %v588, %v773
      %v822 = vadd.f32 %v593, %v778
      %v823 = vadd.f32 %v596, %v781
      %v824 = vadd.f32 %v601, %v786
      %v825 = vadd.f32 %v604, %v789
      %v826 = vadd.f32 %v609, %v794
      %v827 = vadd.f32 %v612, %v797
      %v828 = vadd.f32 %v617, %v802
      %v829 = vadd.f32 %v620, %v805
      %v830 = vadd.f32 %v625, %v810
      %v831 = vadd.f32 %v628, %v813
      %v832 = vld [vmem:[%s251 + $0x18] sm:$0xff]
      %v833 = vld [vmem:[%s251 + $0x50] sm:$0xff]
      %v834 = vld [vmem:[%s251 + $0x88] sm:$0xff]
      %v835 = vld [vmem:[%s251 + $0xc0] sm:$0xff]
      %v836 = vld [vmem:[%s251 + $0xf8] sm:$0xff]
      %v837 = vld [vmem:[%s251 + $0x130] sm:$0xff]
      %v838 = vld [vmem:[%s251 + $0x168] sm:$0xff]
      %v839 = vld [vmem:[%s251 + $0x1a0] sm:$0xff]
      %v840 = vld [vmem:[%s251 + $0x1d8] sm:$0xff]
      %v841 = vld [vmem:[%s251 + $0x210] sm:$0xff]
      %v842 = vld [vmem:[%s251 + $0x248] sm:$0xff]
      %v843 = vld [vmem:[%s251 + $0x280] sm:$0xff]
      %v844 = vld [vmem:[%s251 + $0x2b8] sm:$0xff]
      %v845 = vld [vmem:[%s251 + $0x2f0] sm:$0xff]
      %v846 = vld [vmem:[%s251 + $0x328] sm:$0xff]
      %v847 = vld [vmem:[%s251 + $0x360] sm:$0xff]
      %v848 = vpack.c.bf16 %v833, %v832
      %v849 = vpack.c.bf16 %v835, %v834
      %v850 = vpack.c.bf16 %v837, %v836
      %v851 = vpack.c.bf16 %v839, %v838
      %v852 = vpack.c.bf16 %v841, %v840
      %v853 = vpack.c.bf16 %v843, %v842
      %v854 = vpack.c.bf16 %v845, %v844
      %v855 = vpack.c.bf16 %v847, %v846
      %v856 = vld [vmem:[%s1 + $0xc0] sm:$0xf]
      %v857 = vld [vmem:[%s1 + $0xc4] sm:$0xf]
      %v858 = vld [vmem:[%s1 + $0xc8] sm:$0xf]
      %v859 = vld [vmem:[%s1 + $0xcc] sm:$0xf]
      %v860 = vld [vmem:[%s1 + $0xd0] sm:$0xf]
      %v861 = vld [vmem:[%s1 + $0xd4] sm:$0xf]
      %v862 = vld [vmem:[%s1 + $0xd8] sm:$0xf]
      %v863 = vld [vmem:[%s1 + $0xdc] sm:$0xf]
      %v864 = vld [vmem:[%s1 + $0xe0] sm:$0xf]
      %v865 = vld [vmem:[%s1 + $0xe4] sm:$0xf]
      %v866 = vld [vmem:[%s1 + $0xe8] sm:$0xf]
      %v867 = vld [vmem:[%s1 + $0xec] sm:$0xf]
      %v868 = vld [vmem:[%s1 + $0xf0] sm:$0xf]
      %v869 = vld [vmem:[%s1 + $0xf4] sm:$0xf]
      %v870 = vld [vmem:[%s1 + $0xf8] sm:$0xf]
      %v871 = vld [vmem:[%s1 + $0xfc] sm:$0xf]
      %v888 = vunpack.c.l.b16 %v856
      %v889 = vunpack.c.l.b16 %v857
      %v890 = vunpack.c.l.b16 %v858
      %v891 = vunpack.c.l.b16 %v859
      %v892 = vunpack.c.l.b16 %v860
      %v893 = vunpack.c.l.b16 %v861
      %v894 = vunpack.c.l.b16 %v862
      %v895 = vunpack.c.l.b16 %v863
      %v896 = vunpack.c.l.b16 %v864
      %v897 = vunpack.c.l.b16 %v865
      %v898 = vunpack.c.l.b16 %v866
      %v899 = vunpack.c.l.b16 %v867
      %v900 = vunpack.c.l.b16 %v868
      %v901 = vunpack.c.l.b16 %v869
      %v902 = vunpack.c.l.b16 %v870
      %v903 = vunpack.c.l.b16 %v871
      %v904 = vpack.c.b16 %v889, %v888
      %v905 = vpack.c.b16 %v891, %v890
      %v906 = vpack.c.b16 %v893, %v892
      %v907 = vpack.c.b16 %v895, %v894
      %v908 = vpack.c.b16 %v897, %v896
      %v909 = vpack.c.b16 %v899, %v898
      %v910 = vpack.c.b16 %v901, %v900
      %v911 = vpack.c.b16 %v903, %v902
      %920 = vmatprep.subr.bf16.mxu0 0
      %921 = vmatpush1.bf16.msra.mxu0 %v904
      %922 = vmatprep.subr.bf16.mxu0 0
      %923 = vmatpush1.bf16.msra.mxu0 %v905
      %924 = vmatprep.subr.bf16.mxu0 0
      %925 = vmatpush1.bf16.msra.mxu0 %v906
      %926 = vmatprep.subr.bf16.mxu0 0
      %927 = vmatpush1.bf16.msra.mxu0 %v907
      %928 = vmatprep.subr.bf16.mxu0 0
      %929 = vmatpush1.bf16.msra.mxu0 %v908
      %930 = vmatprep.subr.bf16.mxu0 0
      %931 = vmatpush1.bf16.msra.mxu0 %v909
      %932 = vmatprep.subr.bf16.mxu0 0
      %933 = vmatpush1.bf16.msra.mxu0 %v910
      %934 = vmatprep.subr.bf16.mxu0 0
      %935 = vmatpush1.bf16.msra.mxu0 %v911
      %936 = vmatprep.subr.bf16.mxu0 0
      %937 = vmatpush1.bf16.msra.mxu0 0
      %938 = vmatprep.subr.bf16.mxu0 0
      %939 = vmatpush1.bf16.msra.mxu0 0
      %940 = vmatprep.subr.bf16.mxu0 0
      %941 = vmatpush1.bf16.msra.mxu0 0
      %942 = vmatprep.subr.bf16.mxu0 0
      %943 = vmatpush1.bf16.msra.mxu0 0
      %944 = vmatprep.subr.bf16.mxu0 0
      %945 = vmatpush1.bf16.msra.mxu0 0
      %946 = vmatprep.subr.bf16.mxu0 0
      %947 = vmatpush1.bf16.msra.mxu0 0
      %948 = vmatprep.subr.bf16.mxu0 0
      %949 = vmatpush1.bf16.msra.mxu0 0
      %950 = vmatprep.subr.bf16.mxu0 0
      %951 = vmatpush1.bf16.msra.mxu0 0
      %952 = vmatprep.mubr.bf16.mxu0 0
      %953 = vmatmul.mubr.bf16.gmra.mrb[0].mxu0 %v848
      %v954 = vpop.f32.mrb[0].mxu0
      %v955 = vadd.f32 0.0, %v954
      %v956 = vpop.f32.mrb[0].mxu0
      %v957 = vpop.f32.mrb[0].mxu0
      %v958 = vadd.f32 0.0, %v957
      %v959 = vpop.f32.mrb[0].mxu0
      %960 = vmatprep.mubr.bf16.mxu0 0
      %961 = vmatmul.mubr.bf16.gmra.mrb[0].mxu0 %v849
      %v962 = vpop.f32.mrb[0].mxu0
      %v963 = vadd.f32 0.0, %v962
      %v964 = vpop.f32.mrb[0].mxu0
      %v965 = vpop.f32.mrb[0].mxu0
      %v966 = vadd.f32 0.0, %v965
      %v967 = vpop.f32.mrb[0].mxu0
      %968 = vmatprep.mubr.bf16.mxu0 0
      %969 = vmatmul.mubr.bf16.gmra.mrb[0].mxu0 %v850
      %v970 = vpop.f32.mrb[0].mxu0
      %v971 = vadd.f32 0.0, %v970
      %v972 = vpop.f32.mrb[0].mxu0
      %v973 = vpop.f32.mrb[0].mxu0
      %v974 = vadd.f32 0.0, %v973
      %v975 = vpop.f32.mrb[0].mxu0
      %976 = vmatprep.mubr.bf16.mxu0 0
      %977 = vmatmul.mubr.bf16.gmra.mrb[0].mxu0 %v851
      %v978 = vpop.f32.mrb[0].mxu0
      %v979 = vadd.f32 0.0, %v978
      %v980 = vpop.f32.mrb[0].mxu0
      %v981 = vpop.f32.mrb[0].mxu0
      %v982 = vadd.f32 0.0, %v981
      %v983 = vpop.f32.mrb[0].mxu0
      %984 = vmatprep.mubr.bf16.mxu0 0
      %985 = vmatmul.mubr.bf16.gmra.mrb[0].mxu0 %v852
      %v986 = vpop.f32.mrb[0].mxu0
      %v987 = vadd.f32 0.0, %v986
      %v988 = vpop.f32.mrb[0].mxu0
      %v989 = vpop.f32.mrb[0].mxu0
      %v990 = vadd.f32 0.0, %v989
      %v991 = vpop.f32.mrb[0].mxu0
      %992 = vmatprep.mubr.bf16.mxu0 0
      %993 = vmatmul.mubr.bf16.gmra.mrb[0].mxu0 %v853
      %v994 = vpop.f32.mrb[0].mxu0
      %v995 = vadd.f32 0.0, %v994
      %v996 = vpop.f32.mrb[0].mxu0
      %v997 = vpop.f32.mrb[0].mxu0
      %v998 = vadd.f32 0.0, %v997
      %v999 = vpop.f32.mrb[0].mxu0
      %1000 = vmatprep.mubr.bf16.mxu0 0
      %1001 = vmatmul.mubr.bf16.gmra.mrb[0].mxu0 %v854
      %v1002 = vpop.f32.mrb[0].mxu0
      %v1003 = vadd.f32 0.0, %v1002
      %v1004 = vpop.f32.mrb[0].mxu0
      %v1005 = vpop.f32.mrb[0].mxu0
      %v1006 = vadd.f32 0.0, %v1005
      %v1007 = vpop.f32.mrb[0].mxu0
      %1008 = vmatprep.mubr.bf16.mxu0 0
      %1009 = vmatmul.mubr.bf16.gmra.mrb[0].mxu0 %v855
      %v1010 = vpop.f32.mrb[0].mxu0
      %v1011 = vadd.f32 0.0, %v1010
      %v1012 = vpop.f32.mrb[0].mxu0
      %v1013 = vpop.f32.mrb[0].mxu0
      %v1014 = vadd.f32 0.0, %v1013
      %v1015 = vpop.f32.mrb[0].mxu0
      %1016 = vdwg.mxu0
      %v1017 = vadd.f32 %v816, %v955
      %v1018 = vadd.f32 %v817, %v958
      %v1019 = vadd.f32 %v818, %v963
      %v1020 = vadd.f32 %v819, %v966
      %v1021 = vadd.f32 %v820, %v971
      %v1022 = vadd.f32 %v821, %v974
      %v1023 = vadd.f32 %v822, %v979
      %v1024 = vadd.f32 %v823, %v982
      %v1025 = vadd.f32 %v824, %v987
      %v1026 = vadd.f32 %v825, %v990
      %v1027 = vadd.f32 %v826, %v995
      %v1028 = vadd.f32 %v827, %v998
      %v1029 = vadd.f32 %v828, %v1003
      %v1030 = vadd.f32 %v829, %v1006
      %v1031 = vadd.f32 %v830, %v1011
      %v1032 = vadd.f32 %v831, %v1014
      %v1033 = vld [vmem:[%s251 + $0x20] sm:$0xff]
      %v1034 = vld [vmem:[%s251 + $0x58] sm:$0xff]
      %v1035 = vld [vmem:[%s251 + $0x90] sm:$0xff]
      %v1036 = vld [vmem:[%s251 + $0xc8] sm:$0xff]
      %v1037 = vld [vmem:[%s251 + $0x100] sm:$0xff]
      %v1038 = vld [vmem:[%s251 + $0x138] sm:$0xff]
      %v1039 = vld [vmem:[%s251 + $0x170] sm:$0xff]
      %v1040 = vld [vmem:[%s251 + $0x1a8] sm:$0xff]
      %v1041 = vld [vmem:[%s251 + $0x1e0] sm:$0xff]
      %v1042 = vld [vmem:[%s251 + $0x218] sm:$0xff]
      %v1043 = vld [vmem:[%s251 + $0x250] sm:$0xff]
      %v1044 = vld [vmem:[%s251 + $0x288] sm:$0xff]
      %v1045 = vld [vmem:[%s251 + $0x2c0] sm:$0xff]
      %v1046 = vld [vmem:[%s251 + $0x2f8] sm:$0xff]
      %v1047 = vld [vmem:[%s251 + $0x330] sm:$0xff]
      %v1048 = vld [vmem:[%s251 + $0x368] sm:$0xff]
      %v1049 = vpack.c.bf16 %v1034, %v1033
      %v1050 = vpack.c.bf16 %v1036, %v1035
      %v1051 = vpack.c.bf16 %v1038, %v1037
      %v1052 = vpack.c.bf16 %v1040, %v1039
      %v1053 = vpack.c.bf16 %v1042, %v1041
      %v1054 = vpack.c.bf16 %v1044, %v1043
      %v1055 = vpack.c.bf16 %v1046, %v1045
      %v1056 = vpack.c.bf16 %v1048, %v1047
      %v1057 = vld [vmem:[%s1 + $0x100] sm:$0xf]
      %v1058 = vld [vmem:[%s1 + $0x104] sm:$0xf]
      %v1059 = vld [vmem:[%s1 + $0x108] sm:$0xf]
      %v1060 = vld [vmem:[%s1 + $0x10c] sm:$0xf]
      %v1061 = vld [vmem:[%s1 + $0x110] sm:$0xf]
      %v1062 = vld [vmem:[%s1 + $0x114] sm:$0xf]
      %v1063 = vld [vmem:[%s1 + $0x118] sm:$0xf]
      %v1064 = vld [vmem:[%s1 + $0x11c] sm:$0xf]
      %v1065 = vld [vmem:[%s1 + $0x120] sm:$0xf]
      %v1066 = vld [vmem:[%s1 + $0x124] sm:$0xf]
      %v1067 = vld [vmem:[%s1 + $0x128] sm:$0xf]
      %v1068 = vld [vmem:[%s1 + $0x12c] sm:$0xf]
      %v1069 = vld [vmem:[%s1 + $0x130] sm:$0xf]
      %v1070 = vld [vmem:[%s1 + $0x134] sm:$0xf]
      %v1071 = vld [vmem:[%s1 + $0x138] sm:$0xf]
      %v1072 = vld [vmem:[%s1 + $0x13c] sm:$0xf]
      %v1089 = vunpack.c.l.b16 %v1057
      %v1090 = vunpack.c.l.b16 %v1058
      %v1091 = vunpack.c.l.b16 %v1059
      %v1092 = vunpack.c.l.b16 %v1060
      %v1093 = vunpack.c.l.b16 %v1061
      %v1094 = vunpack.c.l.b16 %v1062
      %v1095 = vunpack.c.l.b16 %v1063
      %v1096 = vunpack.c.l.b16 %v1064
      %v1097 = vunpack.c.l.b16 %v1065
      %v1098 = vunpack.c.l.b16 %v1066
      %v1099 = vunpack.c.l.b16 %v1067
      %v1100 = vunpack.c.l.b16 %v1068
      %v1101 = vunpack.c.l.b16 %v1069
      %v1102 = vunpack.c.l.b16 %v1070
      %v1103 = vunpack.c.l.b16 %v1071
      %v1104 = vunpack.c.l.b16 %v1072
      %v1105 = vpack.c.b16 %v1090, %v1089
      %v1106 = vpack.c.b16 %v1092, %v1091
      %v1107 = vpack.c.b16 %v1094, %v1093
      %v1108 = vpack.c.b16 %v1096, %v1095
      %v1109 = vpack.c.b16 %v1098, %v1097
      %v1110 = vpack.c.b16 %v1100, %v1099
      %v1111 = vpack.c.b16 %v1102, %v1101
      %v1112 = vpack.c.b16 %v1104, %v1103
      %1121 = vmatprep.subr.bf16.mxu0 0
      %1122 = vmatpush1.bf16.msra.mxu0 %v1105
      %1123 = vmatprep.subr.bf16.mxu0 0
      %1124 = vmatpush1.bf16.msra.mxu0 %v1106
      %1125 = vmatprep.subr.bf16.mxu0 0
      %1126 = vmatpush1.bf16.msra.mxu0 %v1107
      %1127 = vmatprep.subr.bf16.mxu0 0
      %1128 = vmatpush1.bf16.msra.mxu0 %v1108
      %1129 = vmatprep.subr.bf16.mxu0 0
      %1130 = vmatpush1.bf16.msra.mxu0 %v1109
      %1131 = vmatprep.subr.bf16.mxu0 0
      %1132 = vmatpush1.bf16.msra.mxu0 %v1110
      %1133 = vmatprep.subr.bf16.mxu0 0
      %1134 = vmatpush1.bf16.msra.mxu0 %v1111
      %1135 = vmatprep.subr.bf16.mxu0 0
      %1136 = vmatpush1.bf16.msra.mxu0 %v1112
      %1137 = vmatprep.subr.bf16.mxu0 0
      %1138 = vmatpush1.bf16.msra.mxu0 0
      %1139 = vmatprep.subr.bf16.mxu0 0
      %1140 = vmatpush1.bf16.msra.mxu0 0
      %1141 = vmatprep.subr.bf16.mxu0 0
      %1142 = vmatpush1.bf16.msra.mxu0 0
      %1143 = vmatprep.subr.bf16.mxu0 0
      %1144 = vmatpush1.bf16.msra.mxu0 0
      %1145 = vmatprep.subr.bf16.mxu0 0
      %1146 = vmatpush1.bf16.msra.mxu0 0
      %1147 = vmatprep.subr.bf16.mxu0 0
      %1148 = vmatpush1.bf16.msra.mxu0 0
      %1149 = vmatprep.subr.bf16.mxu0 0
      %1150 = vmatpush1.bf16.msra.mxu0 0
      %1151 = vmatprep.subr.bf16.mxu0 0
      %1152 = vmatpush1.bf16.msra.mxu0 0
      %1153 = vmatprep.mubr.bf16.mxu0 0
      %1154 = vmatmul.mubr.bf16.gmra.mrb[0].mxu0 %v1049
      %v1155 = vpop.f32.mrb[0].mxu0
      %v1156 = vadd.f32 0.0, %v1155
      %v1157 = vpop.f32.mrb[0].mxu0
      %v1158 = vpop.f32.mrb[0].mxu0
      %v1159 = vadd.f32 0.0, %v1158
      %v1160 = vpop.f32.mrb[0].mxu0
      %1161 = vmatprep.mubr.bf16.mxu0 0
      %1162 = vmatmul.mubr.bf16.gmra.mrb[0].mxu0 %v1050
      %v1163 = vpop.f32.mrb[0].mxu0
      %v1164 = vadd.f32 0.0, %v1163
      %v1165 = vpop.f32.mrb[0].mxu0
      %v1166 = vpop.f32.mrb[0].mxu0
      %v1167 = vadd.f32 0.0, %v1166
      %v1168 = vpop.f32.mrb[0].mxu0
      %1169 = vmatprep.mubr.bf16.mxu0 0
      %1170 = vmatmul.mubr.bf16.gmra.mrb[0].mxu0 %v1051
      %v1171 = vpop.f32.mrb[0].mxu0
      %v1172 = vadd.f32 0.0, %v1171
      %v1173 = vpop.f32.mrb[0].mxu0
      %v1174 = vpop.f32.mrb[0].mxu0
      %v1175 = vadd.f32 0.0, %v1174
      %v1176 = vpop.f32.mrb[0].mxu0
      %1177 = vmatprep.mubr.bf16.mxu0 0
      %1178 = vmatmul.mubr.bf16.gmra.mrb[0].mxu0 %v1052
      %v1179 = vpop.f32.mrb[0].mxu0
      %v1180 = vadd.f32 0.0, %v1179
      %v1181 = vpop.f32.mrb[0].mxu0
      %v1182 = vpop.f32.mrb[0].mxu0
      %v1183 = vadd.f32 0.0, %v1182
      %v1184 = vpop.f32.mrb[0].mxu0
      %1185 = vmatprep.mubr.bf16.mxu0 0
      %1186 = vmatmul.mubr.bf16.gmra.mrb[0].mxu0 %v1053
      %v1187 = vpop.f32.mrb[0].mxu0
      %v1188 = vadd.f32 0.0, %v1187
      %v1189 = vpop.f32.mrb[0].mxu0
      %v1190 = vpop.f32.mrb[0].mxu0
      %v1191 = vadd.f32 0.0, %v1190
      %v1192 = vpop.f32.mrb[0].mxu0
      %1193 = vmatprep.mubr.bf16.mxu0 0
      %1194 = vmatmul.mubr.bf16.gmra.mrb[0].mxu0 %v1054
      %v1195 = vpop.f32.mrb[0].mxu0
      %v1196 = vadd.f32 0.0, %v1195
      %v1197 = vpop.f32.mrb[0].mxu0
      %v1198 = vpop.f32.mrb[0].mxu0
      %v1199 = vadd.f32 0.0, %v1198
      %v1200 = vpop.f32.mrb[0].mxu0
      %1201 = vmatprep.mubr.bf16.mxu0 0
      %1202 = vmatmul.mubr.bf16.gmra.mrb[0].mxu0 %v1055
      %v1203 = vpop.f32.mrb[0].mxu0
      %v1204 = vadd.f32 0.0, %v1203
      %v1205 = vpop.f32.mrb[0].mxu0
      %v1206 = vpop.f32.mrb[0].mxu0
      %v1207 = vadd.f32 0.0, %v1206
      %v1208 = vpop.f32.mrb[0].mxu0
      %1209 = vmatprep.mubr.bf16.mxu0 0
      %1210 = vmatmul.mubr.bf16.gmra.mrb[0].mxu0 %v1056
      %v1211 = vpop.f32.mrb[0].mxu0
      %v1212 = vadd.f32 0.0, %v1211
      %v1213 = vpop.f32.mrb[0].mxu0
      %v1214 = vpop.f32.mrb[0].mxu0
      %v1215 = vadd.f32 0.0, %v1214
      %v1216 = vpop.f32.mrb[0].mxu0
      %1217 = vdwg.mxu0
      %v1218 = vadd.f32 %v1017, %v1156
      %v1219 = vadd.f32 %v1018, %v1159
      %v1220 = vadd.f32 %v1019, %v1164
      %v1221 = vadd.f32 %v1020, %v1167
      %v1222 = vadd.f32 %v1021, %v1172
      %v1223 = vadd.f32 %v1022, %v1175
      %v1224 = vadd.f32 %v1023, %v1180
      %v1225 = vadd.f32 %v1024, %v1183
      %v1226 = vadd.f32 %v1025, %v1188
      %v1227 = vadd.f32 %v1026, %v1191
      %v1228 = vadd.f32 %v1027, %v1196
      %v1229 = vadd.f32 %v1028, %v1199
      %v1230 = vadd.f32 %v1029, %v1204
      %v1231 = vadd.f32 %v1030, %v1207
      %v1232 = vadd.f32 %v1031, %v1212
      %v1233 = vadd.f32 %v1032, %v1215
      %v1234 = vld [vmem:[%s251 + $0x28] sm:$0xff]
      %v1235 = vld [vmem:[%s251 + $0x60] sm:$0xff]
      %v1236 = vld [vmem:[%s251 + $0x98] sm:$0xff]
      %v1237 = vld [vmem:[%s251 + $0xd0] sm:$0xff]
      %v1238 = vld [vmem:[%s251 + $0x108] sm:$0xff]
      %v1239 = vld [vmem:[%s251 + $0x140] sm:$0xff]
      %v1240 = vld [vmem:[%s251 + $0x178] sm:$0xff]
      %v1241 = vld [vmem:[%s251 + $0x1b0] sm:$0xff]
      %v1242 = vld [vmem:[%s251 + $0x1e8] sm:$0xff]
      %v1243 = vld [vmem:[%s251 + $0x220] sm:$0xff]
      %v1244 = vld [vmem:[%s251 + $0x258] sm:$0xff]
      %v1245 = vld [vmem:[%s251 + $0x290] sm:$0xff]
      %v1246 = vld [vmem:[%s251 + $0x2c8] sm:$0xff]
      %v1247 = vld [vmem:[%s251 + $0x300] sm:$0xff]
      %v1248 = vld [vmem:[%s251 + $0x338] sm:$0xff]
      %v1249 = vld [vmem:[%s251 + $0x370] sm:$0xff]
      %v1250 = vpack.c.bf16 %v1235, %v1234
      %v1251 = vpack.c.bf16 %v1237, %v1236
      %v1252 = vpack.c.bf16 %v1239, %v1238
      %v1253 = vpack.c.bf16 %v1241, %v1240
      %v1254 = vpack.c.bf16 %v1243, %v1242
      %v1255 = vpack.c.bf16 %v1245, %v1244
      %v1256 = vpack.c.bf16 %v1247, %v1246
      %v1257 = vpack.c.bf16 %v1249, %v1248
      %v1258 = vld [vmem:[%s1 + $0x140] sm:$0xf]
      %v1259 = vld [vmem:[%s1 + $0x144] sm:$0xf]
      %v1260 = vld [vmem:[%s1 + $0x148] sm:$0xf]
      %v1261 = vld [vmem:[%s1 + $0x14c] sm:$0xf]
      %v1262 = vld [vmem:[%s1 + $0x150] sm:$0xf]
      %v1263 = vld [vmem:[%s1 + $0x154] sm:$0xf]
      %v1264 = vld [vmem:[%s1 + $0x158] sm:$0xf]
      %v1265 = vld [vmem:[%s1 + $0x15c] sm:$0xf]
      %v1266 = vld [vmem:[%s1 + $0x160] sm:$0xf]
      %v1267 = vld [vmem:[%s1 + $0x164] sm:$0xf]
      %v1268 = vld [vmem:[%s1 + $0x168] sm:$0xf]
      %v1269 = vld [vmem:[%s1 + $0x16c] sm:$0xf]
      %v1270 = vld [vmem:[%s1 + $0x170] sm:$0xf]
      %v1271 = vld [vmem:[%s1 + $0x174] sm:$0xf]
      %v1272 = vld [vmem:[%s1 + $0x178] sm:$0xf]
      %v1273 = vld [vmem:[%s1 + $0x17c] sm:$0xf]
      %v1290 = vunpack.c.l.b16 %v1258
      %v1291 = vunpack.c.l.b16 %v1259
      %v1292 = vunpack.c.l.b16 %v1260
      %v1293 = vunpack.c.l.b16 %v1261
      %v1294 = vunpack.c.l.b16 %v1262
      %v1295 = vunpack.c.l.b16 %v1263
      %v1296 = vunpack.c.l.b16 %v1264
      %v1297 = vunpack.c.l.b16 %v1265
      %v1298 = vunpack.c.l.b16 %v1266
      %v1299 = vunpack.c.l.b16 %v1267
      %v1300 = vunpack.c.l.b16 %v1268
      %v1301 = vunpack.c.l.b16 %v1269
      %v1302 = vunpack.c.l.b16 %v1270
      %v1303 = vunpack.c.l.b16 %v1271
      %v1304 = vunpack.c.l.b16 %v1272
      %v1305 = vunpack.c.l.b16 %v1273
      %v1306 = vpack.c.b16 %v1291, %v1290
      %v1307 = vpack.c.b16 %v1293, %v1292
      %v1308 = vpack.c.b16 %v1295, %v1294
      %v1309 = vpack.c.b16 %v1297, %v1296
      %v1310 = vpack.c.b16 %v1299, %v1298
      %v1311 = vpack.c.b16 %v1301, %v1300
      %v1312 = vpack.c.b16 %v1303, %v1302
      %v1313 = vpack.c.b16 %v1305, %v1304
      %1322 = vmatprep.subr.bf16.mxu0 0
      %1323 = vmatpush1.bf16.msra.mxu0 %v1306
      %1324 = vmatprep.subr.bf16.mxu0 0
      %1325 = vmatpush1.bf16.msra.mxu0 %v1307
      %1326 = vmatprep.subr.bf16.mxu0 0
      %1327 = vmatpush1.bf16.msra.mxu0 %v1308
      %1328 = vmatprep.subr.bf16.mxu0 0
      %1329 = vmatpush1.bf16.msra.mxu0 %v1309
      %1330 = vmatprep.subr.bf16.mxu0 0
      %1331 = vmatpush1.bf16.msra.mxu0 %v1310
      %1332 = vmatprep.subr.bf16.mxu0 0
      %1333 = vmatpush1.bf16.msra.mxu0 %v1311
      %1334 = vmatprep.subr.bf16.mxu0 0
      %1335 = vmatpush1.bf16.msra.mxu0 %v1312
      %1336 = vmatprep.subr.bf16.mxu0 0
      %1337 = vmatpush1.bf16.msra.mxu0 %v1313
      %1338 = vmatprep.subr.bf16.mxu0 0
      %1339 = vmatpush1.bf16.msra.mxu0 0
      %1340 = vmatprep.subr.bf16.mxu0 0
      %1341 = vmatpush1.bf16.msra.mxu0 0
      %1342 = vmatprep.subr.bf16.mxu0 0
      %1343 = vmatpush1.bf16.msra.mxu0 0
      %1344 = vmatprep.subr.bf16.mxu0 0
      %1345 = vmatpush1.bf16.msra.mxu0 0
      %1346 = vmatprep.subr.bf16.mxu0 0
      %1347 = vmatpush1.bf16.msra.mxu0 0
      %1348 = vmatprep.subr.bf16.mxu0 0
      %1349 = vmatpush1.bf16.msra.mxu0 0
      %1350 = vmatprep.subr.bf16.mxu0 0
      %1351 = vmatpush1.bf16.msra.mxu0 0
      %1352 = vmatprep.subr.bf16.mxu0 0
      %1353 = vmatpush1.bf16.msra.mxu0 0
      %1354 = vmatprep.mubr.bf16.mxu0 0
      %1355 = vmatmul.mubr.bf16.gmra.mrb[0].mxu0 %v1250
      %v1356 = vpop.f32.mrb[0].mxu0
      %v1357 = vadd.f32 0.0, %v1356
      %v1358 = vpop.f32.mrb[0].mxu0
      %v1359 = vpop.f32.mrb[0].mxu0
      %v1360 = vadd.f32 0.0, %v1359
      %v1361 = vpop.f32.mrb[0].mxu0
      %1362 = vmatprep.mubr.bf16.mxu0 0
      %1363 = vmatmul.mubr.bf16.gmra.mrb[0].mxu0 %v1251
      %v1364 = vpop.f32.mrb[0].mxu0
      %v1365 = vadd.f32 0.0, %v1364
      %v1366 = vpop.f32.mrb[0].mxu0
      %v1367 = vpop.f32.mrb[0].mxu0
      %v1368 = vadd.f32 0.0, %v1367
      %v1369 = vpop.f32.mrb[0].mxu0
      %1370 = vmatprep.mubr.bf16.mxu0 0
      %1371 = vmatmul.mubr.bf16.gmra.mrb[0].mxu0 %v1252
      %v1372 = vpop.f32.mrb[0].mxu0
      %v1373 = vadd.f32 0.0, %v1372
      %v1374 = vpop.f32.mrb[0].mxu0
      %v1375 = vpop.f32.mrb[0].mxu0
      %v1376 = vadd.f32 0.0, %v1375
      %v1377 = vpop.f32.mrb[0].mxu0
      %1378 = vmatprep.mubr.bf16.mxu0 0
      %1379 = vmatmul.mubr.bf16.gmra.mrb[0].mxu0 %v1253
      %v1380 = vpop.f32.mrb[0].mxu0
      %v1381 = vadd.f32 0.0, %v1380
      %v1382 = vpop.f32.mrb[0].mxu0
      %v1383 = vpop.f32.mrb[0].mxu0
      %v1384 = vadd.f32 0.0, %v1383
      %v1385 = vpop.f32.mrb[0].mxu0
      %1386 = vmatprep.mubr.bf16.mxu0 0
      %1387 = vmatmul.mubr.bf16.gmra.mrb[0].mxu0 %v1254
      %v1388 = vpop.f32.mrb[0].mxu0
      %v1389 = vadd.f32 0.0, %v1388
      %v1390 = vpop.f32.mrb[0].mxu0
      %v1391 = vpop.f32.mrb[0].mxu0
      %v1392 = vadd.f32 0.0, %v1391
      %v1393 = vpop.f32.mrb[0].mxu0
      %1394 = vmatprep.mubr.bf16.mxu0 0
      %1395 = vmatmul.mubr.bf16.gmra.mrb[0].mxu0 %v1255
      %v1396 = vpop.f32.mrb[0].mxu0
      %v1397 = vadd.f32 0.0, %v1396
      %v1398 = vpop.f32.mrb[0].mxu0
      %v1399 = vpop.f32.mrb[0].mxu0
      %v1400 = vadd.f32 0.0, %v1399
      %v1401 = vpop.f32.mrb[0].mxu0
      %1402 = vmatprep.mubr.bf16.mxu0 0
      %1403 = vmatmul.mubr.bf16.gmra.mrb[0].mxu0 %v1256
      %v1404 = vpop.f32.mrb[0].mxu0
      %v1405 = vadd.f32 0.0, %v1404
      %v1406 = vpop.f32.mrb[0].mxu0
      %v1407 = vpop.f32.mrb[0].mxu0
      %v1408 = vadd.f32 0.0, %v1407
      %v1409 = vpop.f32.mrb[0].mxu0
      %1410 = vmatprep.mubr.bf16.mxu0 0
      %1411 = vmatmul.mubr.bf16.gmra.mrb[0].mxu0 %v1257
      %v1412 = vpop.f32.mrb[0].mxu0
      %v1413 = vadd.f32 0.0, %v1412
      %v1414 = vpop.f32.mrb[0].mxu0
      %v1415 = vpop.f32.mrb[0].mxu0
      %v1416 = vadd.f32 0.0, %v1415
      %v1417 = vpop.f32.mrb[0].mxu0
      %1418 = vdwg.mxu0
      %v1419 = vadd.f32 %v1218, %v1357
      %v1420 = vadd.f32 %v1219, %v1360
      %v1421 = vadd.f32 %v1220, %v1365
      %v1422 = vadd.f32 %v1221, %v1368
      %v1423 = vadd.f32 %v1222, %v1373
      %v1424 = vadd.f32 %v1223, %v1376
      %v1425 = vadd.f32 %v1224, %v1381
      %v1426 = vadd.f32 %v1225, %v1384
      %v1427 = vadd.f32 %v1226, %v1389
      %v1428 = vadd.f32 %v1227, %v1392
      %v1429 = vadd.f32 %v1228, %v1397
      %v1430 = vadd.f32 %v1229, %v1400
      %v1431 = vadd.f32 %v1230, %v1405
      %v1432 = vadd.f32 %v1231, %v1408
      %v1433 = vadd.f32 %v1232, %v1413
      %v1434 = vadd.f32 %v1233, %v1416
      %v1435 = vld [vmem:[%s251 + $0x30] sm:$0xff]
      %v1436 = vld [vmem:[%s251 + $0x68] sm:$0xff]
      %v1437 = vld [vmem:[%s251 + $0xa0] sm:$0xff]
      %v1438 = vld [vmem:[%s251 + $0xd8] sm:$0xff]
      %v1439 = vld [vmem:[%s251 + $0x110] sm:$0xff]
      %v1440 = vld [vmem:[%s251 + $0x148] sm:$0xff]
      %v1441 = vld [vmem:[%s251 + $0x180] sm:$0xff]
      %v1442 = vld [vmem:[%s251 + $0x1b8] sm:$0xff]
      %v1443 = vld [vmem:[%s251 + $0x1f0] sm:$0xff]
      %v1444 = vld [vmem:[%s251 + $0x228] sm:$0xff]
      %v1445 = vld [vmem:[%s251 + $0x260] sm:$0xff]
      %v1446 = vld [vmem:[%s251 + $0x298] sm:$0xff]
      %v1447 = vld [vmem:[%s251 + $0x2d0] sm:$0xff]
      %v1448 = vld [vmem:[%s251 + $0x308] sm:$0xff]
      %v1449 = vld [vmem:[%s251 + $0x340] sm:$0xff]
      %v1450 = vld [vmem:[%s251 + $0x378] sm:$0xff]
      %v1451 = vpack.c.bf16 %v1436, %v1435
      %v1452 = vpack.c.bf16 %v1438, %v1437
      %v1453 = vpack.c.bf16 %v1440, %v1439
      %v1454 = vpack.c.bf16 %v1442, %v1441
      %v1455 = vpack.c.bf16 %v1444, %v1443
      %v1456 = vpack.c.bf16 %v1446, %v1445
      %v1457 = vpack.c.bf16 %v1448, %v1447
      %v1458 = vpack.c.bf16 %v1450, %v1449
      %v1459 = vld [vmem:[%s1 + $0x180] sm:$0xf]
      %v1460 = vld [vmem:[%s1 + $0x184] sm:$0xf]
      %v1463 = vunpack.c.l.b16 %v1459
      %v1464 = vunpack.c.l.b16 %v1460
      %v1465 = vpack.c.b16 %v1464, %v1463
      %vm1467 = vcmask 130048
      %v1469 = vsel %vm1467, %v1451, 0
      %v1472 = vsel %vm1467, %v1452, 0
      %v1475 = vsel %vm1467, %v1453, 0
      %v1478 = vsel %vm1467, %v1454, 0
      %v1481 = vsel %vm1467, %v1455, 0
      %v1484 = vsel %vm1467, %v1456, 0
      %v1487 = vsel %vm1467, %v1457, 0
      %v1490 = vsel %vm1467, %v1458, 0
      %1492 = vmatprep.subr.bf16.mxu0 0
      %1493 = vmatpush1.bf16.msra.mxu0 %v1465
      %1494 = vmatprep.subr.bf16.mxu0 0
      %1495 = vmatpush1.bf16.msra.mxu0 0
      %1496 = vmatprep.subr.bf16.mxu0 0
      %1497 = vmatpush1.bf16.msra.mxu0 0
      %1498 = vmatprep.subr.bf16.mxu0 0
      %1499 = vmatpush1.bf16.msra.mxu0 0
      %1500 = vmatprep.subr.bf16.mxu0 0
      %1501 = vmatpush1.bf16.msra.mxu0 0
      %1502 = vmatprep.subr.bf16.mxu0 0
      %1503 = vmatpush1.bf16.msra.mxu0 0
      %1504 = vmatprep.subr.bf16.mxu0 0
      %1505 = vmatpush1.bf16.msra.mxu0 0
      %1506 = vmatprep.subr.bf16.mxu0 0
      %1507 = vmatpush1.bf16.msra.mxu0 0
      %1508 = vmatprep.subr.bf16.mxu0 0
      %1509 = vmatpush1.bf16.msra.mxu0 0
      %1510 = vmatprep.subr.bf16.mxu0 0
      %1511 = vmatpush1.bf16.msra.mxu0 0
      %1512 = vmatprep.subr.bf16.mxu0 0
      %1513 = vmatpush1.bf16.msra.mxu0 0
      %1514 = vmatprep.subr.bf16.mxu0 0
      %1515 = vmatpush1.bf16.msra.mxu0 0
      %1516 = vmatprep.subr.bf16.mxu0 0
      %1517 = vmatpush1.bf16.msra.mxu0 0
      %1518 = vmatprep.subr.bf16.mxu0 0
      %1519 = vmatpush1.bf16.msra.mxu0 0
      %1520 = vmatprep.subr.bf16.mxu0 0
      %1521 = vmatpush1.bf16.msra.mxu0 0
      %1522 = vmatprep.subr.bf16.mxu0 0
      %1523 = vmatpush1.bf16.msra.mxu0 0
      %1524 = vmatprep.mubr.bf16.mxu0 0
      %1525 = vmatmul.mubr.bf16.gmra.mrb[0].mxu0 %v1469
      %v1526 = vpop.f32.mrb[0].mxu0
      %v1527 = vadd.f32 0.0, %v1526
      %v1528 = vpop.f32.mrb[0].mxu0
      %v1529 = vpop.f32.mrb[0].mxu0
      %v1530 = vadd.f32 0.0, %v1529
      %v1531 = vpop.f32.mrb[0].mxu0
      %1532 = vmatprep.mubr.bf16.mxu0 0
      %1533 = vmatmul.mubr.bf16.gmra.mrb[0].mxu0 %v1472
      %v1534 = vpop.f32.mrb[0].mxu0
      %v1535 = vadd.f32 0.0, %v1534
      %v1536 = vpop.f32.mrb[0].mxu0
      %v1537 = vpop.f32.mrb[0].mxu0
      %v1538 = vadd.f32 0.0, %v1537
      %v1539 = vpop.f32.mrb[0].mxu0
      %1540 = vmatprep.mubr.bf16.mxu0 0
      %1541 = vmatmul.mubr.bf16.gmra.mrb[0].mxu0 %v1475
      %v1542 = vpop.f32.mrb[0].mxu0
      %v1543 = vadd.f32 0.0, %v1542
      %v1544 = vpop.f32.mrb[0].mxu0
      %v1545 = vpop.f32.mrb[0].mxu0
      %v1546 = vadd.f32 0.0, %v1545
      %v1547 = vpop.f32.mrb[0].mxu0
      %1548 = vmatprep.mubr.bf16.mxu0 0
      %1549 = vmatmul.mubr.bf16.gmra.mrb[0].mxu0 %v1478
      %v1550 = vpop.f32.mrb[0].mxu0
      %v1551 = vadd.f32 0.0, %v1550
      %v1552 = vpop.f32.mrb[0].mxu0
      %v1553 = vpop.f32.mrb[0].mxu0
      %v1554 = vadd.f32 0.0, %v1553
      %v1555 = vpop.f32.mrb[0].mxu0
      %1556 = vmatprep.mubr.bf16.mxu0 0
      %1557 = vmatmul.mubr.bf16.gmra.mrb[0].mxu0 %v1481
      %v1558 = vpop.f32.mrb[0].mxu0
      %v1559 = vadd.f32 0.0, %v1558
      %v1560 = vpop.f32.mrb[0].mxu0
      %v1561 = vpop.f32.mrb[0].mxu0
      %v1562 = vadd.f32 0.0, %v1561
      %v1563 = vpop.f32.mrb[0].mxu0
      %1564 = vmatprep.mubr.bf16.mxu0 0
      %1565 = vmatmul.mubr.bf16.gmra.mrb[0].mxu0 %v1484
      %v1566 = vpop.f32.mrb[0].mxu0
      %v1567 = vadd.f32 0.0, %v1566
      %v1568 = vpop.f32.mrb[0].mxu0
      %v1569 = vpop.f32.mrb[0].mxu0
      %v1570 = vadd.f32 0.0, %v1569
      %v1571 = vpop.f32.mrb[0].mxu0
      %1572 = vmatprep.mubr.bf16.mxu0 0
      %1573 = vmatmul.mubr.bf16.gmra.mrb[0].mxu0 %v1487
      %v1574 = vpop.f32.mrb[0].mxu0
      %v1575 = vadd.f32 0.0, %v1574
      %v1576 = vpop.f32.mrb[0].mxu0
      %v1577 = vpop.f32.mrb[0].mxu0
      %v1578 = vadd.f32 0.0, %v1577
      %v1579 = vpop.f32.mrb[0].mxu0
      %1580 = vmatprep.mubr.bf16.mxu0 0
      %1581 = vmatmul.mubr.bf16.gmra.mrb[0].mxu0 %v1490
      %v1582 = vpop.f32.mrb[0].mxu0
      %v1583 = vadd.f32 0.0, %v1582
      %v1584 = vpop.f32.mrb[0].mxu0
      %v1585 = vpop.f32.mrb[0].mxu0
      %v1586 = vadd.f32 0.0, %v1585
      %v1587 = vpop.f32.mrb[0].mxu0
      %1588 = vdwg.mxu0
      %v1589 = vadd.f32 %v1419, %v1527
      %v1590 = vadd.f32 %v1420, %v1530
      %v1591 = vadd.f32 %v1421, %v1535
      %v1592 = vadd.f32 %v1422, %v1538
      %v1593 = vadd.f32 %v1423, %v1543
      %v1594 = vadd.f32 %v1424, %v1546
      %v1595 = vadd.f32 %v1425, %v1551
      %v1596 = vadd.f32 %v1426, %v1554
      %v1597 = vadd.f32 %v1427, %v1559
      %v1598 = vadd.f32 %v1428, %v1562
      %v1599 = vadd.f32 %v1429, %v1567
      %v1600 = vadd.f32 %v1430, %v1570
      %v1601 = vadd.f32 %v1431, %v1575
      %v1602 = vadd.f32 %v1432, %v1578
      %v1603 = vadd.f32 %v1433, %v1583
      %v1604 = vadd.f32 %v1434, %v1586
      %v1605 = vld [vmem:[%s4] sm:$0x1]
      %v1607 = vlaneseq
      %v1608 = vshrl.u32 %v1607, 7
      %v1609 = vsub.s32 0, %v1608
      %v1610 = vrot.slane %v1605, %v1609
      %v1612 = vadd.f32 %v1589, %v1610
      %v1613 = vadd.f32 %v1590, %v1610
      %v1614 = vadd.f32 %v1591, %v1610
      %v1615 = vadd.f32 %v1592, %v1610
      %v1616 = vadd.f32 %v1593, %v1610
      %v1617 = vadd.f32 %v1594, %v1610
      %v1618 = vadd.f32 %v1595, %v1610
      %v1619 = vadd.f32 %v1596, %v1610
      %v1620 = vadd.f32 %v1597, %v1610
      %v1621 = vadd.f32 %v1598, %v1610
      %v1622 = vadd.f32 %v1599, %v1610
      %v1623 = vadd.f32 %v1600, %v1610
      %v1624 = vadd.f32 %v1601, %v1610
      %v1625 = vadd.f32 %v1602, %v1610
      %v1626 = vadd.f32 %v1603, %v1610
      %v1627 = vadd.f32 %v1604, %v1610
      %v1628 = vmax.f32 %v1612, 0.0
      %v1629 = vmax.f32 %v1613, 0.0
      %v1630 = vmax.f32 %v1614, 0.0
      %v1631 = vmax.f32 %v1615, 0.0
      %v1632 = vmax.f32 %v1616, 0.0
      %v1633 = vmax.f32 %v1617, 0.0
      %v1634 = vmax.f32 %v1618, 0.0
      %v1635 = vmax.f32 %v1619, 0.0
      %v1636 = vmax.f32 %v1620, 0.0
      %v1637 = vmax.f32 %v1621, 0.0
      %v1638 = vmax.f32 %v1622, 0.0
      %v1639 = vmax.f32 %v1623, 0.0
      %v1640 = vmax.f32 %v1624, 0.0
      %v1641 = vmax.f32 %v1625, 0.0
      %v1642 = vmax.f32 %v1626, 0.0
      %v1643 = vmax.f32 %v1627, 0.0
      %v1644 = vpack.c.bf16 %v1629, %v1628
      %v1645 = vpack.c.bf16 %v1631, %v1630
      %v1646 = vpack.c.bf16 %v1633, %v1632
      %v1647 = vpack.c.bf16 %v1635, %v1634
      %v1648 = vpack.c.bf16 %v1637, %v1636
      %v1649 = vpack.c.bf16 %v1639, %v1638
      %v1650 = vpack.c.bf16 %v1641, %v1640
      %v1651 = vpack.c.bf16 %v1643, %v1642
      %v1652 = vld [vmem:[%s2] sm:$0xf]
      %v1653 = vld [vmem:[%s2 + $0x4] sm:$0xf]
      %v1654 = vld [vmem:[%s2 + $0x8] sm:$0xf]
      %v1655 = vld [vmem:[%s2 + $0xc] sm:$0xf]
      %v1656 = vld [vmem:[%s2 + $0x10] sm:$0xf]
      %v1657 = vld [vmem:[%s2 + $0x14] sm:$0xf]
      %v1658 = vld [vmem:[%s2 + $0x18] sm:$0xf]
      %v1659 = vld [vmem:[%s2 + $0x1c] sm:$0xf]
      %v1660 = vld [vmem:[%s2 + $0x20] sm:$0xf]
      %v1661 = vld [vmem:[%s2 + $0x24] sm:$0xf]
      %v1662 = vld [vmem:[%s2 + $0x28] sm:$0xf]
      %v1663 = vld [vmem:[%s2 + $0x2c] sm:$0xf]
      %v1664 = vld [vmem:[%s2 + $0x30] sm:$0xf]
      %v1665 = vld [vmem:[%s2 + $0x34] sm:$0xf]
      %v1666 = vld [vmem:[%s2 + $0x38] sm:$0xf]
      %v1667 = vld [vmem:[%s2 + $0x3c] sm:$0xf]
      %v1668 = vld [vmem:[%s4 + $0x1] sm:$0x1]
      %v1670 = vlaneseq
      %v1671 = vshrl.u32 %v1670, 7
      %v1672 = vsub.s32 0, %v1671
      %v1673 = vrot.slane %v1668, %v1672
      %v1691 = vunpack.c.l.b16 %v1652
      %v1692 = vunpack.c.l.b16 %v1653
      %v1693 = vunpack.c.l.b16 %v1654
      %v1694 = vunpack.c.l.b16 %v1655
      %v1695 = vunpack.c.l.b16 %v1656
      %v1696 = vunpack.c.l.b16 %v1657
      %v1697 = vunpack.c.l.b16 %v1658
      %v1698 = vunpack.c.l.b16 %v1659
      %v1699 = vunpack.c.l.b16 %v1660
      %v1700 = vunpack.c.l.b16 %v1661
      %v1701 = vunpack.c.l.b16 %v1662
      %v1702 = vunpack.c.l.b16 %v1663
      %v1703 = vunpack.c.l.b16 %v1664
      %v1704 = vunpack.c.l.b16 %v1665
      %v1705 = vunpack.c.l.b16 %v1666
      %v1706 = vunpack.c.l.b16 %v1667
      %v1707 = vpack.c.b16 %v1692, %v1691
      %v1708 = vpack.c.b16 %v1694, %v1693
      %v1709 = vpack.c.b16 %v1696, %v1695
      %v1710 = vpack.c.b16 %v1698, %v1697
      %v1711 = vpack.c.b16 %v1700, %v1699
      %v1712 = vpack.c.b16 %v1702, %v1701
      %v1713 = vpack.c.b16 %v1704, %v1703
      %v1714 = vpack.c.b16 %v1706, %v1705
      %1723 = vmatprep.subr.bf16.mxu0 0
      %1724 = vmatpush1.bf16.msra.mxu0 %v1707
      %1725 = vmatprep.subr.bf16.mxu0 0
      %1726 = vmatpush1.bf16.msra.mxu0 %v1708
      %1727 = vmatprep.subr.bf16.mxu0 0
      %1728 = vmatpush1.bf16.msra.mxu0 %v1709
      %1729 = vmatprep.subr.bf16.mxu0 0
      %1730 = vmatpush1.bf16.msra.mxu0 %v1710
      %1731 = vmatprep.subr.bf16.mxu0 0
      %1732 = vmatpush1.bf16.msra.mxu0 %v1711
      %1733 = vmatprep.subr.bf16.mxu0 0
      %1734 = vmatpush1.bf16.msra.mxu0 %v1712
      %1735 = vmatprep.subr.bf16.mxu0 0
      %1736 = vmatpush1.bf16.msra.mxu0 %v1713
      %1737 = vmatprep.subr.bf16.mxu0 0
      %1738 = vmatpush1.bf16.msra.mxu0 %v1714
      %1739 = vmatprep.subr.bf16.mxu0 0
      %1740 = vmatpush1.bf16.msra.mxu0 0
      %1741 = vmatprep.subr.bf16.mxu0 0
      %1742 = vmatpush1.bf16.msra.mxu0 0
      %1743 = vmatprep.subr.bf16.mxu0 0
      %1744 = vmatpush1.bf16.msra.mxu0 0
      %1745 = vmatprep.subr.bf16.mxu0 0
      %1746 = vmatpush1.bf16.msra.mxu0 0
      %1747 = vmatprep.subr.bf16.mxu0 0
      %1748 = vmatpush1.bf16.msra.mxu0 0
      %1749 = vmatprep.subr.bf16.mxu0 0
      %1750 = vmatpush1.bf16.msra.mxu0 0
      %1751 = vmatprep.subr.bf16.mxu0 0
      %1752 = vmatpush1.bf16.msra.mxu0 0
      %1753 = vmatprep.subr.bf16.mxu0 0
      %1754 = vmatpush1.bf16.msra.mxu0 0
      %1755 = vmatprep.mubr.bf16.mxu0 0
      %1756 = vmatmul.mubr.bf16.gmra.mrb[0].mxu0 %v1644
      %v1757 = vpop.f32.mrb[0].mxu0
      %v1758 = vadd.f32 %v1673, %v1757
      %v1759 = vpop.f32.mrb[0].mxu0
      %v1760 = vpop.f32.mrb[0].mxu0
      %v1761 = vadd.f32 %v1673, %v1760
      %v1762 = vpop.f32.mrb[0].mxu0
      %1763 = vmatprep.mubr.bf16.mxu0 0
      %1764 = vmatmul.mubr.bf16.gmra.mrb[0].mxu0 %v1645
      %v1765 = vpop.f32.mrb[0].mxu0
      %v1766 = vadd.f32 %v1673, %v1765
      %v1767 = vpop.f32.mrb[0].mxu0
      %v1768 = vpop.f32.mrb[0].mxu0
      %v1769 = vadd.f32 %v1673, %v1768
      %v1770 = vpop.f32.mrb[0].mxu0
      %1771 = vmatprep.mubr.bf16.mxu0 0
      %1772 = vmatmul.mubr.bf16.gmra.mrb[0].mxu0 %v1646
      %v1773 = vpop.f32.mrb[0].mxu0
      %v1774 = vadd.f32 %v1673, %v1773
      %v1775 = vpop.f32.mrb[0].mxu0
      %v1776 = vpop.f32.mrb[0].mxu0
      %v1777 = vadd.f32 %v1673, %v1776
      %v1778 = vpop.f32.mrb[0].mxu0
      %1779 = vmatprep.mubr.bf16.mxu0 0
      %1780 = vmatmul.mubr.bf16.gmra.mrb[0].mxu0 %v1647
      %v1781 = vpop.f32.mrb[0].mxu0
      %v1782 = vadd.f32 %v1673, %v1781
      %v1783 = vpop.f32.mrb[0].mxu0
      %v1784 = vpop.f32.mrb[0].mxu0
      %v1785 = vadd.f32 %v1673, %v1784
      %v1786 = vpop.f32.mrb[0].mxu0
      %1787 = vmatprep.mubr.bf16.mxu0 0
      %1788 = vmatmul.mubr.bf16.gmra.mrb[0].mxu0 %v1648
      %v1789 = vpop.f32.mrb[0].mxu0
      %v1790 = vadd.f32 %v1673, %v1789
      %v1791 = vpop.f32.mrb[0].mxu0
      %v1792 = vpop.f32.mrb[0].mxu0
      %v1793 = vadd.f32 %v1673, %v1792
      %v1794 = vpop.f32.mrb[0].mxu0
      %1795 = vmatprep.mubr.bf16.mxu0 0
      %1796 = vmatmul.mubr.bf16.gmra.mrb[0].mxu0 %v1649
      %v1797 = vpop.f32.mrb[0].mxu0
      %v1798 = vadd.f32 %v1673, %v1797
      %v1799 = vpop.f32.mrb[0].mxu0
      %v1800 = vpop.f32.mrb[0].mxu0
      %v1801 = vadd.f32 %v1673, %v1800
      %v1802 = vpop.f32.mrb[0].mxu0
      %1803 = vmatprep.mubr.bf16.mxu0 0
      %1804 = vmatmul.mubr.bf16.gmra.mrb[0].mxu0 %v1650
      %v1805 = vpop.f32.mrb[0].mxu0
      %v1806 = vadd.f32 %v1673, %v1805
      %v1807 = vpop.f32.mrb[0].mxu0
      %v1808 = vpop.f32.mrb[0].mxu0
      %v1809 = vadd.f32 %v1673, %v1808
      %v1810 = vpop.f32.mrb[0].mxu0
      %1811 = vmatprep.mubr.bf16.mxu0 0
      %1812 = vmatmul.mubr.bf16.gmra.mrb[0].mxu0 %v1651
      %v1813 = vpop.f32.mrb[0].mxu0
      %v1814 = vadd.f32 %v1673, %v1813
      %v1815 = vpop.f32.mrb[0].mxu0
      %v1816 = vpop.f32.mrb[0].mxu0
      %v1817 = vadd.f32 %v1673, %v1816
      %v1818 = vpop.f32.mrb[0].mxu0
      %1819 = vdwg.mxu0
      %v1820 = vmax.f32 %v1758, 0.0
      %v1821 = vmax.f32 %v1761, 0.0
      %v1822 = vmax.f32 %v1766, 0.0
      %v1823 = vmax.f32 %v1769, 0.0
      %v1824 = vmax.f32 %v1774, 0.0
      %v1825 = vmax.f32 %v1777, 0.0
      %v1826 = vmax.f32 %v1782, 0.0
      %v1827 = vmax.f32 %v1785, 0.0
      %v1828 = vmax.f32 %v1790, 0.0
      %v1829 = vmax.f32 %v1793, 0.0
      %v1830 = vmax.f32 %v1798, 0.0
      %v1831 = vmax.f32 %v1801, 0.0
      %v1832 = vmax.f32 %v1806, 0.0
      %v1833 = vmax.f32 %v1809, 0.0
      %v1834 = vmax.f32 %v1814, 0.0
      %v1835 = vmax.f32 %v1817, 0.0
      %v1836 = vpack.c.bf16 %v1821, %v1820
      %v1837 = vpack.c.bf16 %v1823, %v1822
      %v1838 = vpack.c.bf16 %v1825, %v1824
      %v1839 = vpack.c.bf16 %v1827, %v1826
      %v1840 = vpack.c.bf16 %v1829, %v1828
      %v1841 = vpack.c.bf16 %v1831, %v1830
      %v1842 = vpack.c.bf16 %v1833, %v1832
      %v1843 = vpack.c.bf16 %v1835, %v1834
      %s1844 = scalar_lea.vmem %s2, 64
      %v1845 = vld [vmem:[%s1844] sm:$0xf]
      %v1846 = vld [vmem:[%s1844 + $0x4] sm:$0xf]
      %v1847 = vld [vmem:[%s1844 + $0x8] sm:$0xf]
      %v1848 = vld [vmem:[%s1844 + $0xc] sm:$0xf]
      %v1849 = vld [vmem:[%s1844 + $0x10] sm:$0xf]
      %v1850 = vld [vmem:[%s1844 + $0x14] sm:$0xf]
      %v1851 = vld [vmem:[%s1844 + $0x18] sm:$0xf]
      %v1852 = vld [vmem:[%s1844 + $0x1c] sm:$0xf]
      %v1853 = vld [vmem:[%s1844 + $0x20] sm:$0xf]
      %v1854 = vld [vmem:[%s1844 + $0x24] sm:$0xf]
      %v1855 = vld [vmem:[%s1844 + $0x28] sm:$0xf]
      %v1856 = vld [vmem:[%s1844 + $0x2c] sm:$0xf]
      %v1857 = vld [vmem:[%s1844 + $0x30] sm:$0xf]
      %v1858 = vld [vmem:[%s1844 + $0x34] sm:$0xf]
      %v1859 = vld [vmem:[%s1844 + $0x38] sm:$0xf]
      %v1860 = vld [vmem:[%s1844 + $0x3c] sm:$0xf]
      %v1861 = vld [vmem:[%s4 + $0x2] sm:$0x1]
      %v1863 = vlaneseq
      %v1864 = vshrl.u32 %v1863, 7
      %v1865 = vsub.s32 0, %v1864
      %v1866 = vrot.slane %v1861, %v1865
      %v1884 = vunpack.c.l.b16 %v1845
      %v1885 = vunpack.c.l.b16 %v1846
      %v1886 = vunpack.c.l.b16 %v1847
      %v1887 = vunpack.c.l.b16 %v1848
      %v1888 = vunpack.c.l.b16 %v1849
      %v1889 = vunpack.c.l.b16 %v1850
      %v1890 = vunpack.c.l.b16 %v1851
      %v1891 = vunpack.c.l.b16 %v1852
      %v1892 = vunpack.c.l.b16 %v1853
      %v1893 = vunpack.c.l.b16 %v1854
      %v1894 = vunpack.c.l.b16 %v1855
      %v1895 = vunpack.c.l.b16 %v1856
      %v1896 = vunpack.c.l.b16 %v1857
      %v1897 = vunpack.c.l.b16 %v1858
      %v1898 = vunpack.c.l.b16 %v1859
      %v1899 = vunpack.c.l.b16 %v1860
      %v1900 = vpack.c.b16 %v1885, %v1884
      %v1901 = vpack.c.b16 %v1887, %v1886
      %v1902 = vpack.c.b16 %v1889, %v1888
      %v1903 = vpack.c.b16 %v1891, %v1890
      %v1904 = vpack.c.b16 %v1893, %v1892
      %v1905 = vpack.c.b16 %v1895, %v1894
      %v1906 = vpack.c.b16 %v1897, %v1896
      %v1907 = vpack.c.b16 %v1899, %v1898
      %1916 = vmatprep.subr.bf16.mxu0 0
      %1917 = vmatpush1.bf16.msra.mxu0 %v1900
      %1918 = vmatprep.subr.bf16.mxu0 0
      %1919 = vmatpush1.bf16.msra.mxu0 %v1901
      %1920 = vmatprep.subr.bf16.mxu0 0
      %1921 = vmatpush1.bf16.msra.mxu0 %v1902
      %1922 = vmatprep.subr.bf16.mxu0 0
      %1923 = vmatpush1.bf16.msra.mxu0 %v1903
      %1924 = vmatprep.subr.bf16.mxu0 0
      %1925 = vmatpush1.bf16.msra.mxu0 %v1904
      %1926 = vmatprep.subr.bf16.mxu0 0
      %1927 = vmatpush1.bf16.msra.mxu0 %v1905
      %1928 = vmatprep.subr.bf16.mxu0 0
      %1929 = vmatpush1.bf16.msra.mxu0 %v1906
      %1930 = vmatprep.subr.bf16.mxu0 0
      %1931 = vmatpush1.bf16.msra.mxu0 %v1907
      %1932 = vmatprep.subr.bf16.mxu0 0
      %1933 = vmatpush1.bf16.msra.mxu0 0
      %1934 = vmatprep.subr.bf16.mxu0 0
      %1935 = vmatpush1.bf16.msra.mxu0 0
      %1936 = vmatprep.subr.bf16.mxu0 0
      %1937 = vmatpush1.bf16.msra.mxu0 0
      %1938 = vmatprep.subr.bf16.mxu0 0
      %1939 = vmatpush1.bf16.msra.mxu0 0
      %1940 = vmatprep.subr.bf16.mxu0 0
      %1941 = vmatpush1.bf16.msra.mxu0 0
      %1942 = vmatprep.subr.bf16.mxu0 0
      %1943 = vmatpush1.bf16.msra.mxu0 0
      %1944 = vmatprep.subr.bf16.mxu0 0
      %1945 = vmatpush1.bf16.msra.mxu0 0
      %1946 = vmatprep.subr.bf16.mxu0 0
      %1947 = vmatpush1.bf16.msra.mxu0 0
      %1948 = vmatprep.mubr.bf16.mxu0 0
      %1949 = vmatmul.mubr.bf16.gmra.mrb[0].mxu0 %v1836
      %v1950 = vpop.f32.mrb[0].mxu0
      %v1951 = vadd.f32 %v1866, %v1950
      %v1952 = vpop.f32.mrb[0].mxu0
      %v1953 = vpop.f32.mrb[0].mxu0
      %v1954 = vadd.f32 %v1866, %v1953
      %v1955 = vpop.f32.mrb[0].mxu0
      %1956 = vmatprep.mubr.bf16.mxu0 0
      %1957 = vmatmul.mubr.bf16.gmra.mrb[0].mxu0 %v1837
      %v1958 = vpop.f32.mrb[0].mxu0
      %v1959 = vadd.f32 %v1866, %v1958
      %v1960 = vpop.f32.mrb[0].mxu0
      %v1961 = vpop.f32.mrb[0].mxu0
      %v1962 = vadd.f32 %v1866, %v1961
      %v1963 = vpop.f32.mrb[0].mxu0
      %1964 = vmatprep.mubr.bf16.mxu0 0
      %1965 = vmatmul.mubr.bf16.gmra.mrb[0].mxu0 %v1838
      %v1966 = vpop.f32.mrb[0].mxu0
      %v1967 = vadd.f32 %v1866, %v1966
      %v1968 = vpop.f32.mrb[0].mxu0
      %v1969 = vpop.f32.mrb[0].mxu0
      %v1970 = vadd.f32 %v1866, %v1969
      %v1971 = vpop.f32.mrb[0].mxu0
      %1972 = vmatprep.mubr.bf16.mxu0 0
      %1973 = vmatmul.mubr.bf16.gmra.mrb[0].mxu0 %v1839
      %v1974 = vpop.f32.mrb[0].mxu0
      %v1975 = vadd.f32 %v1866, %v1974
      %v1976 = vpop.f32.mrb[0].mxu0
      %v1977 = vpop.f32.mrb[0].mxu0
      %v1978 = vadd.f32 %v1866, %v1977
      %v1979 = vpop.f32.mrb[0].mxu0
      %1980 = vmatprep.mubr.bf16.mxu0 0
      %1981 = vmatmul.mubr.bf16.gmra.mrb[0].mxu0 %v1840
      %v1982 = vpop.f32.mrb[0].mxu0
      %v1983 = vadd.f32 %v1866, %v1982
      %v1984 = vpop.f32.mrb[0].mxu0
      %v1985 = vpop.f32.mrb[0].mxu0
      %v1986 = vadd.f32 %v1866, %v1985
      %v1987 = vpop.f32.mrb[0].mxu0
      %1988 = vmatprep.mubr.bf16.mxu0 0
      %1989 = vmatmul.mubr.bf16.gmra.mrb[0].mxu0 %v1841
      %v1990 = vpop.f32.mrb[0].mxu0
      %v1991 = vadd.f32 %v1866, %v1990
      %v1992 = vpop.f32.mrb[0].mxu0
      %v1993 = vpop.f32.mrb[0].mxu0
      %v1994 = vadd.f32 %v1866, %v1993
      %v1995 = vpop.f32.mrb[0].mxu0
      %1996 = vmatprep.mubr.bf16.mxu0 0
      %1997 = vmatmul.mubr.bf16.gmra.mrb[0].mxu0 %v1842
      %v1998 = vpop.f32.mrb[0].mxu0
      %v1999 = vadd.f32 %v1866, %v1998
      %v2000 = vpop.f32.mrb[0].mxu0
      %v2001 = vpop.f32.mrb[0].mxu0
      %v2002 = vadd.f32 %v1866, %v2001
      %v2003 = vpop.f32.mrb[0].mxu0
      %2004 = vmatprep.mubr.bf16.mxu0 0
      %2005 = vmatmul.mubr.bf16.gmra.mrb[0].mxu0 %v1843
      %v2006 = vpop.f32.mrb[0].mxu0
      %v2007 = vadd.f32 %v1866, %v2006
      %v2008 = vpop.f32.mrb[0].mxu0
      %v2009 = vpop.f32.mrb[0].mxu0
      %v2010 = vadd.f32 %v1866, %v2009
      %v2011 = vpop.f32.mrb[0].mxu0
      %2012 = vdwg.mxu0
      %v2013 = vmax.f32 %v1951, 0.0
      %v2014 = vmax.f32 %v1954, 0.0
      %v2015 = vmax.f32 %v1959, 0.0
      %v2016 = vmax.f32 %v1962, 0.0
      %v2017 = vmax.f32 %v1967, 0.0
      %v2018 = vmax.f32 %v1970, 0.0
      %v2019 = vmax.f32 %v1975, 0.0
      %v2020 = vmax.f32 %v1978, 0.0
      %v2021 = vmax.f32 %v1983, 0.0
      %v2022 = vmax.f32 %v1986, 0.0
      %v2023 = vmax.f32 %v1991, 0.0
      %v2024 = vmax.f32 %v1994, 0.0
      %v2025 = vmax.f32 %v1999, 0.0
      %v2026 = vmax.f32 %v2002, 0.0
      %v2027 = vmax.f32 %v2007, 0.0
      %v2028 = vmax.f32 %v2010, 0.0
      %v2029 = vpack.c.bf16 %v2014, %v2013
      %v2030 = vpack.c.bf16 %v2016, %v2015
      %v2031 = vpack.c.bf16 %v2018, %v2017
      %v2032 = vpack.c.bf16 %v2020, %v2019
      %v2033 = vpack.c.bf16 %v2022, %v2021
      %v2034 = vpack.c.bf16 %v2024, %v2023
      %v2035 = vpack.c.bf16 %v2026, %v2025
      %v2036 = vpack.c.bf16 %v2028, %v2027
      %s2037 = scalar_lea.vmem %s2, 128
      %v2038 = vld [vmem:[%s2037] sm:$0xf]
      %v2039 = vld [vmem:[%s2037 + $0x4] sm:$0xf]
      %v2040 = vld [vmem:[%s2037 + $0x8] sm:$0xf]
      %v2041 = vld [vmem:[%s2037 + $0xc] sm:$0xf]
      %v2042 = vld [vmem:[%s2037 + $0x10] sm:$0xf]
      %v2043 = vld [vmem:[%s2037 + $0x14] sm:$0xf]
      %v2044 = vld [vmem:[%s2037 + $0x18] sm:$0xf]
      %v2045 = vld [vmem:[%s2037 + $0x1c] sm:$0xf]
      %v2046 = vld [vmem:[%s2037 + $0x20] sm:$0xf]
      %v2047 = vld [vmem:[%s2037 + $0x24] sm:$0xf]
      %v2048 = vld [vmem:[%s2037 + $0x28] sm:$0xf]
      %v2049 = vld [vmem:[%s2037 + $0x2c] sm:$0xf]
      %v2050 = vld [vmem:[%s2037 + $0x30] sm:$0xf]
      %v2051 = vld [vmem:[%s2037 + $0x34] sm:$0xf]
      %v2052 = vld [vmem:[%s2037 + $0x38] sm:$0xf]
      %v2053 = vld [vmem:[%s2037 + $0x3c] sm:$0xf]
      %v2054 = vld [vmem:[%s4 + $0x3] sm:$0x1]
      %v2056 = vlaneseq
      %v2057 = vshrl.u32 %v2056, 7
      %v2058 = vsub.s32 0, %v2057
      %v2059 = vrot.slane %v2054, %v2058
      %v2077 = vunpack.c.l.b16 %v2038
      %v2078 = vunpack.c.l.b16 %v2039
      %v2079 = vunpack.c.l.b16 %v2040
      %v2080 = vunpack.c.l.b16 %v2041
      %v2081 = vunpack.c.l.b16 %v2042
      %v2082 = vunpack.c.l.b16 %v2043
      %v2083 = vunpack.c.l.b16 %v2044
      %v2084 = vunpack.c.l.b16 %v2045
      %v2085 = vunpack.c.l.b16 %v2046
      %v2086 = vunpack.c.l.b16 %v2047
      %v2087 = vunpack.c.l.b16 %v2048
      %v2088 = vunpack.c.l.b16 %v2049
      %v2089 = vunpack.c.l.b16 %v2050
      %v2090 = vunpack.c.l.b16 %v2051
      %v2091 = vunpack.c.l.b16 %v2052
      %v2092 = vunpack.c.l.b16 %v2053
      %v2093 = vpack.c.b16 %v2078, %v2077
      %v2094 = vpack.c.b16 %v2080, %v2079
      %v2095 = vpack.c.b16 %v2082, %v2081
      %v2096 = vpack.c.b16 %v2084, %v2083
      %v2097 = vpack.c.b16 %v2086, %v2085
      %v2098 = vpack.c.b16 %v2088, %v2087
      %v2099 = vpack.c.b16 %v2090, %v2089
      %v2100 = vpack.c.b16 %v2092, %v2091
      %2109 = vmatprep.subr.bf16.mxu0 0
      %2110 = vmatpush1.bf16.msra.mxu0 %v2093
      %2111 = vmatprep.subr.bf16.mxu0 0
      %2112 = vmatpush1.bf16.msra.mxu0 %v2094
      %2113 = vmatprep.subr.bf16.mxu0 0
      %2114 = vmatpush1.bf16.msra.mxu0 %v2095
      %2115 = vmatprep.subr.bf16.mxu0 0
      %2116 = vmatpush1.bf16.msra.mxu0 %v2096
      %2117 = vmatprep.subr.bf16.mxu0 0
      %2118 = vmatpush1.bf16.msra.mxu0 %v2097
      %2119 = vmatprep.subr.bf16.mxu0 0
      %2120 = vmatpush1.bf16.msra.mxu0 %v2098
      %2121 = vmatprep.subr.bf16.mxu0 0
      %2122 = vmatpush1.bf16.msra.mxu0 %v2099
      %2123 = vmatprep.subr.bf16.mxu0 0
      %2124 = vmatpush1.bf16.msra.mxu0 %v2100
      %2125 = vmatprep.subr.bf16.mxu0 0
      %2126 = vmatpush1.bf16.msra.mxu0 0
      %2127 = vmatprep.subr.bf16.mxu0 0
      %2128 = vmatpush1.bf16.msra.mxu0 0
      %2129 = vmatprep.subr.bf16.mxu0 0
      %2130 = vmatpush1.bf16.msra.mxu0 0
      %2131 = vmatprep.subr.bf16.mxu0 0
      %2132 = vmatpush1.bf16.msra.mxu0 0
      %2133 = vmatprep.subr.bf16.mxu0 0
      %2134 = vmatpush1.bf16.msra.mxu0 0
      %2135 = vmatprep.subr.bf16.mxu0 0
      %2136 = vmatpush1.bf16.msra.mxu0 0
      %2137 = vmatprep.subr.bf16.mxu0 0
      %2138 = vmatpush1.bf16.msra.mxu0 0
      %2139 = vmatprep.subr.bf16.mxu0 0
      %2140 = vmatpush1.bf16.msra.mxu0 0
      %2141 = vmatprep.mubr.bf16.mxu0 0
      %2142 = vmatmul.mubr.bf16.gmra.mrb[0].mxu0 %v2029
      %v2143 = vpop.f32.mrb[0].mxu0
      %v2144 = vadd.f32 %v2059, %v2143
      %v2145 = vpop.f32.mrb[0].mxu0
      %v2146 = vpop.f32.mrb[0].mxu0
      %v2147 = vadd.f32 %v2059, %v2146
      %v2148 = vpop.f32.mrb[0].mxu0
      %2149 = vmatprep.mubr.bf16.mxu0 0
      %2150 = vmatmul.mubr.bf16.gmra.mrb[0].mxu0 %v2030
      %v2151 = vpop.f32.mrb[0].mxu0
      %v2152 = vadd.f32 %v2059, %v2151
      %v2153 = vpop.f32.mrb[0].mxu0
      %v2154 = vpop.f32.mrb[0].mxu0
      %v2155 = vadd.f32 %v2059, %v2154
      %v2156 = vpop.f32.mrb[0].mxu0
      %2157 = vmatprep.mubr.bf16.mxu0 0
      %2158 = vmatmul.mubr.bf16.gmra.mrb[0].mxu0 %v2031
      %v2159 = vpop.f32.mrb[0].mxu0
      %v2160 = vadd.f32 %v2059, %v2159
      %v2161 = vpop.f32.mrb[0].mxu0
      %v2162 = vpop.f32.mrb[0].mxu0
      %v2163 = vadd.f32 %v2059, %v2162
      %v2164 = vpop.f32.mrb[0].mxu0
      %2165 = vmatprep.mubr.bf16.mxu0 0
      %2166 = vmatmul.mubr.bf16.gmra.mrb[0].mxu0 %v2032
      %v2167 = vpop.f32.mrb[0].mxu0
      %v2168 = vadd.f32 %v2059, %v2167
      %v2169 = vpop.f32.mrb[0].mxu0
      %v2170 = vpop.f32.mrb[0].mxu0
      %v2171 = vadd.f32 %v2059, %v2170
      %v2172 = vpop.f32.mrb[0].mxu0
      %2173 = vmatprep.mubr.bf16.mxu0 0
      %2174 = vmatmul.mubr.bf16.gmra.mrb[0].mxu0 %v2033
      %v2175 = vpop.f32.mrb[0].mxu0
      %v2176 = vadd.f32 %v2059, %v2175
      %v2177 = vpop.f32.mrb[0].mxu0
      %v2178 = vpop.f32.mrb[0].mxu0
      %v2179 = vadd.f32 %v2059, %v2178
      %v2180 = vpop.f32.mrb[0].mxu0
      %2181 = vmatprep.mubr.bf16.mxu0 0
      %2182 = vmatmul.mubr.bf16.gmra.mrb[0].mxu0 %v2034
      %v2183 = vpop.f32.mrb[0].mxu0
      %v2184 = vadd.f32 %v2059, %v2183
      %v2185 = vpop.f32.mrb[0].mxu0
      %v2186 = vpop.f32.mrb[0].mxu0
      %v2187 = vadd.f32 %v2059, %v2186
      %v2188 = vpop.f32.mrb[0].mxu0
      %2189 = vmatprep.mubr.bf16.mxu0 0
      %2190 = vmatmul.mubr.bf16.gmra.mrb[0].mxu0 %v2035
      %v2191 = vpop.f32.mrb[0].mxu0
      %v2192 = vadd.f32 %v2059, %v2191
      %v2193 = vpop.f32.mrb[0].mxu0
      %v2194 = vpop.f32.mrb[0].mxu0
      %v2195 = vadd.f32 %v2059, %v2194
      %v2196 = vpop.f32.mrb[0].mxu0
      %2197 = vmatprep.mubr.bf16.mxu0 0
      %2198 = vmatmul.mubr.bf16.gmra.mrb[0].mxu0 %v2036
      %v2199 = vpop.f32.mrb[0].mxu0
      %v2200 = vadd.f32 %v2059, %v2199
      %v2201 = vpop.f32.mrb[0].mxu0
      %v2202 = vpop.f32.mrb[0].mxu0
      %v2203 = vadd.f32 %v2059, %v2202
      %v2204 = vpop.f32.mrb[0].mxu0
      %2205 = vdwg.mxu0
      %v2206 = vmax.f32 %v2144, 0.0
      %v2207 = vmax.f32 %v2147, 0.0
      %v2208 = vmax.f32 %v2152, 0.0
      %v2209 = vmax.f32 %v2155, 0.0
      %v2210 = vmax.f32 %v2160, 0.0
      %v2211 = vmax.f32 %v2163, 0.0
      %v2212 = vmax.f32 %v2168, 0.0
      %v2213 = vmax.f32 %v2171, 0.0
      %v2214 = vmax.f32 %v2176, 0.0
      %v2215 = vmax.f32 %v2179, 0.0
      %v2216 = vmax.f32 %v2184, 0.0
      %v2217 = vmax.f32 %v2187, 0.0
      %v2218 = vmax.f32 %v2192, 0.0
      %v2219 = vmax.f32 %v2195, 0.0
      %v2220 = vmax.f32 %v2200, 0.0
      %v2221 = vmax.f32 %v2203, 0.0
      %v2222 = vpack.c.bf16 %v2207, %v2206
      %v2223 = vpack.c.bf16 %v2209, %v2208
      %v2224 = vpack.c.bf16 %v2211, %v2210
      %v2225 = vpack.c.bf16 %v2213, %v2212
      %v2226 = vpack.c.bf16 %v2215, %v2214
      %v2227 = vpack.c.bf16 %v2217, %v2216
      %v2228 = vpack.c.bf16 %v2219, %v2218
      %v2229 = vpack.c.bf16 %v2221, %v2220
      %s2230 = scalar_lea.vmem %s2, 192
      %v2231 = vld [vmem:[%s2230] sm:$0xf]
      %v2232 = vld [vmem:[%s2230 + $0x4] sm:$0xf]
      %v2233 = vld [vmem:[%s2230 + $0x8] sm:$0xf]
      %v2234 = vld [vmem:[%s2230 + $0xc] sm:$0xf]
      %v2235 = vld [vmem:[%s2230 + $0x10] sm:$0xf]
      %v2236 = vld [vmem:[%s2230 + $0x14] sm:$0xf]
      %v2237 = vld [vmem:[%s2230 + $0x18] sm:$0xf]
      %v2238 = vld [vmem:[%s2230 + $0x1c] sm:$0xf]
      %v2239 = vld [vmem:[%s2230 + $0x20] sm:$0xf]
      %v2240 = vld [vmem:[%s2230 + $0x24] sm:$0xf]
      %v2241 = vld [vmem:[%s2230 + $0x28] sm:$0xf]
      %v2242 = vld [vmem:[%s2230 + $0x2c] sm:$0xf]
      %v2243 = vld [vmem:[%s2230 + $0x30] sm:$0xf]
      %v2244 = vld [vmem:[%s2230 + $0x34] sm:$0xf]
      %v2245 = vld [vmem:[%s2230 + $0x38] sm:$0xf]
      %v2246 = vld [vmem:[%s2230 + $0x3c] sm:$0xf]
      %v2247 = vld [vmem:[%s4 + $0x4] sm:$0x1]
      %v2249 = vlaneseq
      %v2250 = vshrl.u32 %v2249, 7
      %v2251 = vsub.s32 0, %v2250
      %v2252 = vrot.slane %v2247, %v2251
      %v2270 = vunpack.c.l.b16 %v2231
      %v2271 = vunpack.c.l.b16 %v2232
      %v2272 = vunpack.c.l.b16 %v2233
      %v2273 = vunpack.c.l.b16 %v2234
      %v2274 = vunpack.c.l.b16 %v2235
      %v2275 = vunpack.c.l.b16 %v2236
      %v2276 = vunpack.c.l.b16 %v2237
      %v2277 = vunpack.c.l.b16 %v2238
      %v2278 = vunpack.c.l.b16 %v2239
      %v2279 = vunpack.c.l.b16 %v2240
      %v2280 = vunpack.c.l.b16 %v2241
      %v2281 = vunpack.c.l.b16 %v2242
      %v2282 = vunpack.c.l.b16 %v2243
      %v2283 = vunpack.c.l.b16 %v2244
      %v2284 = vunpack.c.l.b16 %v2245
      %v2285 = vunpack.c.l.b16 %v2246
      %v2286 = vpack.c.b16 %v2271, %v2270
      %v2287 = vpack.c.b16 %v2273, %v2272
      %v2288 = vpack.c.b16 %v2275, %v2274
      %v2289 = vpack.c.b16 %v2277, %v2276
      %v2290 = vpack.c.b16 %v2279, %v2278
      %v2291 = vpack.c.b16 %v2281, %v2280
      %v2292 = vpack.c.b16 %v2283, %v2282
      %v2293 = vpack.c.b16 %v2285, %v2284
      %2302 = vmatprep.subr.bf16.mxu0 0
      %2303 = vmatpush1.bf16.msra.mxu0 %v2286
      %2304 = vmatprep.subr.bf16.mxu0 0
      %2305 = vmatpush1.bf16.msra.mxu0 %v2287
      %2306 = vmatprep.subr.bf16.mxu0 0
      %2307 = vmatpush1.bf16.msra.mxu0 %v2288
      %2308 = vmatprep.subr.bf16.mxu0 0
      %2309 = vmatpush1.bf16.msra.mxu0 %v2289
      %2310 = vmatprep.subr.bf16.mxu0 0
      %2311 = vmatpush1.bf16.msra.mxu0 %v2290
      %2312 = vmatprep.subr.bf16.mxu0 0
      %2313 = vmatpush1.bf16.msra.mxu0 %v2291
      %2314 = vmatprep.subr.bf16.mxu0 0
      %2315 = vmatpush1.bf16.msra.mxu0 %v2292
      %2316 = vmatprep.subr.bf16.mxu0 0
      %2317 = vmatpush1.bf16.msra.mxu0 %v2293
      %2318 = vmatprep.subr.bf16.mxu0 0
      %2319 = vmatpush1.bf16.msra.mxu0 0
      %2320 = vmatprep.subr.bf16.mxu0 0
      %2321 = vmatpush1.bf16.msra.mxu0 0
      %2322 = vmatprep.subr.bf16.mxu0 0
      %2323 = vmatpush1.bf16.msra.mxu0 0
      %2324 = vmatprep.subr.bf16.mxu0 0
      %2325 = vmatpush1.bf16.msra.mxu0 0
      %2326 = vmatprep.subr.bf16.mxu0 0
      %2327 = vmatpush1.bf16.msra.mxu0 0
      %2328 = vmatprep.subr.bf16.mxu0 0
      %2329 = vmatpush1.bf16.msra.mxu0 0
      %2330 = vmatprep.subr.bf16.mxu0 0
      %2331 = vmatpush1.bf16.msra.mxu0 0
      %2332 = vmatprep.subr.bf16.mxu0 0
      %2333 = vmatpush1.bf16.msra.mxu0 0
      %2334 = vmatprep.mubr.bf16.mxu0 0
      %2335 = vmatmul.mubr.bf16.gmra.mrb[0].mxu0 %v2222
      %v2336 = vpop.f32.mrb[0].mxu0
      %v2337 = vadd.f32 %v2252, %v2336
      %v2338 = vpop.f32.mrb[0].mxu0
      %v2339 = vpop.f32.mrb[0].mxu0
      %v2340 = vadd.f32 %v2252, %v2339
      %v2341 = vpop.f32.mrb[0].mxu0
      %2342 = vmatprep.mubr.bf16.mxu0 0
      %2343 = vmatmul.mubr.bf16.gmra.mrb[0].mxu0 %v2223
      %v2344 = vpop.f32.mrb[0].mxu0
      %v2345 = vadd.f32 %v2252, %v2344
      %v2346 = vpop.f32.mrb[0].mxu0
      %v2347 = vpop.f32.mrb[0].mxu0
      %v2348 = vadd.f32 %v2252, %v2347
      %v2349 = vpop.f32.mrb[0].mxu0
      %2350 = vmatprep.mubr.bf16.mxu0 0
      %2351 = vmatmul.mubr.bf16.gmra.mrb[0].mxu0 %v2224
      %v2352 = vpop.f32.mrb[0].mxu0
      %v2353 = vadd.f32 %v2252, %v2352
      %v2354 = vpop.f32.mrb[0].mxu0
      %v2355 = vpop.f32.mrb[0].mxu0
      %v2356 = vadd.f32 %v2252, %v2355
      %v2357 = vpop.f32.mrb[0].mxu0
      %2358 = vmatprep.mubr.bf16.mxu0 0
      %2359 = vmatmul.mubr.bf16.gmra.mrb[0].mxu0 %v2225
      %v2360 = vpop.f32.mrb[0].mxu0
      %v2361 = vadd.f32 %v2252, %v2360
      %v2362 = vpop.f32.mrb[0].mxu0
      %v2363 = vpop.f32.mrb[0].mxu0
      %v2364 = vadd.f32 %v2252, %v2363
      %v2365 = vpop.f32.mrb[0].mxu0
      %2366 = vmatprep.mubr.bf16.mxu0 0
      %2367 = vmatmul.mubr.bf16.gmra.mrb[0].mxu0 %v2226
      %v2368 = vpop.f32.mrb[0].mxu0
      %v2369 = vadd.f32 %v2252, %v2368
      %v2370 = vpop.f32.mrb[0].mxu0
      %v2371 = vpop.f32.mrb[0].mxu0
      %v2372 = vadd.f32 %v2252, %v2371
      %v2373 = vpop.f32.mrb[0].mxu0
      %2374 = vmatprep.mubr.bf16.mxu0 0
      %2375 = vmatmul.mubr.bf16.gmra.mrb[0].mxu0 %v2227
      %v2376 = vpop.f32.mrb[0].mxu0
      %v2377 = vadd.f32 %v2252, %v2376
      %v2378 = vpop.f32.mrb[0].mxu0
      %v2379 = vpop.f32.mrb[0].mxu0
      %v2380 = vadd.f32 %v2252, %v2379
      %v2381 = vpop.f32.mrb[0].mxu0
      %2382 = vmatprep.mubr.bf16.mxu0 0
      %2383 = vmatmul.mubr.bf16.gmra.mrb[0].mxu0 %v2228
      %v2384 = vpop.f32.mrb[0].mxu0
      %v2385 = vadd.f32 %v2252, %v2384
      %v2386 = vpop.f32.mrb[0].mxu0
      %v2387 = vpop.f32.mrb[0].mxu0
      %v2388 = vadd.f32 %v2252, %v2387
      %v2389 = vpop.f32.mrb[0].mxu0
      %2390 = vmatprep.mubr.bf16.mxu0 0
      %2391 = vmatmul.mubr.bf16.gmra.mrb[0].mxu0 %v2229
      %v2392 = vpop.f32.mrb[0].mxu0
      %v2393 = vadd.f32 %v2252, %v2392
      %v2394 = vpop.f32.mrb[0].mxu0
      %v2395 = vpop.f32.mrb[0].mxu0
      %v2396 = vadd.f32 %v2252, %v2395
      %v2397 = vpop.f32.mrb[0].mxu0
      %2398 = vdwg.mxu0
      %v2399 = vpack.c.bf16 %v2340, %v2337
      %v2400 = vpack.c.bf16 %v2348, %v2345
      %v2401 = vpack.c.bf16 %v2356, %v2353
      %v2402 = vpack.c.bf16 %v2364, %v2361
      %v2403 = vpack.c.bf16 %v2372, %v2369
      %v2404 = vpack.c.bf16 %v2380, %v2377
      %v2405 = vpack.c.bf16 %v2388, %v2385
      %v2406 = vpack.c.bf16 %v2396, %v2393
      %s2407 = scalar_lea.vmem %s2, 256
      %v2408 = vld [vmem:[%s2407] sm:$0xf]
      %v2409 = vld [vmem:[%s2407 + $0x4] sm:$0xf]
      %v2410 = vld [vmem:[%s2407 + $0x8] sm:$0xf]
      %v2411 = vld [vmem:[%s2407 + $0xc] sm:$0xf]
      %v2412 = vld [vmem:[%s2407 + $0x10] sm:$0xf]
      %v2413 = vld [vmem:[%s2407 + $0x14] sm:$0xf]
      %v2414 = vld [vmem:[%s2407 + $0x18] sm:$0xf]
      %v2415 = vld [vmem:[%s2407 + $0x1c] sm:$0xf]
      %v2416 = vld [vmem:[%s2407 + $0x20] sm:$0xf]
      %v2417 = vld [vmem:[%s2407 + $0x24] sm:$0xf]
      %v2418 = vld [vmem:[%s2407 + $0x28] sm:$0xf]
      %v2419 = vld [vmem:[%s2407 + $0x2c] sm:$0xf]
      %v2420 = vld [vmem:[%s2407 + $0x30] sm:$0xf]
      %v2421 = vld [vmem:[%s2407 + $0x34] sm:$0xf]
      %v2422 = vld [vmem:[%s2407 + $0x38] sm:$0xf]
      %v2423 = vld [vmem:[%s2407 + $0x3c] sm:$0xf]
      %v2424 = vld [vmem:[%s4 + $0x5] sm:$0x1]
      %v2426 = vlaneseq
      %v2427 = vshrl.u32 %v2426, 7
      %v2428 = vsub.s32 0, %v2427
      %v2429 = vrot.slane %v2424, %v2428
      %v2447 = vunpack.c.l.b16 %v2408
      %v2448 = vunpack.c.l.b16 %v2409
      %v2449 = vunpack.c.l.b16 %v2410
      %v2450 = vunpack.c.l.b16 %v2411
      %v2451 = vunpack.c.l.b16 %v2412
      %v2452 = vunpack.c.l.b16 %v2413
      %v2453 = vunpack.c.l.b16 %v2414
      %v2454 = vunpack.c.l.b16 %v2415
      %v2455 = vunpack.c.l.b16 %v2416
      %v2456 = vunpack.c.l.b16 %v2417
      %v2457 = vunpack.c.l.b16 %v2418
      %v2458 = vunpack.c.l.b16 %v2419
      %v2459 = vunpack.c.l.b16 %v2420
      %v2460 = vunpack.c.l.b16 %v2421
      %v2461 = vunpack.c.l.b16 %v2422
      %v2462 = vunpack.c.l.b16 %v2423
      %v2463 = vpack.c.b16 %v2448, %v2447
      %v2464 = vpack.c.b16 %v2450, %v2449
      %v2465 = vpack.c.b16 %v2452, %v2451
      %v2466 = vpack.c.b16 %v2454, %v2453
      %v2467 = vpack.c.b16 %v2456, %v2455
      %v2468 = vpack.c.b16 %v2458, %v2457
      %v2469 = vpack.c.b16 %v2460, %v2459
      %v2470 = vpack.c.b16 %v2462, %v2461
      %2479 = vmatprep.subr.bf16.mxu0 0
      %2480 = vmatpush1.bf16.msra.mxu0 %v2463
      %2481 = vmatprep.subr.bf16.mxu0 0
      %2482 = vmatpush1.bf16.msra.mxu0 %v2464
      %2483 = vmatprep.subr.bf16.mxu0 0
      %2484 = vmatpush1.bf16.msra.mxu0 %v2465
      %2485 = vmatprep.subr.bf16.mxu0 0
      %2486 = vmatpush1.bf16.msra.mxu0 %v2466
      %2487 = vmatprep.subr.bf16.mxu0 0
      %2488 = vmatpush1.bf16.msra.mxu0 %v2467
      %2489 = vmatprep.subr.bf16.mxu0 0
      %2490 = vmatpush1.bf16.msra.mxu0 %v2468
      %2491 = vmatprep.subr.bf16.mxu0 0
      %2492 = vmatpush1.bf16.msra.mxu0 %v2469
      %2493 = vmatprep.subr.bf16.mxu0 0
      %2494 = vmatpush1.bf16.msra.mxu0 %v2470
      %2495 = vmatprep.subr.bf16.mxu0 0
      %2496 = vmatpush1.bf16.msra.mxu0 0
      %2497 = vmatprep.subr.bf16.mxu0 0
      %2498 = vmatpush1.bf16.msra.mxu0 0
      %2499 = vmatprep.subr.bf16.mxu0 0
      %2500 = vmatpush1.bf16.msra.mxu0 0
      %2501 = vmatprep.subr.bf16.mxu0 0
      %2502 = vmatpush1.bf16.msra.mxu0 0
      %2503 = vmatprep.subr.bf16.mxu0 0
      %2504 = vmatpush1.bf16.msra.mxu0 0
      %2505 = vmatprep.subr.bf16.mxu0 0
      %2506 = vmatpush1.bf16.msra.mxu0 0
      %2507 = vmatprep.subr.bf16.mxu0 0
      %2508 = vmatpush1.bf16.msra.mxu0 0
      %2509 = vmatprep.subr.bf16.mxu0 0
      %2510 = vmatpush1.bf16.msra.mxu0 0
      %2511 = vmatprep.mubr.bf16.mxu0 0
      %2512 = vmatmul.mubr.bf16.gmra.mrb[0].mxu0 %v2399
      %v2513 = vpop.f32.mrb[0].mxu0
      %v2514 = vadd.f32 %v2429, %v2513
      %v2515 = vpop.f32.mrb[0].mxu0
      %v2516 = vpop.f32.mrb[0].mxu0
      %v2517 = vadd.f32 %v2429, %v2516
      %v2518 = vpop.f32.mrb[0].mxu0
      %2519 = vmatprep.mubr.bf16.mxu0 0
      %2520 = vmatmul.mubr.bf16.gmra.mrb[0].mxu0 %v2400
      %v2521 = vpop.f32.mrb[0].mxu0
      %v2522 = vadd.f32 %v2429, %v2521
      %v2523 = vpop.f32.mrb[0].mxu0
      %v2524 = vpop.f32.mrb[0].mxu0
      %v2525 = vadd.f32 %v2429, %v2524
      %v2526 = vpop.f32.mrb[0].mxu0
      %2527 = vmatprep.mubr.bf16.mxu0 0
      %2528 = vmatmul.mubr.bf16.gmra.mrb[0].mxu0 %v2401
      %v2529 = vpop.f32.mrb[0].mxu0
      %v2530 = vadd.f32 %v2429, %v2529
      %v2531 = vpop.f32.mrb[0].mxu0
      %v2532 = vpop.f32.mrb[0].mxu0
      %v2533 = vadd.f32 %v2429, %v2532
      %v2534 = vpop.f32.mrb[0].mxu0
      %2535 = vmatprep.mubr.bf16.mxu0 0
      %2536 = vmatmul.mubr.bf16.gmra.mrb[0].mxu0 %v2402
      %v2537 = vpop.f32.mrb[0].mxu0
      %v2538 = vadd.f32 %v2429, %v2537
      %v2539 = vpop.f32.mrb[0].mxu0
      %v2540 = vpop.f32.mrb[0].mxu0
      %v2541 = vadd.f32 %v2429, %v2540
      %v2542 = vpop.f32.mrb[0].mxu0
      %2543 = vmatprep.mubr.bf16.mxu0 0
      %2544 = vmatmul.mubr.bf16.gmra.mrb[0].mxu0 %v2403
      %v2545 = vpop.f32.mrb[0].mxu0
      %v2546 = vadd.f32 %v2429, %v2545
      %v2547 = vpop.f32.mrb[0].mxu0
      %v2548 = vpop.f32.mrb[0].mxu0
      %v2549 = vadd.f32 %v2429, %v2548
      %v2550 = vpop.f32.mrb[0].mxu0
      %2551 = vmatprep.mubr.bf16.mxu0 0
      %2552 = vmatmul.mubr.bf16.gmra.mrb[0].mxu0 %v2404
      %v2553 = vpop.f32.mrb[0].mxu0
      %v2554 = vadd.f32 %v2429, %v2553
      %v2555 = vpop.f32.mrb[0].mxu0
      %v2556 = vpop.f32.mrb[0].mxu0
      %v2557 = vadd.f32 %v2429, %v2556
      %v2558 = vpop.f32.mrb[0].mxu0
      %2559 = vmatprep.mubr.bf16.mxu0 0
      %2560 = vmatmul.mubr.bf16.gmra.mrb[0].mxu0 %v2405
      %v2561 = vpop.f32.mrb[0].mxu0
      %v2562 = vadd.f32 %v2429, %v2561
      %v2563 = vpop.f32.mrb[0].mxu0
      %v2564 = vpop.f32.mrb[0].mxu0
      %v2565 = vadd.f32 %v2429, %v2564
      %v2566 = vpop.f32.mrb[0].mxu0
      %2567 = vmatprep.mubr.bf16.mxu0 0
      %2568 = vmatmul.mubr.bf16.gmra.mrb[0].mxu0 %v2406
      %v2569 = vpop.f32.mrb[0].mxu0
      %v2570 = vadd.f32 %v2429, %v2569
      %v2571 = vpop.f32.mrb[0].mxu0
      %v2572 = vpop.f32.mrb[0].mxu0
      %v2573 = vadd.f32 %v2429, %v2572
      %v2574 = vpop.f32.mrb[0].mxu0
      %2575 = vdwg.mxu0
      %v2576 = vmax.f32 %v2514, 0.0
      %v2577 = vmax.f32 %v2517, 0.0
      %v2578 = vmax.f32 %v2522, 0.0
      %v2579 = vmax.f32 %v2525, 0.0
      %v2580 = vmax.f32 %v2530, 0.0
      %v2581 = vmax.f32 %v2533, 0.0
      %v2582 = vmax.f32 %v2538, 0.0
      %v2583 = vmax.f32 %v2541, 0.0
      %v2584 = vmax.f32 %v2546, 0.0
      %v2585 = vmax.f32 %v2549, 0.0
      %v2586 = vmax.f32 %v2554, 0.0
      %v2587 = vmax.f32 %v2557, 0.0
      %v2588 = vmax.f32 %v2562, 0.0
      %v2589 = vmax.f32 %v2565, 0.0
      %v2590 = vmax.f32 %v2570, 0.0
      %v2591 = vmax.f32 %v2573, 0.0
      %v2592 = vpack.c.bf16 %v2577, %v2576
      %v2593 = vpack.c.bf16 %v2579, %v2578
      %v2594 = vpack.c.bf16 %v2581, %v2580
      %v2595 = vpack.c.bf16 %v2583, %v2582
      %v2596 = vpack.c.bf16 %v2585, %v2584
      %v2597 = vpack.c.bf16 %v2587, %v2586
      %v2598 = vpack.c.bf16 %v2589, %v2588
      %v2599 = vpack.c.bf16 %v2591, %v2590
      %s2600 = scalar_lea.vmem %s2, 320
      %v2601 = vld [vmem:[%s2600] sm:$0xf]
      %v2602 = vld [vmem:[%s2600 + $0x4] sm:$0xf]
      %v2603 = vld [vmem:[%s2600 + $0x8] sm:$0xf]
      %v2604 = vld [vmem:[%s2600 + $0xc] sm:$0xf]
      %v2605 = vld [vmem:[%s2600 + $0x10] sm:$0xf]
      %v2606 = vld [vmem:[%s2600 + $0x14] sm:$0xf]
      %v2607 = vld [vmem:[%s2600 + $0x18] sm:$0xf]
      %v2608 = vld [vmem:[%s2600 + $0x1c] sm:$0xf]
      %v2609 = vld [vmem:[%s2600 + $0x20] sm:$0xf]
      %v2610 = vld [vmem:[%s2600 + $0x24] sm:$0xf]
      %v2611 = vld [vmem:[%s2600 + $0x28] sm:$0xf]
      %v2612 = vld [vmem:[%s2600 + $0x2c] sm:$0xf]
      %v2613 = vld [vmem:[%s2600 + $0x30] sm:$0xf]
      %v2614 = vld [vmem:[%s2600 + $0x34] sm:$0xf]
      %v2615 = vld [vmem:[%s2600 + $0x38] sm:$0xf]
      %v2616 = vld [vmem:[%s2600 + $0x3c] sm:$0xf]
      %v2617 = vld [vmem:[%s4 + $0x6] sm:$0x1]
      %v2619 = vlaneseq
      %v2620 = vshrl.u32 %v2619, 7
      %v2621 = vsub.s32 0, %v2620
      %v2622 = vrot.slane %v2617, %v2621
      %v2640 = vunpack.c.l.b16 %v2601
      %v2641 = vunpack.c.l.b16 %v2602
      %v2642 = vunpack.c.l.b16 %v2603
      %v2643 = vunpack.c.l.b16 %v2604
      %v2644 = vunpack.c.l.b16 %v2605
      %v2645 = vunpack.c.l.b16 %v2606
      %v2646 = vunpack.c.l.b16 %v2607
      %v2647 = vunpack.c.l.b16 %v2608
      %v2648 = vunpack.c.l.b16 %v2609
      %v2649 = vunpack.c.l.b16 %v2610
      %v2650 = vunpack.c.l.b16 %v2611
      %v2651 = vunpack.c.l.b16 %v2612
      %v2652 = vunpack.c.l.b16 %v2613
      %v2653 = vunpack.c.l.b16 %v2614
      %v2654 = vunpack.c.l.b16 %v2615
      %v2655 = vunpack.c.l.b16 %v2616
      %v2656 = vpack.c.b16 %v2641, %v2640
      %v2657 = vpack.c.b16 %v2643, %v2642
      %v2658 = vpack.c.b16 %v2645, %v2644
      %v2659 = vpack.c.b16 %v2647, %v2646
      %v2660 = vpack.c.b16 %v2649, %v2648
      %v2661 = vpack.c.b16 %v2651, %v2650
      %v2662 = vpack.c.b16 %v2653, %v2652
      %v2663 = vpack.c.b16 %v2655, %v2654
      %2672 = vmatprep.subr.bf16.mxu0 0
      %2673 = vmatpush1.bf16.msra.mxu0 %v2656
      %2674 = vmatprep.subr.bf16.mxu0 0
      %2675 = vmatpush1.bf16.msra.mxu0 %v2657
      %2676 = vmatprep.subr.bf16.mxu0 0
      %2677 = vmatpush1.bf16.msra.mxu0 %v2658
      %2678 = vmatprep.subr.bf16.mxu0 0
      %2679 = vmatpush1.bf16.msra.mxu0 %v2659
      %2680 = vmatprep.subr.bf16.mxu0 0
      %2681 = vmatpush1.bf16.msra.mxu0 %v2660
      %2682 = vmatprep.subr.bf16.mxu0 0
      %2683 = vmatpush1.bf16.msra.mxu0 %v2661
      %2684 = vmatprep.subr.bf16.mxu0 0
      %2685 = vmatpush1.bf16.msra.mxu0 %v2662
      %2686 = vmatprep.subr.bf16.mxu0 0
      %2687 = vmatpush1.bf16.msra.mxu0 %v2663
      %2688 = vmatprep.subr.bf16.mxu0 0
      %2689 = vmatpush1.bf16.msra.mxu0 0
      %2690 = vmatprep.subr.bf16.mxu0 0
      %2691 = vmatpush1.bf16.msra.mxu0 0
      %2692 = vmatprep.subr.bf16.mxu0 0
      %2693 = vmatpush1.bf16.msra.mxu0 0
      %2694 = vmatprep.subr.bf16.mxu0 0
      %2695 = vmatpush1.bf16.msra.mxu0 0
      %2696 = vmatprep.subr.bf16.mxu0 0
      %2697 = vmatpush1.bf16.msra.mxu0 0
      %2698 = vmatprep.subr.bf16.mxu0 0
      %2699 = vmatpush1.bf16.msra.mxu0 0
      %2700 = vmatprep.subr.bf16.mxu0 0
      %2701 = vmatpush1.bf16.msra.mxu0 0
      %2702 = vmatprep.subr.bf16.mxu0 0
      %2703 = vmatpush1.bf16.msra.mxu0 0
      %2704 = vmatprep.mubr.bf16.mxu0 0
      %2705 = vmatmul.mubr.bf16.gmra.mrb[0].mxu0 %v2592
      %v2706 = vpop.f32.mrb[0].mxu0
      %v2707 = vadd.f32 %v2622, %v2706
      %v2708 = vpop.f32.mrb[0].mxu0
      %v2709 = vpop.f32.mrb[0].mxu0
      %v2710 = vadd.f32 %v2622, %v2709
      %v2711 = vpop.f32.mrb[0].mxu0
      %2712 = vmatprep.mubr.bf16.mxu0 0
      %2713 = vmatmul.mubr.bf16.gmra.mrb[0].mxu0 %v2593
      %v2714 = vpop.f32.mrb[0].mxu0
      %v2715 = vadd.f32 %v2622, %v2714
      %v2716 = vpop.f32.mrb[0].mxu0
      %v2717 = vpop.f32.mrb[0].mxu0
      %v2718 = vadd.f32 %v2622, %v2717
      %v2719 = vpop.f32.mrb[0].mxu0
      %2720 = vmatprep.mubr.bf16.mxu0 0
      %2721 = vmatmul.mubr.bf16.gmra.mrb[0].mxu0 %v2594
      %v2722 = vpop.f32.mrb[0].mxu0
      %v2723 = vadd.f32 %v2622, %v2722
      %v2724 = vpop.f32.mrb[0].mxu0
      %v2725 = vpop.f32.mrb[0].mxu0
      %v2726 = vadd.f32 %v2622, %v2725
      %v2727 = vpop.f32.mrb[0].mxu0
      %2728 = vmatprep.mubr.bf16.mxu0 0
      %2729 = vmatmul.mubr.bf16.gmra.mrb[0].mxu0 %v2595
      %v2730 = vpop.f32.mrb[0].mxu0
      %v2731 = vadd.f32 %v2622, %v2730
      %v2732 = vpop.f32.mrb[0].mxu0
      %v2733 = vpop.f32.mrb[0].mxu0
      %v2734 = vadd.f32 %v2622, %v2733
      %v2735 = vpop.f32.mrb[0].mxu0
      %2736 = vmatprep.mubr.bf16.mxu0 0
      %2737 = vmatmul.mubr.bf16.gmra.mrb[0].mxu0 %v2596
      %v2738 = vpop.f32.mrb[0].mxu0
      %v2739 = vadd.f32 %v2622, %v2738
      %v2740 = vpop.f32.mrb[0].mxu0
      %v2741 = vpop.f32.mrb[0].mxu0
      %v2742 = vadd.f32 %v2622, %v2741
      %v2743 = vpop.f32.mrb[0].mxu0
      %2744 = vmatprep.mubr.bf16.mxu0 0
      %2745 = vmatmul.mubr.bf16.gmra.mrb[0].mxu0 %v2597
      %v2746 = vpop.f32.mrb[0].mxu0
      %v2747 = vadd.f32 %v2622, %v2746
      %v2748 = vpop.f32.mrb[0].mxu0
      %v2749 = vpop.f32.mrb[0].mxu0
      %v2750 = vadd.f32 %v2622, %v2749
      %v2751 = vpop.f32.mrb[0].mxu0
      %2752 = vmatprep.mubr.bf16.mxu0 0
      %2753 = vmatmul.mubr.bf16.gmra.mrb[0].mxu0 %v2598
      %v2754 = vpop.f32.mrb[0].mxu0
      %v2755 = vadd.f32 %v2622, %v2754
      %v2756 = vpop.f32.mrb[0].mxu0
      %v2757 = vpop.f32.mrb[0].mxu0
      %v2758 = vadd.f32 %v2622, %v2757
      %v2759 = vpop.f32.mrb[0].mxu0
      %2760 = vmatprep.mubr.bf16.mxu0 0
      %2761 = vmatmul.mubr.bf16.gmra.mrb[0].mxu0 %v2599
      %v2762 = vpop.f32.mrb[0].mxu0
      %v2763 = vadd.f32 %v2622, %v2762
      %v2764 = vpop.f32.mrb[0].mxu0
      %v2765 = vpop.f32.mrb[0].mxu0
      %v2766 = vadd.f32 %v2622, %v2765
      %v2767 = vpop.f32.mrb[0].mxu0
      %2768 = vdwg.mxu0
      %v2769 = vmax.f32 %v2707, 0.0
      %v2770 = vmax.f32 %v2710, 0.0
      %v2771 = vmax.f32 %v2715, 0.0
      %v2772 = vmax.f32 %v2718, 0.0
      %v2773 = vmax.f32 %v2723, 0.0
      %v2774 = vmax.f32 %v2726, 0.0
      %v2775 = vmax.f32 %v2731, 0.0
      %v2776 = vmax.f32 %v2734, 0.0
      %v2777 = vmax.f32 %v2739, 0.0
      %v2778 = vmax.f32 %v2742, 0.0
      %v2779 = vmax.f32 %v2747, 0.0
      %v2780 = vmax.f32 %v2750, 0.0
      %v2781 = vmax.f32 %v2755, 0.0
      %v2782 = vmax.f32 %v2758, 0.0
      %v2783 = vmax.f32 %v2763, 0.0
      %v2784 = vmax.f32 %v2766, 0.0
      %v2785 = vpack.c.bf16 %v2770, %v2769
      %v2786 = vpack.c.bf16 %v2772, %v2771
      %v2787 = vpack.c.bf16 %v2774, %v2773
      %v2788 = vpack.c.bf16 %v2776, %v2775
      %v2789 = vpack.c.bf16 %v2778, %v2777
      %v2790 = vpack.c.bf16 %v2780, %v2779
      %v2791 = vpack.c.bf16 %v2782, %v2781
      %v2792 = vpack.c.bf16 %v2784, %v2783
      %s2793 = scalar_lea.vmem %s2, 384
      %v2794 = vld [vmem:[%s2793] sm:$0xf]
      %v2795 = vld [vmem:[%s2793 + $0x4] sm:$0xf]
      %v2796 = vld [vmem:[%s2793 + $0x8] sm:$0xf]
      %v2797 = vld [vmem:[%s2793 + $0xc] sm:$0xf]
      %v2798 = vld [vmem:[%s2793 + $0x10] sm:$0xf]
      %v2799 = vld [vmem:[%s2793 + $0x14] sm:$0xf]
      %v2800 = vld [vmem:[%s2793 + $0x18] sm:$0xf]
      %v2801 = vld [vmem:[%s2793 + $0x1c] sm:$0xf]
      %v2802 = vld [vmem:[%s2793 + $0x20] sm:$0xf]
      %v2803 = vld [vmem:[%s2793 + $0x24] sm:$0xf]
      %v2804 = vld [vmem:[%s2793 + $0x28] sm:$0xf]
      %v2805 = vld [vmem:[%s2793 + $0x2c] sm:$0xf]
      %v2806 = vld [vmem:[%s2793 + $0x30] sm:$0xf]
      %v2807 = vld [vmem:[%s2793 + $0x34] sm:$0xf]
      %v2808 = vld [vmem:[%s2793 + $0x38] sm:$0xf]
      %v2809 = vld [vmem:[%s2793 + $0x3c] sm:$0xf]
      %v2810 = vld [vmem:[%s4 + $0x7] sm:$0x1]
      %v2812 = vlaneseq
      %v2813 = vshrl.u32 %v2812, 7
      %v2814 = vsub.s32 0, %v2813
      %v2815 = vrot.slane %v2810, %v2814
      %v2833 = vunpack.c.l.b16 %v2794
      %v2834 = vunpack.c.l.b16 %v2795
      %v2835 = vunpack.c.l.b16 %v2796
      %v2836 = vunpack.c.l.b16 %v2797
      %v2837 = vunpack.c.l.b16 %v2798
      %v2838 = vunpack.c.l.b16 %v2799
      %v2839 = vunpack.c.l.b16 %v2800
      %v2840 = vunpack.c.l.b16 %v2801
      %v2841 = vunpack.c.l.b16 %v2802
      %v2842 = vunpack.c.l.b16 %v2803
      %v2843 = vunpack.c.l.b16 %v2804
      %v2844 = vunpack.c.l.b16 %v2805
      %v2845 = vunpack.c.l.b16 %v2806
      %v2846 = vunpack.c.l.b16 %v2807
      %v2847 = vunpack.c.l.b16 %v2808
      %v2848 = vunpack.c.l.b16 %v2809
      %v2849 = vpack.c.b16 %v2834, %v2833
      %v2850 = vpack.c.b16 %v2836, %v2835
      %v2851 = vpack.c.b16 %v2838, %v2837
      %v2852 = vpack.c.b16 %v2840, %v2839
      %v2853 = vpack.c.b16 %v2842, %v2841
      %v2854 = vpack.c.b16 %v2844, %v2843
      %v2855 = vpack.c.b16 %v2846, %v2845
      %v2856 = vpack.c.b16 %v2848, %v2847
      %2865 = vmatprep.subr.bf16.mxu0 0
      %2866 = vmatpush1.bf16.msra.mxu0 %v2849
      %2867 = vmatprep.subr.bf16.mxu0 0
      %2868 = vmatpush1.bf16.msra.mxu0 %v2850
      %2869 = vmatprep.subr.bf16.mxu0 0
      %2870 = vmatpush1.bf16.msra.mxu0 %v2851
      %2871 = vmatprep.subr.bf16.mxu0 0
      %2872 = vmatpush1.bf16.msra.mxu0 %v2852
      %2873 = vmatprep.subr.bf16.mxu0 0
      %2874 = vmatpush1.bf16.msra.mxu0 %v2853
      %2875 = vmatprep.subr.bf16.mxu0 0
      %2876 = vmatpush1.bf16.msra.mxu0 %v2854
      %2877 = vmatprep.subr.bf16.mxu0 0
      %2878 = vmatpush1.bf16.msra.mxu0 %v2855
      %2879 = vmatprep.subr.bf16.mxu0 0
      %2880 = vmatpush1.bf16.msra.mxu0 %v2856
      %2881 = vmatprep.subr.bf16.mxu0 0
      %2882 = vmatpush1.bf16.msra.mxu0 0
      %2883 = vmatprep.subr.bf16.mxu0 0
      %2884 = vmatpush1.bf16.msra.mxu0 0
      %2885 = vmatprep.subr.bf16.mxu0 0
      %2886 = vmatpush1.bf16.msra.mxu0 0
      %2887 = vmatprep.subr.bf16.mxu0 0
      %2888 = vmatpush1.bf16.msra.mxu0 0
      %2889 = vmatprep.subr.bf16.mxu0 0
      %2890 = vmatpush1.bf16.msra.mxu0 0
      %2891 = vmatprep.subr.bf16.mxu0 0
      %2892 = vmatpush1.bf16.msra.mxu0 0
      %2893 = vmatprep.subr.bf16.mxu0 0
      %2894 = vmatpush1.bf16.msra.mxu0 0
      %2895 = vmatprep.subr.bf16.mxu0 0
      %2896 = vmatpush1.bf16.msra.mxu0 0
      %2897 = vmatprep.mubr.bf16.mxu0 0
      %2898 = vmatmul.mubr.bf16.gmra.mrb[0].mxu0 %v2785
      %v2899 = vpop.f32.mrb[0].mxu0
      %v2900 = vadd.f32 %v2815, %v2899
      %v2901 = vpop.f32.mrb[0].mxu0
      %v2902 = vpop.f32.mrb[0].mxu0
      %v2903 = vadd.f32 %v2815, %v2902
      %v2904 = vpop.f32.mrb[0].mxu0
      %2905 = vmatprep.mubr.bf16.mxu0 0
      %2906 = vmatmul.mubr.bf16.gmra.mrb[0].mxu0 %v2786
      %v2907 = vpop.f32.mrb[0].mxu0
      %v2908 = vadd.f32 %v2815, %v2907
      %v2909 = vpop.f32.mrb[0].mxu0
      %v2910 = vpop.f32.mrb[0].mxu0
      %v2911 = vadd.f32 %v2815, %v2910
      %v2912 = vpop.f32.mrb[0].mxu0
      %2913 = vmatprep.mubr.bf16.mxu0 0
      %2914 = vmatmul.mubr.bf16.gmra.mrb[0].mxu0 %v2787
      %v2915 = vpop.f32.mrb[0].mxu0
      %v2916 = vadd.f32 %v2815, %v2915
      %v2917 = vpop.f32.mrb[0].mxu0
      %v2918 = vpop.f32.mrb[0].mxu0
      %v2919 = vadd.f32 %v2815, %v2918
      %v2920 = vpop.f32.mrb[0].mxu0
      %2921 = vmatprep.mubr.bf16.mxu0 0
      %2922 = vmatmul.mubr.bf16.gmra.mrb[0].mxu0 %v2788
      %v2923 = vpop.f32.mrb[0].mxu0
      %v2924 = vadd.f32 %v2815, %v2923
      %v2925 = vpop.f32.mrb[0].mxu0
      %v2926 = vpop.f32.mrb[0].mxu0
      %v2927 = vadd.f32 %v2815, %v2926
      %v2928 = vpop.f32.mrb[0].mxu0
      %2929 = vmatprep.mubr.bf16.mxu0 0
      %2930 = vmatmul.mubr.bf16.gmra.mrb[0].mxu0 %v2789
      %v2931 = vpop.f32.mrb[0].mxu0
      %v2932 = vadd.f32 %v2815, %v2931
      %v2933 = vpop.f32.mrb[0].mxu0
      %v2934 = vpop.f32.mrb[0].mxu0
      %v2935 = vadd.f32 %v2815, %v2934
      %v2936 = vpop.f32.mrb[0].mxu0
      %2937 = vmatprep.mubr.bf16.mxu0 0
      %2938 = vmatmul.mubr.bf16.gmra.mrb[0].mxu0 %v2790
      %v2939 = vpop.f32.mrb[0].mxu0
      %v2940 = vadd.f32 %v2815, %v2939
      %v2941 = vpop.f32.mrb[0].mxu0
      %v2942 = vpop.f32.mrb[0].mxu0
      %v2943 = vadd.f32 %v2815, %v2942
      %v2944 = vpop.f32.mrb[0].mxu0
      %2945 = vmatprep.mubr.bf16.mxu0 0
      %2946 = vmatmul.mubr.bf16.gmra.mrb[0].mxu0 %v2791
      %v2947 = vpop.f32.mrb[0].mxu0
      %v2948 = vadd.f32 %v2815, %v2947
      %v2949 = vpop.f32.mrb[0].mxu0
      %v2950 = vpop.f32.mrb[0].mxu0
      %v2951 = vadd.f32 %v2815, %v2950
      %v2952 = vpop.f32.mrb[0].mxu0
      %2953 = vmatprep.mubr.bf16.mxu0 0
      %2954 = vmatmul.mubr.bf16.gmra.mrb[0].mxu0 %v2792
      %v2955 = vpop.f32.mrb[0].mxu0
      %v2956 = vadd.f32 %v2815, %v2955
      %v2957 = vpop.f32.mrb[0].mxu0
      %v2958 = vpop.f32.mrb[0].mxu0
      %v2959 = vadd.f32 %v2815, %v2958
      %v2960 = vpop.f32.mrb[0].mxu0
      %2961 = vdwg.mxu0
      %v2962 = vmax.f32 %v2900, 0.0
      %v2963 = vmax.f32 %v2903, 0.0
      %v2964 = vmax.f32 %v2908, 0.0
      %v2965 = vmax.f32 %v2911, 0.0
      %v2966 = vmax.f32 %v2916, 0.0
      %v2967 = vmax.f32 %v2919, 0.0
      %v2968 = vmax.f32 %v2924, 0.0
      %v2969 = vmax.f32 %v2927, 0.0
      %v2970 = vmax.f32 %v2932, 0.0
      %v2971 = vmax.f32 %v2935, 0.0
      %v2972 = vmax.f32 %v2940, 0.0
      %v2973 = vmax.f32 %v2943, 0.0
      %v2974 = vmax.f32 %v2948, 0.0
      %v2975 = vmax.f32 %v2951, 0.0
      %v2976 = vmax.f32 %v2956, 0.0
      %v2977 = vmax.f32 %v2959, 0.0
      %v2978 = vpack.c.bf16 %v2963, %v2962
      %v2979 = vpack.c.bf16 %v2965, %v2964
      %v2980 = vpack.c.bf16 %v2967, %v2966
      %v2981 = vpack.c.bf16 %v2969, %v2968
      %v2982 = vpack.c.bf16 %v2971, %v2970
      %v2983 = vpack.c.bf16 %v2973, %v2972
      %v2984 = vpack.c.bf16 %v2975, %v2974
      %v2985 = vpack.c.bf16 %v2977, %v2976
      %s2986 = scalar_lea.vmem %s2, 448
      %v2987 = vld [vmem:[%s2986] sm:$0xf]
      %v2988 = vld [vmem:[%s2986 + $0x4] sm:$0xf]
      %v2989 = vld [vmem:[%s2986 + $0x8] sm:$0xf]
      %v2990 = vld [vmem:[%s2986 + $0xc] sm:$0xf]
      %v2991 = vld [vmem:[%s2986 + $0x10] sm:$0xf]
      %v2992 = vld [vmem:[%s2986 + $0x14] sm:$0xf]
      %v2993 = vld [vmem:[%s2986 + $0x18] sm:$0xf]
      %v2994 = vld [vmem:[%s2986 + $0x1c] sm:$0xf]
      %v2995 = vld [vmem:[%s2986 + $0x20] sm:$0xf]
      %v2996 = vld [vmem:[%s2986 + $0x24] sm:$0xf]
      %v2997 = vld [vmem:[%s2986 + $0x28] sm:$0xf]
      %v2998 = vld [vmem:[%s2986 + $0x2c] sm:$0xf]
      %v2999 = vld [vmem:[%s2986 + $0x30] sm:$0xf]
      %v3000 = vld [vmem:[%s2986 + $0x34] sm:$0xf]
      %v3001 = vld [vmem:[%s2986 + $0x38] sm:$0xf]
      %v3002 = vld [vmem:[%s2986 + $0x3c] sm:$0xf]
      %v3003 = vld [vmem:[%s4 + $0x8] sm:$0x1]
      %v3005 = vlaneseq
      %v3006 = vshrl.u32 %v3005, 7
      %v3007 = vsub.s32 0, %v3006
      %v3008 = vrot.slane %v3003, %v3007
      %v3026 = vunpack.c.l.b16 %v2987
      %v3027 = vunpack.c.l.b16 %v2988
      %v3028 = vunpack.c.l.b16 %v2989
      %v3029 = vunpack.c.l.b16 %v2990
      %v3030 = vunpack.c.l.b16 %v2991
      %v3031 = vunpack.c.l.b16 %v2992
      %v3032 = vunpack.c.l.b16 %v2993
      %v3033 = vunpack.c.l.b16 %v2994
      %v3034 = vunpack.c.l.b16 %v2995
      %v3035 = vunpack.c.l.b16 %v2996
      %v3036 = vunpack.c.l.b16 %v2997
      %v3037 = vunpack.c.l.b16 %v2998
      %v3038 = vunpack.c.l.b16 %v2999
      %v3039 = vunpack.c.l.b16 %v3000
      %v3040 = vunpack.c.l.b16 %v3001
      %v3041 = vunpack.c.l.b16 %v3002
      %v3042 = vpack.c.b16 %v3027, %v3026
      %v3043 = vpack.c.b16 %v3029, %v3028
      %v3044 = vpack.c.b16 %v3031, %v3030
      %v3045 = vpack.c.b16 %v3033, %v3032
      %v3046 = vpack.c.b16 %v3035, %v3034
      %v3047 = vpack.c.b16 %v3037, %v3036
      %v3048 = vpack.c.b16 %v3039, %v3038
      %v3049 = vpack.c.b16 %v3041, %v3040
      %3058 = vmatprep.subr.bf16.mxu0 0
      %3059 = vmatpush1.bf16.msra.mxu0 %v3042
      %3060 = vmatprep.subr.bf16.mxu0 0
      %3061 = vmatpush1.bf16.msra.mxu0 %v3043
      %3062 = vmatprep.subr.bf16.mxu0 0
      %3063 = vmatpush1.bf16.msra.mxu0 %v3044
      %3064 = vmatprep.subr.bf16.mxu0 0
      %3065 = vmatpush1.bf16.msra.mxu0 %v3045
      %3066 = vmatprep.subr.bf16.mxu0 0
      %3067 = vmatpush1.bf16.msra.mxu0 %v3046
      %3068 = vmatprep.subr.bf16.mxu0 0
      %3069 = vmatpush1.bf16.msra.mxu0 %v3047
      %3070 = vmatprep.subr.bf16.mxu0 0
      %3071 = vmatpush1.bf16.msra.mxu0 %v3048
      %3072 = vmatprep.subr.bf16.mxu0 0
      %3073 = vmatpush1.bf16.msra.mxu0 %v3049
      %3074 = vmatprep.subr.bf16.mxu0 0
      %3075 = vmatpush1.bf16.msra.mxu0 0
      %3076 = vmatprep.subr.bf16.mxu0 0
      %3077 = vmatpush1.bf16.msra.mxu0 0
      %3078 = vmatprep.subr.bf16.mxu0 0
      %3079 = vmatpush1.bf16.msra.mxu0 0
      %3080 = vmatprep.subr.bf16.mxu0 0
      %3081 = vmatpush1.bf16.msra.mxu0 0
      %3082 = vmatprep.subr.bf16.mxu0 0
      %3083 = vmatpush1.bf16.msra.mxu0 0
      %3084 = vmatprep.subr.bf16.mxu0 0
      %3085 = vmatpush1.bf16.msra.mxu0 0
      %3086 = vmatprep.subr.bf16.mxu0 0
      %3087 = vmatpush1.bf16.msra.mxu0 0
      %3088 = vmatprep.subr.bf16.mxu0 0
      %3089 = vmatpush1.bf16.msra.mxu0 0
      %3090 = vmatprep.mubr.bf16.mxu0 0
      %3091 = vmatmul.mubr.bf16.gmra.mrb[0].mxu0 %v2978
      %v3092 = vpop.f32.mrb[0].mxu0
      %v3093 = vadd.f32 %v3008, %v3092
      %v3094 = vpop.f32.mrb[0].mxu0
      %v3095 = vpop.f32.mrb[0].mxu0
      %v3096 = vadd.f32 %v3008, %v3095
      %v3097 = vpop.f32.mrb[0].mxu0
      %3098 = vmatprep.mubr.bf16.mxu0 0
      %3099 = vmatmul.mubr.bf16.gmra.mrb[0].mxu0 %v2979
      %v3100 = vpop.f32.mrb[0].mxu0
      %v3101 = vadd.f32 %v3008, %v3100
      %v3102 = vpop.f32.mrb[0].mxu0
      %v3103 = vpop.f32.mrb[0].mxu0
      %v3104 = vadd.f32 %v3008, %v3103
      %v3105 = vpop.f32.mrb[0].mxu0
      %3106 = vmatprep.mubr.bf16.mxu0 0
      %3107 = vmatmul.mubr.bf16.gmra.mrb[0].mxu0 %v2980
      %v3108 = vpop.f32.mrb[0].mxu0
      %v3109 = vadd.f32 %v3008, %v3108
      %v3110 = vpop.f32.mrb[0].mxu0
      %v3111 = vpop.f32.mrb[0].mxu0
      %v3112 = vadd.f32 %v3008, %v3111
      %v3113 = vpop.f32.mrb[0].mxu0
      %3114 = vmatprep.mubr.bf16.mxu0 0
      %3115 = vmatmul.mubr.bf16.gmra.mrb[0].mxu0 %v2981
      %v3116 = vpop.f32.mrb[0].mxu0
      %v3117 = vadd.f32 %v3008, %v3116
      %v3118 = vpop.f32.mrb[0].mxu0
      %v3119 = vpop.f32.mrb[0].mxu0
      %v3120 = vadd.f32 %v3008, %v3119
      %v3121 = vpop.f32.mrb[0].mxu0
      %3122 = vmatprep.mubr.bf16.mxu0 0
      %3123 = vmatmul.mubr.bf16.gmra.mrb[0].mxu0 %v2982
      %v3124 = vpop.f32.mrb[0].mxu0
      %v3125 = vadd.f32 %v3008, %v3124
      %v3126 = vpop.f32.mrb[0].mxu0
      %v3127 = vpop.f32.mrb[0].mxu0
      %v3128 = vadd.f32 %v3008, %v3127
      %v3129 = vpop.f32.mrb[0].mxu0
      %3130 = vmatprep.mubr.bf16.mxu0 0
      %3131 = vmatmul.mubr.bf16.gmra.mrb[0].mxu0 %v2983
      %v3132 = vpop.f32.mrb[0].mxu0
      %v3133 = vadd.f32 %v3008, %v3132
      %v3134 = vpop.f32.mrb[0].mxu0
      %v3135 = vpop.f32.mrb[0].mxu0
      %v3136 = vadd.f32 %v3008, %v3135
      %v3137 = vpop.f32.mrb[0].mxu0
      %3138 = vmatprep.mubr.bf16.mxu0 0
      %3139 = vmatmul.mubr.bf16.gmra.mrb[0].mxu0 %v2984
      %v3140 = vpop.f32.mrb[0].mxu0
      %v3141 = vadd.f32 %v3008, %v3140
      %v3142 = vpop.f32.mrb[0].mxu0
      %v3143 = vpop.f32.mrb[0].mxu0
      %v3144 = vadd.f32 %v3008, %v3143
      %v3145 = vpop.f32.mrb[0].mxu0
      %3146 = vmatprep.mubr.bf16.mxu0 0
      %3147 = vmatmul.mubr.bf16.gmra.mrb[0].mxu0 %v2985
      %v3148 = vpop.f32.mrb[0].mxu0
      %v3149 = vadd.f32 %v3008, %v3148
      %v3150 = vpop.f32.mrb[0].mxu0
      %v3151 = vpop.f32.mrb[0].mxu0
      %v3152 = vadd.f32 %v3008, %v3151
      %v3153 = vpop.f32.mrb[0].mxu0
      %3154 = vdwg.mxu0
      %v3155 = vmax.f32 %v3093, 0.0
      %v3156 = vmax.f32 %v3096, 0.0
      %v3157 = vmax.f32 %v3101, 0.0
      %v3158 = vmax.f32 %v3104, 0.0
      %v3159 = vmax.f32 %v3109, 0.0
      %v3160 = vmax.f32 %v3112, 0.0
      %v3161 = vmax.f32 %v3117, 0.0
      %v3162 = vmax.f32 %v3120, 0.0
      %v3163 = vmax.f32 %v3125, 0.0
      %v3164 = vmax.f32 %v3128, 0.0
      %v3165 = vmax.f32 %v3133, 0.0
      %v3166 = vmax.f32 %v3136, 0.0
      %v3167 = vmax.f32 %v3141, 0.0
      %v3168 = vmax.f32 %v3144, 0.0
      %v3169 = vmax.f32 %v3149, 0.0
      %v3170 = vmax.f32 %v3152, 0.0
      %v3171 = vpack.c.bf16 %v3156, %v3155
      %v3172 = vpack.c.bf16 %v3158, %v3157
      %v3173 = vpack.c.bf16 %v3160, %v3159
      %v3174 = vpack.c.bf16 %v3162, %v3161
      %v3175 = vpack.c.bf16 %v3164, %v3163
      %v3176 = vpack.c.bf16 %v3166, %v3165
      %v3177 = vpack.c.bf16 %v3168, %v3167
      %v3178 = vpack.c.bf16 %v3170, %v3169
      %v3179 = vld [vmem:[%s3] sm:$0xf]
      %v3180 = vld [vmem:[%s3 + $0x1c] sm:$0xf]
      %v3181 = vld [vmem:[%s3 + $0x38] sm:$0xf]
      %v3182 = vld [vmem:[%s3 + $0x54] sm:$0xf]
      %v3183 = vld [vmem:[%s3 + $0x70] sm:$0xf]
      %v3184 = vld [vmem:[%s3 + $0x8c] sm:$0xf]
      %v3185 = vld [vmem:[%s3 + $0xa8] sm:$0xf]
      %v3186 = vld [vmem:[%s3 + $0xc4] sm:$0xf]
      %v3187 = vld [vmem:[%s3 + $0xe0] sm:$0xf]
      %v3188 = vld [vmem:[%s3 + $0xfc] sm:$0xf]
      %v3189 = vld [vmem:[%s3 + $0x118] sm:$0xf]
      %v3190 = vld [vmem:[%s3 + $0x134] sm:$0xf]
      %v3191 = vld [vmem:[%s3 + $0x150] sm:$0xf]
      %v3192 = vld [vmem:[%s3 + $0x16c] sm:$0xf]
      %v3193 = vld [vmem:[%s3 + $0x188] sm:$0xf]
      %v3194 = vld [vmem:[%s3 + $0x1a4] sm:$0xf]
      %v3195 = vld [vmem:[%s5] sm:$0x1]
      %v3197 = vlaneseq
      %v3198 = vshrl.u32 %v3197, 7
      %v3199 = vsub.s32 0, %v3198
      %v3200 = vrot.slane %v3195, %v3199
      %v3218 = vunpack.c.l.b16 %v3179
      %v3219 = vunpack.c.l.b16 %v3180
      %v3220 = vunpack.c.l.b16 %v3181
      %v3221 = vunpack.c.l.b16 %v3182
      %v3222 = vunpack.c.l.b16 %v3183
      %v3223 = vunpack.c.l.b16 %v3184
      %v3224 = vunpack.c.l.b16 %v3185
      %v3225 = vunpack.c.l.b16 %v3186
      %v3226 = vunpack.c.l.b16 %v3187
      %v3227 = vunpack.c.l.b16 %v3188
      %v3228 = vunpack.c.l.b16 %v3189
      %v3229 = vunpack.c.l.b16 %v3190
      %v3230 = vunpack.c.l.b16 %v3191
      %v3231 = vunpack.c.l.b16 %v3192
      %v3232 = vunpack.c.l.b16 %v3193
      %v3233 = vunpack.c.l.b16 %v3194
      %v3234 = vpack.c.b16 %v3219, %v3218
      %v3235 = vpack.c.b16 %v3221, %v3220
      %v3236 = vpack.c.b16 %v3223, %v3222
      %v3237 = vpack.c.b16 %v3225, %v3224
      %v3238 = vpack.c.b16 %v3227, %v3226
      %v3239 = vpack.c.b16 %v3229, %v3228
      %v3240 = vpack.c.b16 %v3231, %v3230
      %v3241 = vpack.c.b16 %v3233, %v3232
      %3250 = vmatprep.subr.bf16.mxu0 0
      %3251 = vmatpush1.bf16.msra.mxu0 %v3234
      %3252 = vmatprep.subr.bf16.mxu0 0
      %3253 = vmatpush1.bf16.msra.mxu0 %v3235
      %3254 = vmatprep.subr.bf16.mxu0 0
      %3255 = vmatpush1.bf16.msra.mxu0 %v3236
      %3256 = vmatprep.subr.bf16.mxu0 0
      %3257 = vmatpush1.bf16.msra.mxu0 %v3237
      %3258 = vmatprep.subr.bf16.mxu0 0
      %3259 = vmatpush1.bf16.msra.mxu0 %v3238
      %3260 = vmatprep.subr.bf16.mxu0 0
      %3261 = vmatpush1.bf16.msra.mxu0 %v3239
      %3262 = vmatprep.subr.bf16.mxu0 0
      %3263 = vmatpush1.bf16.msra.mxu0 %v3240
      %3264 = vmatprep.subr.bf16.mxu0 0
      %3265 = vmatpush1.bf16.msra.mxu0 %v3241
      %3266 = vmatprep.subr.bf16.mxu0 0
      %3267 = vmatpush1.bf16.msra.mxu0 0
      %3268 = vmatprep.subr.bf16.mxu0 0
      %3269 = vmatpush1.bf16.msra.mxu0 0
      %3270 = vmatprep.subr.bf16.mxu0 0
      %3271 = vmatpush1.bf16.msra.mxu0 0
      %3272 = vmatprep.subr.bf16.mxu0 0
      %3273 = vmatpush1.bf16.msra.mxu0 0
      %3274 = vmatprep.subr.bf16.mxu0 0
      %3275 = vmatpush1.bf16.msra.mxu0 0
      %3276 = vmatprep.subr.bf16.mxu0 0
      %3277 = vmatpush1.bf16.msra.mxu0 0
      %3278 = vmatprep.subr.bf16.mxu0 0
      %3279 = vmatpush1.bf16.msra.mxu0 0
      %3280 = vmatprep.subr.bf16.mxu0 0
      %3281 = vmatpush1.bf16.msra.mxu0 0
      %3282 = vmatprep.mubr.bf16.mxu0 0
      %3283 = vmatmul.mubr.bf16.gmra.mrb[0].mxu0 %v3171
      %v3284 = vpop.f32.mrb[0].mxu0
      %v3285 = vadd.f32 %v3200, %v3284
      %v3286 = vpop.f32.mrb[0].mxu0
      %v3287 = vpop.f32.mrb[0].mxu0
      %v3288 = vadd.f32 %v3200, %v3287
      %v3289 = vpop.f32.mrb[0].mxu0
      %3290 = vmatprep.mubr.bf16.mxu0 0
      %3291 = vmatmul.mubr.bf16.gmra.mrb[0].mxu0 %v3172
      %v3292 = vpop.f32.mrb[0].mxu0
      %v3293 = vadd.f32 %v3200, %v3292
      %v3294 = vpop.f32.mrb[0].mxu0
      %v3295 = vpop.f32.mrb[0].mxu0
      %v3296 = vadd.f32 %v3200, %v3295
      %v3297 = vpop.f32.mrb[0].mxu0
      %3298 = vmatprep.mubr.bf16.mxu0 0
      %3299 = vmatmul.mubr.bf16.gmra.mrb[0].mxu0 %v3173
      %v3300 = vpop.f32.mrb[0].mxu0
      %v3301 = vadd.f32 %v3200, %v3300
      %v3302 = vpop.f32.mrb[0].mxu0
      %v3303 = vpop.f32.mrb[0].mxu0
      %v3304 = vadd.f32 %v3200, %v3303
      %v3305 = vpop.f32.mrb[0].mxu0
      %3306 = vmatprep.mubr.bf16.mxu0 0
      %3307 = vmatmul.mubr.bf16.gmra.mrb[0].mxu0 %v3174
      %v3308 = vpop.f32.mrb[0].mxu0
      %v3309 = vadd.f32 %v3200, %v3308
      %v3310 = vpop.f32.mrb[0].mxu0
      %v3311 = vpop.f32.mrb[0].mxu0
      %v3312 = vadd.f32 %v3200, %v3311
      %v3313 = vpop.f32.mrb[0].mxu0
      %3314 = vmatprep.mubr.bf16.mxu0 0
      %3315 = vmatmul.mubr.bf16.gmra.mrb[0].mxu0 %v3175
      %v3316 = vpop.f32.mrb[0].mxu0
      %v3317 = vadd.f32 %v3200, %v3316
      %v3318 = vpop.f32.mrb[0].mxu0
      %v3319 = vpop.f32.mrb[0].mxu0
      %v3320 = vadd.f32 %v3200, %v3319
      %v3321 = vpop.f32.mrb[0].mxu0
      %3322 = vmatprep.mubr.bf16.mxu0 0
      %3323 = vmatmul.mubr.bf16.gmra.mrb[0].mxu0 %v3176
      %v3324 = vpop.f32.mrb[0].mxu0
      %v3325 = vadd.f32 %v3200, %v3324
      %v3326 = vpop.f32.mrb[0].mxu0
      %v3327 = vpop.f32.mrb[0].mxu0
      %v3328 = vadd.f32 %v3200, %v3327
      %v3329 = vpop.f32.mrb[0].mxu0
      %3330 = vmatprep.mubr.bf16.mxu0 0
      %3331 = vmatmul.mubr.bf16.gmra.mrb[0].mxu0 %v3177
      %v3332 = vpop.f32.mrb[0].mxu0
      %v3333 = vadd.f32 %v3200, %v3332
      %v3334 = vpop.f32.mrb[0].mxu0
      %v3335 = vpop.f32.mrb[0].mxu0
      %v3336 = vadd.f32 %v3200, %v3335
      %v3337 = vpop.f32.mrb[0].mxu0
      %3338 = vmatprep.mubr.bf16.mxu0 0
      %3339 = vmatmul.mubr.bf16.gmra.mrb[0].mxu0 %v3178
      %v3340 = vpop.f32.mrb[0].mxu0
      %v3341 = vadd.f32 %v3200, %v3340
      %v3342 = vpop.f32.mrb[0].mxu0
      %v3343 = vpop.f32.mrb[0].mxu0
      %v3344 = vadd.f32 %v3200, %v3343
      %v3345 = vpop.f32.mrb[0].mxu0
      %3346 = vdwg.mxu0
      %v3347 = vmul.f32 %v3285, 0.5
      %v3348 = vmul.f32 %v3288, 0.5
      %v3349 = vmul.f32 %v3293, 0.5
      %v3350 = vmul.f32 %v3296, 0.5
      %v3351 = vmul.f32 %v3301, 0.5
      %v3352 = vmul.f32 %v3304, 0.5
      %v3353 = vmul.f32 %v3309, 0.5
      %v3354 = vmul.f32 %v3312, 0.5
      %v3355 = vmul.f32 %v3317, 0.5
      %v3356 = vmul.f32 %v3320, 0.5
      %v3357 = vmul.f32 %v3325, 0.5
      %v3358 = vmul.f32 %v3328, 0.5
      %v3359 = vmul.f32 %v3333, 0.5
      %v3360 = vmul.f32 %v3336, 0.5
      %v3361 = vmul.f32 %v3341, 0.5
      %v3362 = vmul.f32 %v3344, 0.5
      %v3363 = vtanh.pop %v3347
      %v3364 = vtanh.pop %v3348
      %v3365 = vtanh.pop %v3349
      %v3366 = vtanh.pop %v3350
      %v3367 = vtanh.pop %v3351
      %v3368 = vtanh.pop %v3352
      %v3369 = vtanh.pop %v3353
      %v3370 = vtanh.pop %v3354
      %v3371 = vtanh.pop %v3355
      %v3372 = vtanh.pop %v3356
      %v3373 = vtanh.pop %v3357
      %v3374 = vtanh.pop %v3358
      %v3375 = vtanh.pop %v3359
      %v3376 = vtanh.pop %v3360
      %v3377 = vtanh.pop %v3361
      %v3378 = vtanh.pop %v3362
      %v3379 = vmul.f32 %v3363, 0.5
      %v3380 = vmul.f32 %v3364, 0.5
      %v3381 = vmul.f32 %v3365, 0.5
      %v3382 = vmul.f32 %v3366, 0.5
      %v3383 = vmul.f32 %v3367, 0.5
      %v3384 = vmul.f32 %v3368, 0.5
      %v3385 = vmul.f32 %v3369, 0.5
      %v3386 = vmul.f32 %v3370, 0.5
      %v3387 = vmul.f32 %v3371, 0.5
      %v3388 = vmul.f32 %v3372, 0.5
      %v3389 = vmul.f32 %v3373, 0.5
      %v3390 = vmul.f32 %v3374, 0.5
      %v3391 = vmul.f32 %v3375, 0.5
      %v3392 = vmul.f32 %v3376, 0.5
      %v3393 = vmul.f32 %v3377, 0.5
      %v3394 = vmul.f32 %v3378, 0.5
      %v3395 = vadd.f32 %v3379, 0.5
      %v3396 = vadd.f32 %v3380, 0.5
      %v3397 = vadd.f32 %v3381, 0.5
      %v3398 = vadd.f32 %v3382, 0.5
      %v3399 = vadd.f32 %v3383, 0.5
      %v3400 = vadd.f32 %v3384, 0.5
      %v3401 = vadd.f32 %v3385, 0.5
      %v3402 = vadd.f32 %v3386, 0.5
      %v3403 = vadd.f32 %v3387, 0.5
      %v3404 = vadd.f32 %v3388, 0.5
      %v3405 = vadd.f32 %v3389, 0.5
      %v3406 = vadd.f32 %v3390, 0.5
      %v3407 = vadd.f32 %v3391, 0.5
      %v3408 = vadd.f32 %v3392, 0.5
      %v3409 = vadd.f32 %v3393, 0.5
      %v3410 = vadd.f32 %v3394, 0.5
      %3411 = vst [vmem:[%s258] sm:$0xff] %v3395
      %3412 = vst [vmem:[%s258 + $0x38] sm:$0xff] %v3396
      %3413 = vst [vmem:[%s258 + $0x70] sm:$0xff] %v3397
      %3414 = vst [vmem:[%s258 + $0xa8] sm:$0xff] %v3398
      %3415 = vst [vmem:[%s258 + $0xe0] sm:$0xff] %v3399
      %3416 = vst [vmem:[%s258 + $0x118] sm:$0xff] %v3400
      %3417 = vst [vmem:[%s258 + $0x150] sm:$0xff] %v3401
      %3418 = vst [vmem:[%s258 + $0x188] sm:$0xff] %v3402
      %3419 = vst [vmem:[%s258 + $0x1c0] sm:$0xff] %v3403
      %3420 = vst [vmem:[%s258 + $0x1f8] sm:$0xff] %v3404
      %3421 = vst [vmem:[%s258 + $0x230] sm:$0xff] %v3405
      %3422 = vst [vmem:[%s258 + $0x268] sm:$0xff] %v3406
      %3423 = vst [vmem:[%s258 + $0x2a0] sm:$0xff] %v3407
      %3424 = vst [vmem:[%s258 + $0x2d8] sm:$0xff] %v3408
      %3425 = vst [vmem:[%s258 + $0x310] sm:$0xff] %v3409
      %3426 = vst [vmem:[%s258 + $0x348] sm:$0xff] %v3410
      %v3427 = vld [vmem:[%s3 + $0x4] sm:$0xf]
      %v3428 = vld [vmem:[%s3 + $0x20] sm:$0xf]
      %v3429 = vld [vmem:[%s3 + $0x3c] sm:$0xf]
      %v3430 = vld [vmem:[%s3 + $0x58] sm:$0xf]
      %v3431 = vld [vmem:[%s3 + $0x74] sm:$0xf]
      %v3432 = vld [vmem:[%s3 + $0x90] sm:$0xf]
      %v3433 = vld [vmem:[%s3 + $0xac] sm:$0xf]
      %v3434 = vld [vmem:[%s3 + $0xc8] sm:$0xf]
      %v3435 = vld [vmem:[%s3 + $0xe4] sm:$0xf]
      %v3436 = vld [vmem:[%s3 + $0x100] sm:$0xf]
      %v3437 = vld [vmem:[%s3 + $0x11c] sm:$0xf]
      %v3438 = vld [vmem:[%s3 + $0x138] sm:$0xf]
      %v3439 = vld [vmem:[%s3 + $0x154] sm:$0xf]
      %v3440 = vld [vmem:[%s3 + $0x170] sm:$0xf]
      %v3441 = vld [vmem:[%s3 + $0x18c] sm:$0xf]
      %v3442 = vld [vmem:[%s3 + $0x1a8] sm:$0xf]
      %v3443 = vld [vmem:[%s5 + $0x1] sm:$0x1]
      %v3445 = vlaneseq
      %v3446 = vshrl.u32 %v3445, 7
      %v3447 = vsub.s32 0, %v3446
      %v3448 = vrot.slane %v3443, %v3447
      %v3466 = vunpack.c.l.b16 %v3427
      %v3467 = vunpack.c.l.b16 %v3428
      %v3468 = vunpack.c.l.b16 %v3429
      %v3469 = vunpack.c.l.b16 %v3430
      %v3470 = vunpack.c.l.b16 %v3431
      %v3471 = vunpack.c.l.b16 %v3432
      %v3472 = vunpack.c.l.b16 %v3433
      %v3473 = vunpack.c.l.b16 %v3434
      %v3474 = vunpack.c.l.b16 %v3435
      %v3475 = vunpack.c.l.b16 %v3436
      %v3476 = vunpack.c.l.b16 %v3437
      %v3477 = vunpack.c.l.b16 %v3438
      %v3478 = vunpack.c.l.b16 %v3439
      %v3479 = vunpack.c.l.b16 %v3440
      %v3480 = vunpack.c.l.b16 %v3441
      %v3481 = vunpack.c.l.b16 %v3442
      %v3482 = vpack.c.b16 %v3467, %v3466
      %v3483 = vpack.c.b16 %v3469, %v3468
      %v3484 = vpack.c.b16 %v3471, %v3470
      %v3485 = vpack.c.b16 %v3473, %v3472
      %v3486 = vpack.c.b16 %v3475, %v3474
      %v3487 = vpack.c.b16 %v3477, %v3476
      %v3488 = vpack.c.b16 %v3479, %v3478
      %v3489 = vpack.c.b16 %v3481, %v3480
      %3498 = vmatprep.subr.bf16.mxu0 0
      %3499 = vmatpush1.bf16.msra.mxu0 %v3482
      %3500 = vmatprep.subr.bf16.mxu0 0
      %3501 = vmatpush1.bf16.msra.mxu0 %v3483
      %3502 = vmatprep.subr.bf16.mxu0 0
      %3503 = vmatpush1.bf16.msra.mxu0 %v3484
      %3504 = vmatprep.subr.bf16.mxu0 0
      %3505 = vmatpush1.bf16.msra.mxu0 %v3485
      %3506 = vmatprep.subr.bf16.mxu0 0
      %3507 = vmatpush1.bf16.msra.mxu0 %v3486
      %3508 = vmatprep.subr.bf16.mxu0 0
      %3509 = vmatpush1.bf16.msra.mxu0 %v3487
      %3510 = vmatprep.subr.bf16.mxu0 0
      %3511 = vmatpush1.bf16.msra.mxu0 %v3488
      %3512 = vmatprep.subr.bf16.mxu0 0
      %3513 = vmatpush1.bf16.msra.mxu0 %v3489
      %3514 = vmatprep.subr.bf16.mxu0 0
      %3515 = vmatpush1.bf16.msra.mxu0 0
      %3516 = vmatprep.subr.bf16.mxu0 0
      %3517 = vmatpush1.bf16.msra.mxu0 0
      %3518 = vmatprep.subr.bf16.mxu0 0
      %3519 = vmatpush1.bf16.msra.mxu0 0
      %3520 = vmatprep.subr.bf16.mxu0 0
      %3521 = vmatpush1.bf16.msra.mxu0 0
      %3522 = vmatprep.subr.bf16.mxu0 0
      %3523 = vmatpush1.bf16.msra.mxu0 0
      %3524 = vmatprep.subr.bf16.mxu0 0
      %3525 = vmatpush1.bf16.msra.mxu0 0
      %3526 = vmatprep.subr.bf16.mxu0 0
      %3527 = vmatpush1.bf16.msra.mxu0 0
      %3528 = vmatprep.subr.bf16.mxu0 0
      %3529 = vmatpush1.bf16.msra.mxu0 0
      %3530 = vmatprep.mubr.bf16.mxu0 0
      %3531 = vmatmul.mubr.bf16.gmra.mrb[0].mxu0 %v3171
      %v3532 = vpop.f32.mrb[0].mxu0
      %v3533 = vadd.f32 %v3448, %v3532
      %v3534 = vpop.f32.mrb[0].mxu0
      %v3535 = vpop.f32.mrb[0].mxu0
      %v3536 = vadd.f32 %v3448, %v3535
      %v3537 = vpop.f32.mrb[0].mxu0
      %3538 = vmatprep.mubr.bf16.mxu0 0
      %3539 = vmatmul.mubr.bf16.gmra.mrb[0].mxu0 %v3172
      %v3540 = vpop.f32.mrb[0].mxu0
      %v3541 = vadd.f32 %v3448, %v3540
      %v3542 = vpop.f32.mrb[0].mxu0
      %v3543 = vpop.f32.mrb[0].mxu0
      %v3544 = vadd.f32 %v3448, %v3543
      %v3545 = vpop.f32.mrb[0].mxu0
      %3546 = vmatprep.mubr.bf16.mxu0 0
      %3547 = vmatmul.mubr.bf16.gmra.mrb[0].mxu0 %v3173
      %v3548 = vpop.f32.mrb[0].mxu0
      %v3549 = vadd.f32 %v3448, %v3548
      %v3550 = vpop.f32.mrb[0].mxu0
      %v3551 = vpop.f32.mrb[0].mxu0
      %v3552 = vadd.f32 %v3448, %v3551
      %v3553 = vpop.f32.mrb[0].mxu0
      %3554 = vmatprep.mubr.bf16.mxu0 0
      %3555 = vmatmul.mubr.bf16.gmra.mrb[0].mxu0 %v3174
      %v3556 = vpop.f32.mrb[0].mxu0
      %v3557 = vadd.f32 %v3448, %v3556
      %v3558 = vpop.f32.mrb[0].mxu0
      %v3559 = vpop.f32.mrb[0].mxu0
      %v3560 = vadd.f32 %v3448, %v3559
      %v3561 = vpop.f32.mrb[0].mxu0
      %3562 = vmatprep.mubr.bf16.mxu0 0
      %3563 = vmatmul.mubr.bf16.gmra.mrb[0].mxu0 %v3175
      %v3564 = vpop.f32.mrb[0].mxu0
      %v3565 = vadd.f32 %v3448, %v3564
      %v3566 = vpop.f32.mrb[0].mxu0
      %v3567 = vpop.f32.mrb[0].mxu0
      %v3568 = vadd.f32 %v3448, %v3567
      %v3569 = vpop.f32.mrb[0].mxu0
      %3570 = vmatprep.mubr.bf16.mxu0 0
      %3571 = vmatmul.mubr.bf16.gmra.mrb[0].mxu0 %v3176
      %v3572 = vpop.f32.mrb[0].mxu0
      %v3573 = vadd.f32 %v3448, %v3572
      %v3574 = vpop.f32.mrb[0].mxu0
      %v3575 = vpop.f32.mrb[0].mxu0
      %v3576 = vadd.f32 %v3448, %v3575
      %v3577 = vpop.f32.mrb[0].mxu0
      %3578 = vmatprep.mubr.bf16.mxu0 0
      %3579 = vmatmul.mubr.bf16.gmra.mrb[0].mxu0 %v3177
      %v3580 = vpop.f32.mrb[0].mxu0
      %v3581 = vadd.f32 %v3448, %v3580
      %v3582 = vpop.f32.mrb[0].mxu0
      %v3583 = vpop.f32.mrb[0].mxu0
      %v3584 = vadd.f32 %v3448, %v3583
      %v3585 = vpop.f32.mrb[0].mxu0
      %3586 = vmatprep.mubr.bf16.mxu0 0
      %3587 = vmatmul.mubr.bf16.gmra.mrb[0].mxu0 %v3178
      %v3588 = vpop.f32.mrb[0].mxu0
      %v3589 = vadd.f32 %v3448, %v3588
      %v3590 = vpop.f32.mrb[0].mxu0
      %v3591 = vpop.f32.mrb[0].mxu0
      %v3592 = vadd.f32 %v3448, %v3591
      %v3593 = vpop.f32.mrb[0].mxu0
      %3594 = vdwg.mxu0
      %v3595 = vmul.f32 %v3533, 0.5
      %v3596 = vmul.f32 %v3536, 0.5
      %v3597 = vmul.f32 %v3541, 0.5
      %v3598 = vmul.f32 %v3544, 0.5
      %v3599 = vmul.f32 %v3549, 0.5
      %v3600 = vmul.f32 %v3552, 0.5
      %v3601 = vmul.f32 %v3557, 0.5
      %v3602 = vmul.f32 %v3560, 0.5
      %v3603 = vmul.f32 %v3565, 0.5
      %v3604 = vmul.f32 %v3568, 0.5
      %v3605 = vmul.f32 %v3573, 0.5
      %v3606 = vmul.f32 %v3576, 0.5
      %v3607 = vmul.f32 %v3581, 0.5
      %v3608 = vmul.f32 %v3584, 0.5
      %v3609 = vmul.f32 %v3589, 0.5
      %v3610 = vmul.f32 %v3592, 0.5
      %v3611 = vtanh.pop %v3595
      %v3612 = vtanh.pop %v3596
      %v3613 = vtanh.pop %v3597
      %v3614 = vtanh.pop %v3598
      %v3615 = vtanh.pop %v3599
      %v3616 = vtanh.pop %v3600
      %v3617 = vtanh.pop %v3601
      %v3618 = vtanh.pop %v3602
      %v3619 = vtanh.pop %v3603
      %v3620 = vtanh.pop %v3604
      %v3621 = vtanh.pop %v3605
      %v3622 = vtanh.pop %v3606
      %v3623 = vtanh.pop %v3607
      %v3624 = vtanh.pop %v3608
      %v3625 = vtanh.pop %v3609
      %v3626 = vtanh.pop %v3610
      %v3627 = vmul.f32 %v3611, 0.5
      %v3628 = vmul.f32 %v3612, 0.5
      %v3629 = vmul.f32 %v3613, 0.5
      %v3630 = vmul.f32 %v3614, 0.5
      %v3631 = vmul.f32 %v3615, 0.5
      %v3632 = vmul.f32 %v3616, 0.5
      %v3633 = vmul.f32 %v3617, 0.5
      %v3634 = vmul.f32 %v3618, 0.5
      %v3635 = vmul.f32 %v3619, 0.5
      %v3636 = vmul.f32 %v3620, 0.5
      %v3637 = vmul.f32 %v3621, 0.5
      %v3638 = vmul.f32 %v3622, 0.5
      %v3639 = vmul.f32 %v3623, 0.5
      %v3640 = vmul.f32 %v3624, 0.5
      %v3641 = vmul.f32 %v3625, 0.5
      %v3642 = vmul.f32 %v3626, 0.5
      %v3643 = vadd.f32 %v3627, 0.5
      %v3644 = vadd.f32 %v3628, 0.5
      %v3645 = vadd.f32 %v3629, 0.5
      %v3646 = vadd.f32 %v3630, 0.5
      %v3647 = vadd.f32 %v3631, 0.5
      %v3648 = vadd.f32 %v3632, 0.5
      %v3649 = vadd.f32 %v3633, 0.5
      %v3650 = vadd.f32 %v3634, 0.5
      %v3651 = vadd.f32 %v3635, 0.5
      %v3652 = vadd.f32 %v3636, 0.5
      %v3653 = vadd.f32 %v3637, 0.5
      %v3654 = vadd.f32 %v3638, 0.5
      %v3655 = vadd.f32 %v3639, 0.5
      %v3656 = vadd.f32 %v3640, 0.5
      %v3657 = vadd.f32 %v3641, 0.5
      %v3658 = vadd.f32 %v3642, 0.5
      %3659 = vst [vmem:[%s258 + $0x8] sm:$0xff] %v3643
      %3660 = vst [vmem:[%s258 + $0x40] sm:$0xff] %v3644
      %3661 = vst [vmem:[%s258 + $0x78] sm:$0xff] %v3645
      %3662 = vst [vmem:[%s258 + $0xb0] sm:$0xff] %v3646
      %3663 = vst [vmem:[%s258 + $0xe8] sm:$0xff] %v3647
      %3664 = vst [vmem:[%s258 + $0x120] sm:$0xff] %v3648
      %3665 = vst [vmem:[%s258 + $0x158] sm:$0xff] %v3649
      %3666 = vst [vmem:[%s258 + $0x190] sm:$0xff] %v3650
      %3667 = vst [vmem:[%s258 + $0x1c8] sm:$0xff] %v3651
      %3668 = vst [vmem:[%s258 + $0x200] sm:$0xff] %v3652
      %3669 = vst [vmem:[%s258 + $0x238] sm:$0xff] %v3653
      %3670 = vst [vmem:[%s258 + $0x270] sm:$0xff] %v3654
      %3671 = vst [vmem:[%s258 + $0x2a8] sm:$0xff] %v3655
      %3672 = vst [vmem:[%s258 + $0x2e0] sm:$0xff] %v3656
      %3673 = vst [vmem:[%s258 + $0x318] sm:$0xff] %v3657
      %3674 = vst [vmem:[%s258 + $0x350] sm:$0xff] %v3658
      %v3675 = vld [vmem:[%s3 + $0x8] sm:$0xf]
      %v3676 = vld [vmem:[%s3 + $0x24] sm:$0xf]
      %v3677 = vld [vmem:[%s3 + $0x40] sm:$0xf]
      %v3678 = vld [vmem:[%s3 + $0x5c] sm:$0xf]
      %v3679 = vld [vmem:[%s3 + $0x78] sm:$0xf]
      %v3680 = vld [vmem:[%s3 + $0x94] sm:$0xf]
      %v3681 = vld [vmem:[%s3 + $0xb0] sm:$0xf]
      %v3682 = vld [vmem:[%s3 + $0xcc] sm:$0xf]
      %v3683 = vld [vmem:[%s3 + $0xe8] sm:$0xf]
      %v3684 = vld [vmem:[%s3 + $0x104] sm:$0xf]
      %v3685 = vld [vmem:[%s3 + $0x120] sm:$0xf]
      %v3686 = vld [vmem:[%s3 + $0x13c] sm:$0xf]
      %v3687 = vld [vmem:[%s3 + $0x158] sm:$0xf]
      %v3688 = vld [vmem:[%s3 + $0x174] sm:$0xf]
      %v3689 = vld [vmem:[%s3 + $0x190] sm:$0xf]
      %v3690 = vld [vmem:[%s3 + $0x1ac] sm:$0xf]
      %v3691 = vld [vmem:[%s5 + $0x2] sm:$0x1]
      %v3693 = vlaneseq
      %v3694 = vshrl.u32 %v3693, 7
      %v3695 = vsub.s32 0, %v3694
      %v3696 = vrot.slane %v3691, %v3695
      %v3714 = vunpack.c.l.b16 %v3675
      %v3715 = vunpack.c.l.b16 %v3676
      %v3716 = vunpack.c.l.b16 %v3677
      %v3717 = vunpack.c.l.b16 %v3678
      %v3718 = vunpack.c.l.b16 %v3679
      %v3719 = vunpack.c.l.b16 %v3680
      %v3720 = vunpack.c.l.b16 %v3681
      %v3721 = vunpack.c.l.b16 %v3682
      %v3722 = vunpack.c.l.b16 %v3683
      %v3723 = vunpack.c.l.b16 %v3684
      %v3724 = vunpack.c.l.b16 %v3685
      %v3725 = vunpack.c.l.b16 %v3686
      %v3726 = vunpack.c.l.b16 %v3687
      %v3727 = vunpack.c.l.b16 %v3688
      %v3728 = vunpack.c.l.b16 %v3689
      %v3729 = vunpack.c.l.b16 %v3690
      %v3730 = vpack.c.b16 %v3715, %v3714
      %v3731 = vpack.c.b16 %v3717, %v3716
      %v3732 = vpack.c.b16 %v3719, %v3718
      %v3733 = vpack.c.b16 %v3721, %v3720
      %v3734 = vpack.c.b16 %v3723, %v3722
      %v3735 = vpack.c.b16 %v3725, %v3724
      %v3736 = vpack.c.b16 %v3727, %v3726
      %v3737 = vpack.c.b16 %v3729, %v3728
      %3746 = vmatprep.subr.bf16.mxu0 0
      %3747 = vmatpush1.bf16.msra.mxu0 %v3730
      %3748 = vmatprep.subr.bf16.mxu0 0
      %3749 = vmatpush1.bf16.msra.mxu0 %v3731
      %3750 = vmatprep.subr.bf16.mxu0 0
      %3751 = vmatpush1.bf16.msra.mxu0 %v3732
      %3752 = vmatprep.subr.bf16.mxu0 0
      %3753 = vmatpush1.bf16.msra.mxu0 %v3733
      %3754 = vmatprep.subr.bf16.mxu0 0
      %3755 = vmatpush1.bf16.msra.mxu0 %v3734
      %3756 = vmatprep.subr.bf16.mxu0 0
      %3757 = vmatpush1.bf16.msra.mxu0 %v3735
      %3758 = vmatprep.subr.bf16.mxu0 0
      %3759 = vmatpush1.bf16.msra.mxu0 %v3736
      %3760 = vmatprep.subr.bf16.mxu0 0
      %3761 = vmatpush1.bf16.msra.mxu0 %v3737
      %3762 = vmatprep.subr.bf16.mxu0 0
      %3763 = vmatpush1.bf16.msra.mxu0 0
      %3764 = vmatprep.subr.bf16.mxu0 0
      %3765 = vmatpush1.bf16.msra.mxu0 0
      %3766 = vmatprep.subr.bf16.mxu0 0
      %3767 = vmatpush1.bf16.msra.mxu0 0
      %3768 = vmatprep.subr.bf16.mxu0 0
      %3769 = vmatpush1.bf16.msra.mxu0 0
      %3770 = vmatprep.subr.bf16.mxu0 0
      %3771 = vmatpush1.bf16.msra.mxu0 0
      %3772 = vmatprep.subr.bf16.mxu0 0
      %3773 = vmatpush1.bf16.msra.mxu0 0
      %3774 = vmatprep.subr.bf16.mxu0 0
      %3775 = vmatpush1.bf16.msra.mxu0 0
      %3776 = vmatprep.subr.bf16.mxu0 0
      %3777 = vmatpush1.bf16.msra.mxu0 0
      %3778 = vmatprep.mubr.bf16.mxu0 0
      %3779 = vmatmul.mubr.bf16.gmra.mrb[0].mxu0 %v3171
      %v3780 = vpop.f32.mrb[0].mxu0
      %v3781 = vadd.f32 %v3696, %v3780
      %v3782 = vpop.f32.mrb[0].mxu0
      %v3783 = vpop.f32.mrb[0].mxu0
      %v3784 = vadd.f32 %v3696, %v3783
      %v3785 = vpop.f32.mrb[0].mxu0
      %3786 = vmatprep.mubr.bf16.mxu0 0
      %3787 = vmatmul.mubr.bf16.gmra.mrb[0].mxu0 %v3172
      %v3788 = vpop.f32.mrb[0].mxu0
      %v3789 = vadd.f32 %v3696, %v3788
      %v3790 = vpop.f32.mrb[0].mxu0
      %v3791 = vpop.f32.mrb[0].mxu0
      %v3792 = vadd.f32 %v3696, %v3791
      %v3793 = vpop.f32.mrb[0].mxu0
      %3794 = vmatprep.mubr.bf16.mxu0 0
      %3795 = vmatmul.mubr.bf16.gmra.mrb[0].mxu0 %v3173
      %v3796 = vpop.f32.mrb[0].mxu0
      %v3797 = vadd.f32 %v3696, %v3796
      %v3798 = vpop.f32.mrb[0].mxu0
      %v3799 = vpop.f32.mrb[0].mxu0
      %v3800 = vadd.f32 %v3696, %v3799
      %v3801 = vpop.f32.mrb[0].mxu0
      %3802 = vmatprep.mubr.bf16.mxu0 0
      %3803 = vmatmul.mubr.bf16.gmra.mrb[0].mxu0 %v3174
      %v3804 = vpop.f32.mrb[0].mxu0
      %v3805 = vadd.f32 %v3696, %v3804
      %v3806 = vpop.f32.mrb[0].mxu0
      %v3807 = vpop.f32.mrb[0].mxu0
      %v3808 = vadd.f32 %v3696, %v3807
      %v3809 = vpop.f32.mrb[0].mxu0
      %3810 = vmatprep.mubr.bf16.mxu0 0
      %3811 = vmatmul.mubr.bf16.gmra.mrb[0].mxu0 %v3175
      %v3812 = vpop.f32.mrb[0].mxu0
      %v3813 = vadd.f32 %v3696, %v3812
      %v3814 = vpop.f32.mrb[0].mxu0
      %v3815 = vpop.f32.mrb[0].mxu0
      %v3816 = vadd.f32 %v3696, %v3815
      %v3817 = vpop.f32.mrb[0].mxu0
      %3818 = vmatprep.mubr.bf16.mxu0 0
      %3819 = vmatmul.mubr.bf16.gmra.mrb[0].mxu0 %v3176
      %v3820 = vpop.f32.mrb[0].mxu0
      %v3821 = vadd.f32 %v3696, %v3820
      %v3822 = vpop.f32.mrb[0].mxu0
      %v3823 = vpop.f32.mrb[0].mxu0
      %v3824 = vadd.f32 %v3696, %v3823
      %v3825 = vpop.f32.mrb[0].mxu0
      %3826 = vmatprep.mubr.bf16.mxu0 0
      %3827 = vmatmul.mubr.bf16.gmra.mrb[0].mxu0 %v3177
      %v3828 = vpop.f32.mrb[0].mxu0
      %v3829 = vadd.f32 %v3696, %v3828
      %v3830 = vpop.f32.mrb[0].mxu0
      %v3831 = vpop.f32.mrb[0].mxu0
      %v3832 = vadd.f32 %v3696, %v3831
      %v3833 = vpop.f32.mrb[0].mxu0
      %3834 = vmatprep.mubr.bf16.mxu0 0
      %3835 = vmatmul.mubr.bf16.gmra.mrb[0].mxu0 %v3178
      %v3836 = vpop.f32.mrb[0].mxu0
      %v3837 = vadd.f32 %v3696, %v3836
      %v3838 = vpop.f32.mrb[0].mxu0
      %v3839 = vpop.f32.mrb[0].mxu0
      %v3840 = vadd.f32 %v3696, %v3839
      %v3841 = vpop.f32.mrb[0].mxu0
      %3842 = vdwg.mxu0
      %v3843 = vmul.f32 %v3781, 0.5
      %v3844 = vmul.f32 %v3784, 0.5
      %v3845 = vmul.f32 %v3789, 0.5
      %v3846 = vmul.f32 %v3792, 0.5
      %v3847 = vmul.f32 %v3797, 0.5
      %v3848 = vmul.f32 %v3800, 0.5
      %v3849 = vmul.f32 %v3805, 0.5
      %v3850 = vmul.f32 %v3808, 0.5
      %v3851 = vmul.f32 %v3813, 0.5
      %v3852 = vmul.f32 %v3816, 0.5
      %v3853 = vmul.f32 %v3821, 0.5
      %v3854 = vmul.f32 %v3824, 0.5
      %v3855 = vmul.f32 %v3829, 0.5
      %v3856 = vmul.f32 %v3832, 0.5
      %v3857 = vmul.f32 %v3837, 0.5
      %v3858 = vmul.f32 %v3840, 0.5
      %v3859 = vtanh.pop %v3843
      %v3860 = vtanh.pop %v3844
      %v3861 = vtanh.pop %v3845
      %v3862 = vtanh.pop %v3846
      %v3863 = vtanh.pop %v3847
      %v3864 = vtanh.pop %v3848
      %v3865 = vtanh.pop %v3849
      %v3866 = vtanh.pop %v3850
      %v3867 = vtanh.pop %v3851
      %v3868 = vtanh.pop %v3852
      %v3869 = vtanh.pop %v3853
      %v3870 = vtanh.pop %v3854
      %v3871 = vtanh.pop %v3855
      %v3872 = vtanh.pop %v3856
      %v3873 = vtanh.pop %v3857
      %v3874 = vtanh.pop %v3858
      %v3875 = vmul.f32 %v3859, 0.5
      %v3876 = vmul.f32 %v3860, 0.5
      %v3877 = vmul.f32 %v3861, 0.5
      %v3878 = vmul.f32 %v3862, 0.5
      %v3879 = vmul.f32 %v3863, 0.5
      %v3880 = vmul.f32 %v3864, 0.5
      %v3881 = vmul.f32 %v3865, 0.5
      %v3882 = vmul.f32 %v3866, 0.5
      %v3883 = vmul.f32 %v3867, 0.5
      %v3884 = vmul.f32 %v3868, 0.5
      %v3885 = vmul.f32 %v3869, 0.5
      %v3886 = vmul.f32 %v3870, 0.5
      %v3887 = vmul.f32 %v3871, 0.5
      %v3888 = vmul.f32 %v3872, 0.5
      %v3889 = vmul.f32 %v3873, 0.5
      %v3890 = vmul.f32 %v3874, 0.5
      %v3891 = vadd.f32 %v3875, 0.5
      %v3892 = vadd.f32 %v3876, 0.5
      %v3893 = vadd.f32 %v3877, 0.5
      %v3894 = vadd.f32 %v3878, 0.5
      %v3895 = vadd.f32 %v3879, 0.5
      %v3896 = vadd.f32 %v3880, 0.5
      %v3897 = vadd.f32 %v3881, 0.5
      %v3898 = vadd.f32 %v3882, 0.5
      %v3899 = vadd.f32 %v3883, 0.5
      %v3900 = vadd.f32 %v3884, 0.5
      %v3901 = vadd.f32 %v3885, 0.5
      %v3902 = vadd.f32 %v3886, 0.5
      %v3903 = vadd.f32 %v3887, 0.5
      %v3904 = vadd.f32 %v3888, 0.5
      %v3905 = vadd.f32 %v3889, 0.5
      %v3906 = vadd.f32 %v3890, 0.5
      %3907 = vst [vmem:[%s258 + $0x10] sm:$0xff] %v3891
      %3908 = vst [vmem:[%s258 + $0x48] sm:$0xff] %v3892
      %3909 = vst [vmem:[%s258 + $0x80] sm:$0xff] %v3893
      %3910 = vst [vmem:[%s258 + $0xb8] sm:$0xff] %v3894
      %3911 = vst [vmem:[%s258 + $0xf0] sm:$0xff] %v3895
      %3912 = vst [vmem:[%s258 + $0x128] sm:$0xff] %v3896
      %3913 = vst [vmem:[%s258 + $0x160] sm:$0xff] %v3897
      %3914 = vst [vmem:[%s258 + $0x198] sm:$0xff] %v3898
      %3915 = vst [vmem:[%s258 + $0x1d0] sm:$0xff] %v3899
      %3916 = vst [vmem:[%s258 + $0x208] sm:$0xff] %v3900
      %3917 = vst [vmem:[%s258 + $0x240] sm:$0xff] %v3901
      %3918 = vst [vmem:[%s258 + $0x278] sm:$0xff] %v3902
      %3919 = vst [vmem:[%s258 + $0x2b0] sm:$0xff] %v3903
      %3920 = vst [vmem:[%s258 + $0x2e8] sm:$0xff] %v3904
      %3921 = vst [vmem:[%s258 + $0x320] sm:$0xff] %v3905
      %3922 = vst [vmem:[%s258 + $0x358] sm:$0xff] %v3906
      %v3923 = vld [vmem:[%s3 + $0xc] sm:$0xf]
      %v3924 = vld [vmem:[%s3 + $0x28] sm:$0xf]
      %v3925 = vld [vmem:[%s3 + $0x44] sm:$0xf]
      %v3926 = vld [vmem:[%s3 + $0x60] sm:$0xf]
      %v3927 = vld [vmem:[%s3 + $0x7c] sm:$0xf]
      %v3928 = vld [vmem:[%s3 + $0x98] sm:$0xf]
      %v3929 = vld [vmem:[%s3 + $0xb4] sm:$0xf]
      %v3930 = vld [vmem:[%s3 + $0xd0] sm:$0xf]
      %v3931 = vld [vmem:[%s3 + $0xec] sm:$0xf]
      %v3932 = vld [vmem:[%s3 + $0x108] sm:$0xf]
      %v3933 = vld [vmem:[%s3 + $0x124] sm:$0xf]
      %v3934 = vld [vmem:[%s3 + $0x140] sm:$0xf]
      %v3935 = vld [vmem:[%s3 + $0x15c] sm:$0xf]
      %v3936 = vld [vmem:[%s3 + $0x178] sm:$0xf]
      %v3937 = vld [vmem:[%s3 + $0x194] sm:$0xf]
      %v3938 = vld [vmem:[%s3 + $0x1b0] sm:$0xf]
      %v3939 = vld [vmem:[%s5 + $0x3] sm:$0x1]
      %v3941 = vlaneseq
      %v3942 = vshrl.u32 %v3941, 7
      %v3943 = vsub.s32 0, %v3942
      %v3944 = vrot.slane %v3939, %v3943
      %v3962 = vunpack.c.l.b16 %v3923
      %v3963 = vunpack.c.l.b16 %v3924
      %v3964 = vunpack.c.l.b16 %v3925
      %v3965 = vunpack.c.l.b16 %v3926
      %v3966 = vunpack.c.l.b16 %v3927
      %v3967 = vunpack.c.l.b16 %v3928
      %v3968 = vunpack.c.l.b16 %v3929
      %v3969 = vunpack.c.l.b16 %v3930
      %v3970 = vunpack.c.l.b16 %v3931
      %v3971 = vunpack.c.l.b16 %v3932
      %v3972 = vunpack.c.l.b16 %v3933
      %v3973 = vunpack.c.l.b16 %v3934
      %v3974 = vunpack.c.l.b16 %v3935
      %v3975 = vunpack.c.l.b16 %v3936
      %v3976 = vunpack.c.l.b16 %v3937
      %v3977 = vunpack.c.l.b16 %v3938
      %v3978 = vpack.c.b16 %v3963, %v3962
      %v3979 = vpack.c.b16 %v3965, %v3964
      %v3980 = vpack.c.b16 %v3967, %v3966
      %v3981 = vpack.c.b16 %v3969, %v3968
      %v3982 = vpack.c.b16 %v3971, %v3970
      %v3983 = vpack.c.b16 %v3973, %v3972
      %v3984 = vpack.c.b16 %v3975, %v3974
      %v3985 = vpack.c.b16 %v3977, %v3976
      %3994 = vmatprep.subr.bf16.mxu0 0
      %3995 = vmatpush1.bf16.msra.mxu0 %v3978
      %3996 = vmatprep.subr.bf16.mxu0 0
      %3997 = vmatpush1.bf16.msra.mxu0 %v3979
      %3998 = vmatprep.subr.bf16.mxu0 0
      %3999 = vmatpush1.bf16.msra.mxu0 %v3980
      %4000 = vmatprep.subr.bf16.mxu0 0
      %4001 = vmatpush1.bf16.msra.mxu0 %v3981
      %4002 = vmatprep.subr.bf16.mxu0 0
      %4003 = vmatpush1.bf16.msra.mxu0 %v3982
      %4004 = vmatprep.subr.bf16.mxu0 0
      %4005 = vmatpush1.bf16.msra.mxu0 %v3983
      %4006 = vmatprep.subr.bf16.mxu0 0
      %4007 = vmatpush1.bf16.msra.mxu0 %v3984
      %4008 = vmatprep.subr.bf16.mxu0 0
      %4009 = vmatpush1.bf16.msra.mxu0 %v3985
      %4010 = vmatprep.subr.bf16.mxu0 0
      %4011 = vmatpush1.bf16.msra.mxu0 0
      %4012 = vmatprep.subr.bf16.mxu0 0
      %4013 = vmatpush1.bf16.msra.mxu0 0
      %4014 = vmatprep.subr.bf16.mxu0 0
      %4015 = vmatpush1.bf16.msra.mxu0 0
      %4016 = vmatprep.subr.bf16.mxu0 0
      %4017 = vmatpush1.bf16.msra.mxu0 0
      %4018 = vmatprep.subr.bf16.mxu0 0
      %4019 = vmatpush1.bf16.msra.mxu0 0
      %4020 = vmatprep.subr.bf16.mxu0 0
      %4021 = vmatpush1.bf16.msra.mxu0 0
      %4022 = vmatprep.subr.bf16.mxu0 0
      %4023 = vmatpush1.bf16.msra.mxu0 0
      %4024 = vmatprep.subr.bf16.mxu0 0
      %4025 = vmatpush1.bf16.msra.mxu0 0
      %4026 = vmatprep.mubr.bf16.mxu0 0
      %4027 = vmatmul.mubr.bf16.gmra.mrb[0].mxu0 %v3171
      %v4028 = vpop.f32.mrb[0].mxu0
      %v4029 = vadd.f32 %v3944, %v4028
      %v4030 = vpop.f32.mrb[0].mxu0
      %v4031 = vpop.f32.mrb[0].mxu0
      %v4032 = vadd.f32 %v3944, %v4031
      %v4033 = vpop.f32.mrb[0].mxu0
      %4034 = vmatprep.mubr.bf16.mxu0 0
      %4035 = vmatmul.mubr.bf16.gmra.mrb[0].mxu0 %v3172
      %v4036 = vpop.f32.mrb[0].mxu0
      %v4037 = vadd.f32 %v3944, %v4036
      %v4038 = vpop.f32.mrb[0].mxu0
      %v4039 = vpop.f32.mrb[0].mxu0
      %v4040 = vadd.f32 %v3944, %v4039
      %v4041 = vpop.f32.mrb[0].mxu0
      %4042 = vmatprep.mubr.bf16.mxu0 0
      %4043 = vmatmul.mubr.bf16.gmra.mrb[0].mxu0 %v3173
      %v4044 = vpop.f32.mrb[0].mxu0
      %v4045 = vadd.f32 %v3944, %v4044
      %v4046 = vpop.f32.mrb[0].mxu0
      %v4047 = vpop.f32.mrb[0].mxu0
      %v4048 = vadd.f32 %v3944, %v4047
      %v4049 = vpop.f32.mrb[0].mxu0
      %4050 = vmatprep.mubr.bf16.mxu0 0
      %4051 = vmatmul.mubr.bf16.gmra.mrb[0].mxu0 %v3174
      %v4052 = vpop.f32.mrb[0].mxu0
      %v4053 = vadd.f32 %v3944, %v4052
      %v4054 = vpop.f32.mrb[0].mxu0
      %v4055 = vpop.f32.mrb[0].mxu0
      %v4056 = vadd.f32 %v3944, %v4055
      %v4057 = vpop.f32.mrb[0].mxu0
      %4058 = vmatprep.mubr.bf16.mxu0 0
      %4059 = vmatmul.mubr.bf16.gmra.mrb[0].mxu0 %v3175
      %v4060 = vpop.f32.mrb[0].mxu0
      %v4061 = vadd.f32 %v3944, %v4060
      %v4062 = vpop.f32.mrb[0].mxu0
      %v4063 = vpop.f32.mrb[0].mxu0
      %v4064 = vadd.f32 %v3944, %v4063
      %v4065 = vpop.f32.mrb[0].mxu0
      %4066 = vmatprep.mubr.bf16.mxu0 0
      %4067 = vmatmul.mubr.bf16.gmra.mrb[0].mxu0 %v3176
      %v4068 = vpop.f32.mrb[0].mxu0
      %v4069 = vadd.f32 %v3944, %v4068
      %v4070 = vpop.f32.mrb[0].mxu0
      %v4071 = vpop.f32.mrb[0].mxu0
      %v4072 = vadd.f32 %v3944, %v4071
      %v4073 = vpop.f32.mrb[0].mxu0
      %4074 = vmatprep.mubr.bf16.mxu0 0
      %4075 = vmatmul.mubr.bf16.gmra.mrb[0].mxu0 %v3177
      %v4076 = vpop.f32.mrb[0].mxu0
      %v4077 = vadd.f32 %v3944, %v4076
      %v4078 = vpop.f32.mrb[0].mxu0
      %v4079 = vpop.f32.mrb[0].mxu0
      %v4080 = vadd.f32 %v3944, %v4079
      %v4081 = vpop.f32.mrb[0].mxu0
      %4082 = vmatprep.mubr.bf16.mxu0 0
      %4083 = vmatmul.mubr.bf16.gmra.mrb[0].mxu0 %v3178
      %v4084 = vpop.f32.mrb[0].mxu0
      %v4085 = vadd.f32 %v3944, %v4084
      %v4086 = vpop.f32.mrb[0].mxu0
      %v4087 = vpop.f32.mrb[0].mxu0
      %v4088 = vadd.f32 %v3944, %v4087
      %v4089 = vpop.f32.mrb[0].mxu0
      %4090 = vdwg.mxu0
      %v4091 = vmul.f32 %v4029, 0.5
      %v4092 = vmul.f32 %v4032, 0.5
      %v4093 = vmul.f32 %v4037, 0.5
      %v4094 = vmul.f32 %v4040, 0.5
      %v4095 = vmul.f32 %v4045, 0.5
      %v4096 = vmul.f32 %v4048, 0.5
      %v4097 = vmul.f32 %v4053, 0.5
      %v4098 = vmul.f32 %v4056, 0.5
      %v4099 = vmul.f32 %v4061, 0.5
      %v4100 = vmul.f32 %v4064, 0.5
      %v4101 = vmul.f32 %v4069, 0.5
      %v4102 = vmul.f32 %v4072, 0.5
      %v4103 = vmul.f32 %v4077, 0.5
      %v4104 = vmul.f32 %v4080, 0.5
      %v4105 = vmul.f32 %v4085, 0.5
      %v4106 = vmul.f32 %v4088, 0.5
      %v4107 = vtanh.pop %v4091
      %v4108 = vtanh.pop %v4092
      %v4109 = vtanh.pop %v4093
      %v4110 = vtanh.pop %v4094
      %v4111 = vtanh.pop %v4095
      %v4112 = vtanh.pop %v4096
      %v4113 = vtanh.pop %v4097
      %v4114 = vtanh.pop %v4098
      %v4115 = vtanh.pop %v4099
      %v4116 = vtanh.pop %v4100
      %v4117 = vtanh.pop %v4101
      %v4118 = vtanh.pop %v4102
      %v4119 = vtanh.pop %v4103
      %v4120 = vtanh.pop %v4104
      %v4121 = vtanh.pop %v4105
      %v4122 = vtanh.pop %v4106
      %v4123 = vmul.f32 %v4107, 0.5
      %v4124 = vmul.f32 %v4108, 0.5
      %v4125 = vmul.f32 %v4109, 0.5
      %v4126 = vmul.f32 %v4110, 0.5
      %v4127 = vmul.f32 %v4111, 0.5
      %v4128 = vmul.f32 %v4112, 0.5
      %v4129 = vmul.f32 %v4113, 0.5
      %v4130 = vmul.f32 %v4114, 0.5
      %v4131 = vmul.f32 %v4115, 0.5
      %v4132 = vmul.f32 %v4116, 0.5
      %v4133 = vmul.f32 %v4117, 0.5
      %v4134 = vmul.f32 %v4118, 0.5
      %v4135 = vmul.f32 %v4119, 0.5
      %v4136 = vmul.f32 %v4120, 0.5
      %v4137 = vmul.f32 %v4121, 0.5
      %v4138 = vmul.f32 %v4122, 0.5
      %v4139 = vadd.f32 %v4123, 0.5
      %v4140 = vadd.f32 %v4124, 0.5
      %v4141 = vadd.f32 %v4125, 0.5
      %v4142 = vadd.f32 %v4126, 0.5
      %v4143 = vadd.f32 %v4127, 0.5
      %v4144 = vadd.f32 %v4128, 0.5
      %v4145 = vadd.f32 %v4129, 0.5
      %v4146 = vadd.f32 %v4130, 0.5
      %v4147 = vadd.f32 %v4131, 0.5
      %v4148 = vadd.f32 %v4132, 0.5
      %v4149 = vadd.f32 %v4133, 0.5
      %v4150 = vadd.f32 %v4134, 0.5
      %v4151 = vadd.f32 %v4135, 0.5
      %v4152 = vadd.f32 %v4136, 0.5
      %v4153 = vadd.f32 %v4137, 0.5
      %v4154 = vadd.f32 %v4138, 0.5
      %4155 = vst [vmem:[%s258 + $0x18] sm:$0xff] %v4139
      %4156 = vst [vmem:[%s258 + $0x50] sm:$0xff] %v4140
      %4157 = vst [vmem:[%s258 + $0x88] sm:$0xff] %v4141
      %4158 = vst [vmem:[%s258 + $0xc0] sm:$0xff] %v4142
      %4159 = vst [vmem:[%s258 + $0xf8] sm:$0xff] %v4143
      %4160 = vst [vmem:[%s258 + $0x130] sm:$0xff] %v4144
      %4161 = vst [vmem:[%s258 + $0x168] sm:$0xff] %v4145
      %4162 = vst [vmem:[%s258 + $0x1a0] sm:$0xff] %v4146
      %4163 = vst [vmem:[%s258 + $0x1d8] sm:$0xff] %v4147
      %4164 = vst [vmem:[%s258 + $0x210] sm:$0xff] %v4148
      %4165 = vst [vmem:[%s258 + $0x248] sm:$0xff] %v4149
      %4166 = vst [vmem:[%s258 + $0x280] sm:$0xff] %v4150
      %4167 = vst [vmem:[%s258 + $0x2b8] sm:$0xff] %v4151
      %4168 = vst [vmem:[%s258 + $0x2f0] sm:$0xff] %v4152
      %4169 = vst [vmem:[%s258 + $0x328] sm:$0xff] %v4153
      %4170 = vst [vmem:[%s258 + $0x360] sm:$0xff] %v4154
      %v4171 = vld [vmem:[%s3 + $0x10] sm:$0xf]
      %v4172 = vld [vmem:[%s3 + $0x2c] sm:$0xf]
      %v4173 = vld [vmem:[%s3 + $0x48] sm:$0xf]
      %v4174 = vld [vmem:[%s3 + $0x64] sm:$0xf]
      %v4175 = vld [vmem:[%s3 + $0x80] sm:$0xf]
      %v4176 = vld [vmem:[%s3 + $0x9c] sm:$0xf]
      %v4177 = vld [vmem:[%s3 + $0xb8] sm:$0xf]
      %v4178 = vld [vmem:[%s3 + $0xd4] sm:$0xf]
      %v4179 = vld [vmem:[%s3 + $0xf0] sm:$0xf]
      %v4180 = vld [vmem:[%s3 + $0x10c] sm:$0xf]
      %v4181 = vld [vmem:[%s3 + $0x128] sm:$0xf]
      %v4182 = vld [vmem:[%s3 + $0x144] sm:$0xf]
      %v4183 = vld [vmem:[%s3 + $0x160] sm:$0xf]
      %v4184 = vld [vmem:[%s3 + $0x17c] sm:$0xf]
      %v4185 = vld [vmem:[%s3 + $0x198] sm:$0xf]
      %v4186 = vld [vmem:[%s3 + $0x1b4] sm:$0xf]
      %v4187 = vld [vmem:[%s5 + $0x4] sm:$0x1]
      %v4189 = vlaneseq
      %v4190 = vshrl.u32 %v4189, 7
      %v4191 = vsub.s32 0, %v4190
      %v4192 = vrot.slane %v4187, %v4191
      %v4210 = vunpack.c.l.b16 %v4171
      %v4211 = vunpack.c.l.b16 %v4172
      %v4212 = vunpack.c.l.b16 %v4173
      %v4213 = vunpack.c.l.b16 %v4174
      %v4214 = vunpack.c.l.b16 %v4175
      %v4215 = vunpack.c.l.b16 %v4176
      %v4216 = vunpack.c.l.b16 %v4177
      %v4217 = vunpack.c.l.b16 %v4178
      %v4218 = vunpack.c.l.b16 %v4179
      %v4219 = vunpack.c.l.b16 %v4180
      %v4220 = vunpack.c.l.b16 %v4181
      %v4221 = vunpack.c.l.b16 %v4182
      %v4222 = vunpack.c.l.b16 %v4183
      %v4223 = vunpack.c.l.b16 %v4184
      %v4224 = vunpack.c.l.b16 %v4185
      %v4225 = vunpack.c.l.b16 %v4186
      %v4226 = vpack.c.b16 %v4211, %v4210
      %v4227 = vpack.c.b16 %v4213, %v4212
      %v4228 = vpack.c.b16 %v4215, %v4214
      %v4229 = vpack.c.b16 %v4217, %v4216
      %v4230 = vpack.c.b16 %v4219, %v4218
      %v4231 = vpack.c.b16 %v4221, %v4220
      %v4232 = vpack.c.b16 %v4223, %v4222
      %v4233 = vpack.c.b16 %v4225, %v4224
      %4242 = vmatprep.subr.bf16.mxu0 0
      %4243 = vmatpush1.bf16.msra.mxu0 %v4226
      %4244 = vmatprep.subr.bf16.mxu0 0
      %4245 = vmatpush1.bf16.msra.mxu0 %v4227
      %4246 = vmatprep.subr.bf16.mxu0 0
      %4247 = vmatpush1.bf16.msra.mxu0 %v4228
      %4248 = vmatprep.subr.bf16.mxu0 0
      %4249 = vmatpush1.bf16.msra.mxu0 %v4229
      %4250 = vmatprep.subr.bf16.mxu0 0
      %4251 = vmatpush1.bf16.msra.mxu0 %v4230
      %4252 = vmatprep.subr.bf16.mxu0 0
      %4253 = vmatpush1.bf16.msra.mxu0 %v4231
      %4254 = vmatprep.subr.bf16.mxu0 0
      %4255 = vmatpush1.bf16.msra.mxu0 %v4232
      %4256 = vmatprep.subr.bf16.mxu0 0
      %4257 = vmatpush1.bf16.msra.mxu0 %v4233
      %4258 = vmatprep.subr.bf16.mxu0 0
      %4259 = vmatpush1.bf16.msra.mxu0 0
      %4260 = vmatprep.subr.bf16.mxu0 0
      %4261 = vmatpush1.bf16.msra.mxu0 0
      %4262 = vmatprep.subr.bf16.mxu0 0
      %4263 = vmatpush1.bf16.msra.mxu0 0
      %4264 = vmatprep.subr.bf16.mxu0 0
      %4265 = vmatpush1.bf16.msra.mxu0 0
      %4266 = vmatprep.subr.bf16.mxu0 0
      %4267 = vmatpush1.bf16.msra.mxu0 0
      %4268 = vmatprep.subr.bf16.mxu0 0
      %4269 = vmatpush1.bf16.msra.mxu0 0
      %4270 = vmatprep.subr.bf16.mxu0 0
      %4271 = vmatpush1.bf16.msra.mxu0 0
      %4272 = vmatprep.subr.bf16.mxu0 0
      %4273 = vmatpush1.bf16.msra.mxu0 0
      %4274 = vmatprep.mubr.bf16.mxu0 0
      %4275 = vmatmul.mubr.bf16.gmra.mrb[0].mxu0 %v3171
      %v4276 = vpop.f32.mrb[0].mxu0
      %v4277 = vadd.f32 %v4192, %v4276
      %v4278 = vpop.f32.mrb[0].mxu0
      %v4279 = vpop.f32.mrb[0].mxu0
      %v4280 = vadd.f32 %v4192, %v4279
      %v4281 = vpop.f32.mrb[0].mxu0
      %4282 = vmatprep.mubr.bf16.mxu0 0
      %4283 = vmatmul.mubr.bf16.gmra.mrb[0].mxu0 %v3172
      %v4284 = vpop.f32.mrb[0].mxu0
      %v4285 = vadd.f32 %v4192, %v4284
      %v4286 = vpop.f32.mrb[0].mxu0
      %v4287 = vpop.f32.mrb[0].mxu0
      %v4288 = vadd.f32 %v4192, %v4287
      %v4289 = vpop.f32.mrb[0].mxu0
      %4290 = vmatprep.mubr.bf16.mxu0 0
      %4291 = vmatmul.mubr.bf16.gmra.mrb[0].mxu0 %v3173
      %v4292 = vpop.f32.mrb[0].mxu0
      %v4293 = vadd.f32 %v4192, %v4292
      %v4294 = vpop.f32.mrb[0].mxu0
      %v4295 = vpop.f32.mrb[0].mxu0
      %v4296 = vadd.f32 %v4192, %v4295
      %v4297 = vpop.f32.mrb[0].mxu0
      %4298 = vmatprep.mubr.bf16.mxu0 0
      %4299 = vmatmul.mubr.bf16.gmra.mrb[0].mxu0 %v3174
      %v4300 = vpop.f32.mrb[0].mxu0
      %v4301 = vadd.f32 %v4192, %v4300
      %v4302 = vpop.f32.mrb[0].mxu0
      %v4303 = vpop.f32.mrb[0].mxu0
      %v4304 = vadd.f32 %v4192, %v4303
      %v4305 = vpop.f32.mrb[0].mxu0
      %4306 = vmatprep.mubr.bf16.mxu0 0
      %4307 = vmatmul.mubr.bf16.gmra.mrb[0].mxu0 %v3175
      %v4308 = vpop.f32.mrb[0].mxu0
      %v4309 = vadd.f32 %v4192, %v4308
      %v4310 = vpop.f32.mrb[0].mxu0
      %v4311 = vpop.f32.mrb[0].mxu0
      %v4312 = vadd.f32 %v4192, %v4311
      %v4313 = vpop.f32.mrb[0].mxu0
      %4314 = vmatprep.mubr.bf16.mxu0 0
      %4315 = vmatmul.mubr.bf16.gmra.mrb[0].mxu0 %v3176
      %v4316 = vpop.f32.mrb[0].mxu0
      %v4317 = vadd.f32 %v4192, %v4316
      %v4318 = vpop.f32.mrb[0].mxu0
      %v4319 = vpop.f32.mrb[0].mxu0
      %v4320 = vadd.f32 %v4192, %v4319
      %v4321 = vpop.f32.mrb[0].mxu0
      %4322 = vmatprep.mubr.bf16.mxu0 0
      %4323 = vmatmul.mubr.bf16.gmra.mrb[0].mxu0 %v3177
      %v4324 = vpop.f32.mrb[0].mxu0
      %v4325 = vadd.f32 %v4192, %v4324
      %v4326 = vpop.f32.mrb[0].mxu0
      %v4327 = vpop.f32.mrb[0].mxu0
      %v4328 = vadd.f32 %v4192, %v4327
      %v4329 = vpop.f32.mrb[0].mxu0
      %4330 = vmatprep.mubr.bf16.mxu0 0
      %4331 = vmatmul.mubr.bf16.gmra.mrb[0].mxu0 %v3178
      %v4332 = vpop.f32.mrb[0].mxu0
      %v4333 = vadd.f32 %v4192, %v4332
      %v4334 = vpop.f32.mrb[0].mxu0
      %v4335 = vpop.f32.mrb[0].mxu0
      %v4336 = vadd.f32 %v4192, %v4335
      %v4337 = vpop.f32.mrb[0].mxu0
      %4338 = vdwg.mxu0
      %v4339 = vmul.f32 %v4277, 0.5
      %v4340 = vmul.f32 %v4280, 0.5
      %v4341 = vmul.f32 %v4285, 0.5
      %v4342 = vmul.f32 %v4288, 0.5
      %v4343 = vmul.f32 %v4293, 0.5
      %v4344 = vmul.f32 %v4296, 0.5
      %v4345 = vmul.f32 %v4301, 0.5
      %v4346 = vmul.f32 %v4304, 0.5
      %v4347 = vmul.f32 %v4309, 0.5
      %v4348 = vmul.f32 %v4312, 0.5
      %v4349 = vmul.f32 %v4317, 0.5
      %v4350 = vmul.f32 %v4320, 0.5
      %v4351 = vmul.f32 %v4325, 0.5
      %v4352 = vmul.f32 %v4328, 0.5
      %v4353 = vmul.f32 %v4333, 0.5
      %v4354 = vmul.f32 %v4336, 0.5
      %v4355 = vtanh.pop %v4339
      %v4356 = vtanh.pop %v4340
      %v4357 = vtanh.pop %v4341
      %v4358 = vtanh.pop %v4342
      %v4359 = vtanh.pop %v4343
      %v4360 = vtanh.pop %v4344
      %v4361 = vtanh.pop %v4345
      %v4362 = vtanh.pop %v4346
      %v4363 = vtanh.pop %v4347
      %v4364 = vtanh.pop %v4348
      %v4365 = vtanh.pop %v4349
      %v4366 = vtanh.pop %v4350
      %v4367 = vtanh.pop %v4351
      %v4368 = vtanh.pop %v4352
      %v4369 = vtanh.pop %v4353
      %v4370 = vtanh.pop %v4354
      %v4371 = vmul.f32 %v4355, 0.5
      %v4372 = vmul.f32 %v4356, 0.5
      %v4373 = vmul.f32 %v4357, 0.5
      %v4374 = vmul.f32 %v4358, 0.5
      %v4375 = vmul.f32 %v4359, 0.5
      %v4376 = vmul.f32 %v4360, 0.5
      %v4377 = vmul.f32 %v4361, 0.5
      %v4378 = vmul.f32 %v4362, 0.5
      %v4379 = vmul.f32 %v4363, 0.5
      %v4380 = vmul.f32 %v4364, 0.5
      %v4381 = vmul.f32 %v4365, 0.5
      %v4382 = vmul.f32 %v4366, 0.5
      %v4383 = vmul.f32 %v4367, 0.5
      %v4384 = vmul.f32 %v4368, 0.5
      %v4385 = vmul.f32 %v4369, 0.5
      %v4386 = vmul.f32 %v4370, 0.5
      %v4387 = vadd.f32 %v4371, 0.5
      %v4388 = vadd.f32 %v4372, 0.5
      %v4389 = vadd.f32 %v4373, 0.5
      %v4390 = vadd.f32 %v4374, 0.5
      %v4391 = vadd.f32 %v4375, 0.5
      %v4392 = vadd.f32 %v4376, 0.5
      %v4393 = vadd.f32 %v4377, 0.5
      %v4394 = vadd.f32 %v4378, 0.5
      %v4395 = vadd.f32 %v4379, 0.5
      %v4396 = vadd.f32 %v4380, 0.5
      %v4397 = vadd.f32 %v4381, 0.5
      %v4398 = vadd.f32 %v4382, 0.5
      %v4399 = vadd.f32 %v4383, 0.5
      %v4400 = vadd.f32 %v4384, 0.5
      %v4401 = vadd.f32 %v4385, 0.5
      %v4402 = vadd.f32 %v4386, 0.5
      %4403 = vst [vmem:[%s258 + $0x20] sm:$0xff] %v4387
      %4404 = vst [vmem:[%s258 + $0x58] sm:$0xff] %v4388
      %4405 = vst [vmem:[%s258 + $0x90] sm:$0xff] %v4389
      %4406 = vst [vmem:[%s258 + $0xc8] sm:$0xff] %v4390
      %4407 = vst [vmem:[%s258 + $0x100] sm:$0xff] %v4391
      %4408 = vst [vmem:[%s258 + $0x138] sm:$0xff] %v4392
      %4409 = vst [vmem:[%s258 + $0x170] sm:$0xff] %v4393
      %4410 = vst [vmem:[%s258 + $0x1a8] sm:$0xff] %v4394
      %4411 = vst [vmem:[%s258 + $0x1e0] sm:$0xff] %v4395
      %4412 = vst [vmem:[%s258 + $0x218] sm:$0xff] %v4396
      %4413 = vst [vmem:[%s258 + $0x250] sm:$0xff] %v4397
      %4414 = vst [vmem:[%s258 + $0x288] sm:$0xff] %v4398
      %4415 = vst [vmem:[%s258 + $0x2c0] sm:$0xff] %v4399
      %4416 = vst [vmem:[%s258 + $0x2f8] sm:$0xff] %v4400
      %4417 = vst [vmem:[%s258 + $0x330] sm:$0xff] %v4401
      %4418 = vst [vmem:[%s258 + $0x368] sm:$0xff] %v4402
      %v4419 = vld [vmem:[%s3 + $0x14] sm:$0xf]
      %v4420 = vld [vmem:[%s3 + $0x30] sm:$0xf]
      %v4421 = vld [vmem:[%s3 + $0x4c] sm:$0xf]
      %v4422 = vld [vmem:[%s3 + $0x68] sm:$0xf]
      %v4423 = vld [vmem:[%s3 + $0x84] sm:$0xf]
      %v4424 = vld [vmem:[%s3 + $0xa0] sm:$0xf]
      %v4425 = vld [vmem:[%s3 + $0xbc] sm:$0xf]
      %v4426 = vld [vmem:[%s3 + $0xd8] sm:$0xf]
      %v4427 = vld [vmem:[%s3 + $0xf4] sm:$0xf]
      %v4428 = vld [vmem:[%s3 + $0x110] sm:$0xf]
      %v4429 = vld [vmem:[%s3 + $0x12c] sm:$0xf]
      %v4430 = vld [vmem:[%s3 + $0x148] sm:$0xf]
      %v4431 = vld [vmem:[%s3 + $0x164] sm:$0xf]
      %v4432 = vld [vmem:[%s3 + $0x180] sm:$0xf]
      %v4433 = vld [vmem:[%s3 + $0x19c] sm:$0xf]
      %v4434 = vld [vmem:[%s3 + $0x1b8] sm:$0xf]
      %v4435 = vld [vmem:[%s5 + $0x5] sm:$0x1]
      %v4437 = vlaneseq
      %v4438 = vshrl.u32 %v4437, 7
      %v4439 = vsub.s32 0, %v4438
      %v4440 = vrot.slane %v4435, %v4439
      %v4458 = vunpack.c.l.b16 %v4419
      %v4459 = vunpack.c.l.b16 %v4420
      %v4460 = vunpack.c.l.b16 %v4421
      %v4461 = vunpack.c.l.b16 %v4422
      %v4462 = vunpack.c.l.b16 %v4423
      %v4463 = vunpack.c.l.b16 %v4424
      %v4464 = vunpack.c.l.b16 %v4425
      %v4465 = vunpack.c.l.b16 %v4426
      %v4466 = vunpack.c.l.b16 %v4427
      %v4467 = vunpack.c.l.b16 %v4428
      %v4468 = vunpack.c.l.b16 %v4429
      %v4469 = vunpack.c.l.b16 %v4430
      %v4470 = vunpack.c.l.b16 %v4431
      %v4471 = vunpack.c.l.b16 %v4432
      %v4472 = vunpack.c.l.b16 %v4433
      %v4473 = vunpack.c.l.b16 %v4434
      %v4474 = vpack.c.b16 %v4459, %v4458
      %v4475 = vpack.c.b16 %v4461, %v4460
      %v4476 = vpack.c.b16 %v4463, %v4462
      %v4477 = vpack.c.b16 %v4465, %v4464
      %v4478 = vpack.c.b16 %v4467, %v4466
      %v4479 = vpack.c.b16 %v4469, %v4468
      %v4480 = vpack.c.b16 %v4471, %v4470
      %v4481 = vpack.c.b16 %v4473, %v4472
      %4490 = vmatprep.subr.bf16.mxu0 0
      %4491 = vmatpush1.bf16.msra.mxu0 %v4474
      %4492 = vmatprep.subr.bf16.mxu0 0
      %4493 = vmatpush1.bf16.msra.mxu0 %v4475
      %4494 = vmatprep.subr.bf16.mxu0 0
      %4495 = vmatpush1.bf16.msra.mxu0 %v4476
      %4496 = vmatprep.subr.bf16.mxu0 0
      %4497 = vmatpush1.bf16.msra.mxu0 %v4477
      %4498 = vmatprep.subr.bf16.mxu0 0
      %4499 = vmatpush1.bf16.msra.mxu0 %v4478
      %4500 = vmatprep.subr.bf16.mxu0 0
      %4501 = vmatpush1.bf16.msra.mxu0 %v4479
      %4502 = vmatprep.subr.bf16.mxu0 0
      %4503 = vmatpush1.bf16.msra.mxu0 %v4480
      %4504 = vmatprep.subr.bf16.mxu0 0
      %4505 = vmatpush1.bf16.msra.mxu0 %v4481
      %4506 = vmatprep.subr.bf16.mxu0 0
      %4507 = vmatpush1.bf16.msra.mxu0 0
      %4508 = vmatprep.subr.bf16.mxu0 0
      %4509 = vmatpush1.bf16.msra.mxu0 0
      %4510 = vmatprep.subr.bf16.mxu0 0
      %4511 = vmatpush1.bf16.msra.mxu0 0
      %4512 = vmatprep.subr.bf16.mxu0 0
      %4513 = vmatpush1.bf16.msra.mxu0 0
      %4514 = vmatprep.subr.bf16.mxu0 0
      %4515 = vmatpush1.bf16.msra.mxu0 0
      %4516 = vmatprep.subr.bf16.mxu0 0
      %4517 = vmatpush1.bf16.msra.mxu0 0
      %4518 = vmatprep.subr.bf16.mxu0 0
      %4519 = vmatpush1.bf16.msra.mxu0 0
      %4520 = vmatprep.subr.bf16.mxu0 0
      %4521 = vmatpush1.bf16.msra.mxu0 0
      %4522 = vmatprep.mubr.bf16.mxu0 0
      %4523 = vmatmul.mubr.bf16.gmra.mrb[0].mxu0 %v3171
      %v4524 = vpop.f32.mrb[0].mxu0
      %v4525 = vadd.f32 %v4440, %v4524
      %v4526 = vpop.f32.mrb[0].mxu0
      %v4527 = vpop.f32.mrb[0].mxu0
      %v4528 = vadd.f32 %v4440, %v4527
      %v4529 = vpop.f32.mrb[0].mxu0
      %4530 = vmatprep.mubr.bf16.mxu0 0
      %4531 = vmatmul.mubr.bf16.gmra.mrb[0].mxu0 %v3172
      %v4532 = vpop.f32.mrb[0].mxu0
      %v4533 = vadd.f32 %v4440, %v4532
      %v4534 = vpop.f32.mrb[0].mxu0
      %v4535 = vpop.f32.mrb[0].mxu0
      %v4536 = vadd.f32 %v4440, %v4535
      %v4537 = vpop.f32.mrb[0].mxu0
      %4538 = vmatprep.mubr.bf16.mxu0 0
      %4539 = vmatmul.mubr.bf16.gmra.mrb[0].mxu0 %v3173
      %v4540 = vpop.f32.mrb[0].mxu0
      %v4541 = vadd.f32 %v4440, %v4540
      %v4542 = vpop.f32.mrb[0].mxu0
      %v4543 = vpop.f32.mrb[0].mxu0
      %v4544 = vadd.f32 %v4440, %v4543
      %v4545 = vpop.f32.mrb[0].mxu0
      %4546 = vmatprep.mubr.bf16.mxu0 0
      %4547 = vmatmul.mubr.bf16.gmra.mrb[0].mxu0 %v3174
      %v4548 = vpop.f32.mrb[0].mxu0
      %v4549 = vadd.f32 %v4440, %v4548
      %v4550 = vpop.f32.mrb[0].mxu0
      %v4551 = vpop.f32.mrb[0].mxu0
      %v4552 = vadd.f32 %v4440, %v4551
      %v4553 = vpop.f32.mrb[0].mxu0
      %4554 = vmatprep.mubr.bf16.mxu0 0
      %4555 = vmatmul.mubr.bf16.gmra.mrb[0].mxu0 %v3175
      %v4556 = vpop.f32.mrb[0].mxu0
      %v4557 = vadd.f32 %v4440, %v4556
      %v4558 = vpop.f32.mrb[0].mxu0
      %v4559 = vpop.f32.mrb[0].mxu0
      %v4560 = vadd.f32 %v4440, %v4559
      %v4561 = vpop.f32.mrb[0].mxu0
      %4562 = vmatprep.mubr.bf16.mxu0 0
      %4563 = vmatmul.mubr.bf16.gmra.mrb[0].mxu0 %v3176
      %v4564 = vpop.f32.mrb[0].mxu0
      %v4565 = vadd.f32 %v4440, %v4564
      %v4566 = vpop.f32.mrb[0].mxu0
      %v4567 = vpop.f32.mrb[0].mxu0
      %v4568 = vadd.f32 %v4440, %v4567
      %v4569 = vpop.f32.mrb[0].mxu0
      %4570 = vmatprep.mubr.bf16.mxu0 0
      %4571 = vmatmul.mubr.bf16.gmra.mrb[0].mxu0 %v3177
      %v4572 = vpop.f32.mrb[0].mxu0
      %v4573 = vadd.f32 %v4440, %v4572
      %v4574 = vpop.f32.mrb[0].mxu0
      %v4575 = vpop.f32.mrb[0].mxu0
      %v4576 = vadd.f32 %v4440, %v4575
      %v4577 = vpop.f32.mrb[0].mxu0
      %4578 = vmatprep.mubr.bf16.mxu0 0
      %4579 = vmatmul.mubr.bf16.gmra.mrb[0].mxu0 %v3178
      %v4580 = vpop.f32.mrb[0].mxu0
      %v4581 = vadd.f32 %v4440, %v4580
      %v4582 = vpop.f32.mrb[0].mxu0
      %v4583 = vpop.f32.mrb[0].mxu0
      %v4584 = vadd.f32 %v4440, %v4583
      %v4585 = vpop.f32.mrb[0].mxu0
      %4586 = vdwg.mxu0
      %v4587 = vmul.f32 %v4525, 0.5
      %v4588 = vmul.f32 %v4528, 0.5
      %v4589 = vmul.f32 %v4533, 0.5
      %v4590 = vmul.f32 %v4536, 0.5
      %v4591 = vmul.f32 %v4541, 0.5
      %v4592 = vmul.f32 %v4544, 0.5
      %v4593 = vmul.f32 %v4549, 0.5
      %v4594 = vmul.f32 %v4552, 0.5
      %v4595 = vmul.f32 %v4557, 0.5
      %v4596 = vmul.f32 %v4560, 0.5
      %v4597 = vmul.f32 %v4565, 0.5
      %v4598 = vmul.f32 %v4568, 0.5
      %v4599 = vmul.f32 %v4573, 0.5
      %v4600 = vmul.f32 %v4576, 0.5
      %v4601 = vmul.f32 %v4581, 0.5
      %v4602 = vmul.f32 %v4584, 0.5
      %v4603 = vtanh.pop %v4587
      %v4604 = vtanh.pop %v4588
      %v4605 = vtanh.pop %v4589
      %v4606 = vtanh.pop %v4590
      %v4607 = vtanh.pop %v4591
      %v4608 = vtanh.pop %v4592
      %v4609 = vtanh.pop %v4593
      %v4610 = vtanh.pop %v4594
      %v4611 = vtanh.pop %v4595
      %v4612 = vtanh.pop %v4596
      %v4613 = vtanh.pop %v4597
      %v4614 = vtanh.pop %v4598
      %v4615 = vtanh.pop %v4599
      %v4616 = vtanh.pop %v4600
      %v4617 = vtanh.pop %v4601
      %v4618 = vtanh.pop %v4602
      %v4619 = vmul.f32 %v4603, 0.5
      %v4620 = vmul.f32 %v4604, 0.5
      %v4621 = vmul.f32 %v4605, 0.5
      %v4622 = vmul.f32 %v4606, 0.5
      %v4623 = vmul.f32 %v4607, 0.5
      %v4624 = vmul.f32 %v4608, 0.5
      %v4625 = vmul.f32 %v4609, 0.5
      %v4626 = vmul.f32 %v4610, 0.5
      %v4627 = vmul.f32 %v4611, 0.5
      %v4628 = vmul.f32 %v4612, 0.5
      %v4629 = vmul.f32 %v4613, 0.5
      %v4630 = vmul.f32 %v4614, 0.5
      %v4631 = vmul.f32 %v4615, 0.5
      %v4632 = vmul.f32 %v4616, 0.5
      %v4633 = vmul.f32 %v4617, 0.5
      %v4634 = vmul.f32 %v4618, 0.5
      %v4635 = vadd.f32 %v4619, 0.5
      %v4636 = vadd.f32 %v4620, 0.5
      %v4637 = vadd.f32 %v4621, 0.5
      %v4638 = vadd.f32 %v4622, 0.5
      %v4639 = vadd.f32 %v4623, 0.5
      %v4640 = vadd.f32 %v4624, 0.5
      %v4641 = vadd.f32 %v4625, 0.5
      %v4642 = vadd.f32 %v4626, 0.5
      %v4643 = vadd.f32 %v4627, 0.5
      %v4644 = vadd.f32 %v4628, 0.5
      %v4645 = vadd.f32 %v4629, 0.5
      %v4646 = vadd.f32 %v4630, 0.5
      %v4647 = vadd.f32 %v4631, 0.5
      %v4648 = vadd.f32 %v4632, 0.5
      %v4649 = vadd.f32 %v4633, 0.5
      %v4650 = vadd.f32 %v4634, 0.5
      %4651 = vst [vmem:[%s258 + $0x28] sm:$0xff] %v4635
      %4652 = vst [vmem:[%s258 + $0x60] sm:$0xff] %v4636
      %4653 = vst [vmem:[%s258 + $0x98] sm:$0xff] %v4637
      %4654 = vst [vmem:[%s258 + $0xd0] sm:$0xff] %v4638
      %4655 = vst [vmem:[%s258 + $0x108] sm:$0xff] %v4639
      %4656 = vst [vmem:[%s258 + $0x140] sm:$0xff] %v4640
      %4657 = vst [vmem:[%s258 + $0x178] sm:$0xff] %v4641
      %4658 = vst [vmem:[%s258 + $0x1b0] sm:$0xff] %v4642
      %4659 = vst [vmem:[%s258 + $0x1e8] sm:$0xff] %v4643
      %4660 = vst [vmem:[%s258 + $0x220] sm:$0xff] %v4644
      %4661 = vst [vmem:[%s258 + $0x258] sm:$0xff] %v4645
      %4662 = vst [vmem:[%s258 + $0x290] sm:$0xff] %v4646
      %4663 = vst [vmem:[%s258 + $0x2c8] sm:$0xff] %v4647
      %4664 = vst [vmem:[%s258 + $0x300] sm:$0xff] %v4648
      %4665 = vst [vmem:[%s258 + $0x338] sm:$0xff] %v4649
      %4666 = vst [vmem:[%s258 + $0x370] sm:$0xff] %v4650
      %v4667 = vld [vmem:[%s3 + $0x18] sm:$0xf]
      %v4668 = vld [vmem:[%s3 + $0x34] sm:$0xf]
      %v4669 = vld [vmem:[%s3 + $0x50] sm:$0xf]
      %v4670 = vld [vmem:[%s3 + $0x6c] sm:$0xf]
      %v4671 = vld [vmem:[%s3 + $0x88] sm:$0xf]
      %v4672 = vld [vmem:[%s3 + $0xa4] sm:$0xf]
      %v4673 = vld [vmem:[%s3 + $0xc0] sm:$0xf]
      %v4674 = vld [vmem:[%s3 + $0xdc] sm:$0xf]
      %v4675 = vld [vmem:[%s3 + $0xf8] sm:$0xf]
      %v4676 = vld [vmem:[%s3 + $0x114] sm:$0xf]
      %v4677 = vld [vmem:[%s3 + $0x130] sm:$0xf]
      %v4678 = vld [vmem:[%s3 + $0x14c] sm:$0xf]
      %v4679 = vld [vmem:[%s3 + $0x168] sm:$0xf]
      %v4680 = vld [vmem:[%s3 + $0x184] sm:$0xf]
      %v4681 = vld [vmem:[%s3 + $0x1a0] sm:$0xf]
      %v4682 = vld [vmem:[%s3 + $0x1bc] sm:$0xf]
      %v4683 = vld [vmem:[%s5 + $0x6] sm:$0x1]
      %v4685 = vlaneseq
      %v4686 = vshrl.u32 %v4685, 7
      %v4687 = vsub.s32 0, %v4686
      %v4688 = vrot.slane %v4683, %v4687
      %v4706 = vunpack.c.l.b16 %v4667
      %v4707 = vunpack.c.l.b16 %v4668
      %v4708 = vunpack.c.l.b16 %v4669
      %v4709 = vunpack.c.l.b16 %v4670
      %v4710 = vunpack.c.l.b16 %v4671
      %v4711 = vunpack.c.l.b16 %v4672
      %v4712 = vunpack.c.l.b16 %v4673
      %v4713 = vunpack.c.l.b16 %v4674
      %v4714 = vunpack.c.l.b16 %v4675
      %v4715 = vunpack.c.l.b16 %v4676
      %v4716 = vunpack.c.l.b16 %v4677
      %v4717 = vunpack.c.l.b16 %v4678
      %v4718 = vunpack.c.l.b16 %v4679
      %v4719 = vunpack.c.l.b16 %v4680
      %v4720 = vunpack.c.l.b16 %v4681
      %v4721 = vunpack.c.l.b16 %v4682
      %v4722 = vpack.c.b16 %v4707, %v4706
      %v4723 = vpack.c.b16 %v4709, %v4708
      %v4724 = vpack.c.b16 %v4711, %v4710
      %v4725 = vpack.c.b16 %v4713, %v4712
      %v4726 = vpack.c.b16 %v4715, %v4714
      %v4727 = vpack.c.b16 %v4717, %v4716
      %v4728 = vpack.c.b16 %v4719, %v4718
      %v4729 = vpack.c.b16 %v4721, %v4720
      %4738 = vmatprep.subr.bf16.mxu0 0
      %4739 = vmatpush1.bf16.msra.mxu0 %v4722
      %4740 = vmatprep.subr.bf16.mxu0 0
      %4741 = vmatpush1.bf16.msra.mxu0 %v4723
      %4742 = vmatprep.subr.bf16.mxu0 0
      %4743 = vmatpush1.bf16.msra.mxu0 %v4724
      %4744 = vmatprep.subr.bf16.mxu0 0
      %4745 = vmatpush1.bf16.msra.mxu0 %v4725
      %4746 = vmatprep.subr.bf16.mxu0 0
      %4747 = vmatpush1.bf16.msra.mxu0 %v4726
      %4748 = vmatprep.subr.bf16.mxu0 0
      %4749 = vmatpush1.bf16.msra.mxu0 %v4727
      %4750 = vmatprep.subr.bf16.mxu0 0
      %4751 = vmatpush1.bf16.msra.mxu0 %v4728
      %4752 = vmatprep.subr.bf16.mxu0 0
      %4753 = vmatpush1.bf16.msra.mxu0 %v4729
      %4754 = vmatprep.subr.bf16.mxu0 0
      %4755 = vmatpush1.bf16.msra.mxu0 0
      %4756 = vmatprep.subr.bf16.mxu0 0
      %4757 = vmatpush1.bf16.msra.mxu0 0
      %4758 = vmatprep.subr.bf16.mxu0 0
      %4759 = vmatpush1.bf16.msra.mxu0 0
      %4760 = vmatprep.subr.bf16.mxu0 0
      %4761 = vmatpush1.bf16.msra.mxu0 0
      %4762 = vmatprep.subr.bf16.mxu0 0
      %4763 = vmatpush1.bf16.msra.mxu0 0
      %4764 = vmatprep.subr.bf16.mxu0 0
      %4765 = vmatpush1.bf16.msra.mxu0 0
      %4766 = vmatprep.subr.bf16.mxu0 0
      %4767 = vmatpush1.bf16.msra.mxu0 0
      %4768 = vmatprep.subr.bf16.mxu0 0
      %4769 = vmatpush1.bf16.msra.mxu0 0
      %4770 = vmatprep.mubr.bf16.mxu0 0
      %4771 = vmatmul.mubr.bf16.gmra.mrb[0].mxu0 %v3171
      %v4772 = vpop.f32.mrb[0].mxu0
      %v4773 = vadd.f32 %v4688, %v4772
      %v4774 = vpop.f32.mrb[0].mxu0
      %v4775 = vpop.f32.mrb[0].mxu0
      %v4776 = vadd.f32 %v4688, %v4775
      %v4777 = vpop.f32.mrb[0].mxu0
      %4778 = vmatprep.mubr.bf16.mxu0 0
      %4779 = vmatmul.mubr.bf16.gmra.mrb[0].mxu0 %v3172
      %v4780 = vpop.f32.mrb[0].mxu0
      %v4781 = vadd.f32 %v4688, %v4780
      %v4782 = vpop.f32.mrb[0].mxu0
      %v4783 = vpop.f32.mrb[0].mxu0
      %v4784 = vadd.f32 %v4688, %v4783
      %v4785 = vpop.f32.mrb[0].mxu0
      %4786 = vmatprep.mubr.bf16.mxu0 0
      %4787 = vmatmul.mubr.bf16.gmra.mrb[0].mxu0 %v3173
      %v4788 = vpop.f32.mrb[0].mxu0
      %v4789 = vadd.f32 %v4688, %v4788
      %v4790 = vpop.f32.mrb[0].mxu0
      %v4791 = vpop.f32.mrb[0].mxu0
      %v4792 = vadd.f32 %v4688, %v4791
      %v4793 = vpop.f32.mrb[0].mxu0
      %4794 = vmatprep.mubr.bf16.mxu0 0
      %4795 = vmatmul.mubr.bf16.gmra.mrb[0].mxu0 %v3174
      %v4796 = vpop.f32.mrb[0].mxu0
      %v4797 = vadd.f32 %v4688, %v4796
      %v4798 = vpop.f32.mrb[0].mxu0
      %v4799 = vpop.f32.mrb[0].mxu0
      %v4800 = vadd.f32 %v4688, %v4799
      %v4801 = vpop.f32.mrb[0].mxu0
      %4802 = vmatprep.mubr.bf16.mxu0 0
      %4803 = vmatmul.mubr.bf16.gmra.mrb[0].mxu0 %v3175
      %v4804 = vpop.f32.mrb[0].mxu0
      %v4805 = vadd.f32 %v4688, %v4804
      %v4806 = vpop.f32.mrb[0].mxu0
      %v4807 = vpop.f32.mrb[0].mxu0
      %v4808 = vadd.f32 %v4688, %v4807
      %v4809 = vpop.f32.mrb[0].mxu0
      %4810 = vmatprep.mubr.bf16.mxu0 0
      %4811 = vmatmul.mubr.bf16.gmra.mrb[0].mxu0 %v3176
      %v4812 = vpop.f32.mrb[0].mxu0
      %v4813 = vadd.f32 %v4688, %v4812
      %v4814 = vpop.f32.mrb[0].mxu0
      %v4815 = vpop.f32.mrb[0].mxu0
      %v4816 = vadd.f32 %v4688, %v4815
      %v4817 = vpop.f32.mrb[0].mxu0
      %4818 = vmatprep.mubr.bf16.mxu0 0
      %4819 = vmatmul.mubr.bf16.gmra.mrb[0].mxu0 %v3177
      %v4820 = vpop.f32.mrb[0].mxu0
      %v4821 = vadd.f32 %v4688, %v4820
      %v4822 = vpop.f32.mrb[0].mxu0
      %v4823 = vpop.f32.mrb[0].mxu0
      %v4824 = vadd.f32 %v4688, %v4823
      %v4825 = vpop.f32.mrb[0].mxu0
      %4826 = vmatprep.mubr.bf16.mxu0 0
      %4827 = vmatmul.mubr.bf16.gmra.mrb[0].mxu0 %v3178
      %v4828 = vpop.f32.mrb[0].mxu0
      %v4829 = vadd.f32 %v4688, %v4828
      %v4830 = vpop.f32.mrb[0].mxu0
      %v4831 = vpop.f32.mrb[0].mxu0
      %v4832 = vadd.f32 %v4688, %v4831
      %v4833 = vpop.f32.mrb[0].mxu0
      %4834 = vdwg.mxu0
      %v4835 = vmul.f32 %v4773, 0.5
      %v4836 = vmul.f32 %v4776, 0.5
      %v4837 = vmul.f32 %v4781, 0.5
      %v4838 = vmul.f32 %v4784, 0.5
      %v4839 = vmul.f32 %v4789, 0.5
      %v4840 = vmul.f32 %v4792, 0.5
      %v4841 = vmul.f32 %v4797, 0.5
      %v4842 = vmul.f32 %v4800, 0.5
      %v4843 = vmul.f32 %v4805, 0.5
      %v4844 = vmul.f32 %v4808, 0.5
      %v4845 = vmul.f32 %v4813, 0.5
      %v4846 = vmul.f32 %v4816, 0.5
      %v4847 = vmul.f32 %v4821, 0.5
      %v4848 = vmul.f32 %v4824, 0.5
      %v4849 = vmul.f32 %v4829, 0.5
      %v4850 = vmul.f32 %v4832, 0.5
      %v4851 = vtanh.pop %v4835
      %v4852 = vtanh.pop %v4836
      %v4853 = vtanh.pop %v4837
      %v4854 = vtanh.pop %v4838
      %v4855 = vtanh.pop %v4839
      %v4856 = vtanh.pop %v4840
      %v4857 = vtanh.pop %v4841
      %v4858 = vtanh.pop %v4842
      %v4859 = vtanh.pop %v4843
      %v4860 = vtanh.pop %v4844
      %v4861 = vtanh.pop %v4845
      %v4862 = vtanh.pop %v4846
      %v4863 = vtanh.pop %v4847
      %v4864 = vtanh.pop %v4848
      %v4865 = vtanh.pop %v4849
      %v4866 = vtanh.pop %v4850
      %v4867 = vmul.f32 %v4851, 0.5
      %v4868 = vmul.f32 %v4852, 0.5
      %v4869 = vmul.f32 %v4853, 0.5
      %v4870 = vmul.f32 %v4854, 0.5
      %v4871 = vmul.f32 %v4855, 0.5
      %v4872 = vmul.f32 %v4856, 0.5
      %v4873 = vmul.f32 %v4857, 0.5
      %v4874 = vmul.f32 %v4858, 0.5
      %v4875 = vmul.f32 %v4859, 0.5
      %v4876 = vmul.f32 %v4860, 0.5
      %v4877 = vmul.f32 %v4861, 0.5
      %v4878 = vmul.f32 %v4862, 0.5
      %v4879 = vmul.f32 %v4863, 0.5
      %v4880 = vmul.f32 %v4864, 0.5
      %v4881 = vmul.f32 %v4865, 0.5
      %v4882 = vmul.f32 %v4866, 0.5
      %v4883 = vadd.f32 %v4867, 0.5
      %v4884 = vadd.f32 %v4868, 0.5
      %v4885 = vadd.f32 %v4869, 0.5
      %v4886 = vadd.f32 %v4870, 0.5
      %v4887 = vadd.f32 %v4871, 0.5
      %v4888 = vadd.f32 %v4872, 0.5
      %v4889 = vadd.f32 %v4873, 0.5
      %v4890 = vadd.f32 %v4874, 0.5
      %v4891 = vadd.f32 %v4875, 0.5
      %v4892 = vadd.f32 %v4876, 0.5
      %v4893 = vadd.f32 %v4877, 0.5
      %v4894 = vadd.f32 %v4878, 0.5
      %v4895 = vadd.f32 %v4879, 0.5
      %v4896 = vadd.f32 %v4880, 0.5
      %v4897 = vadd.f32 %v4881, 0.5
      %v4898 = vadd.f32 %v4882, 0.5
      %4899 = vst.msk [vmem:[%s258 + $0x30] sm:$0xff] %vm1467, %v4883
      %4900 = vst.msk [vmem:[%s258 + $0x68] sm:$0xff] %vm1467, %v4884
      %4901 = vst.msk [vmem:[%s258 + $0xa0] sm:$0xff] %vm1467, %v4885
      %4902 = vst.msk [vmem:[%s258 + $0xd8] sm:$0xff] %vm1467, %v4886
      %4903 = vst.msk [vmem:[%s258 + $0x110] sm:$0xff] %vm1467, %v4887
      %4904 = vst.msk [vmem:[%s258 + $0x148] sm:$0xff] %vm1467, %v4888
      %4905 = vst.msk [vmem:[%s258 + $0x180] sm:$0xff] %vm1467, %v4889
      %4906 = vst.msk [vmem:[%s258 + $0x1b8] sm:$0xff] %vm1467, %v4890
      %4907 = vst.msk [vmem:[%s258 + $0x1f0] sm:$0xff] %vm1467, %v4891
      %4908 = vst.msk [vmem:[%s258 + $0x228] sm:$0xff] %vm1467, %v4892
      %4909 = vst.msk [vmem:[%s258 + $0x260] sm:$0xff] %vm1467, %v4893
      %4910 = vst.msk [vmem:[%s258 + $0x298] sm:$0xff] %vm1467, %v4894
      %4911 = vst.msk [vmem:[%s258 + $0x2d0] sm:$0xff] %vm1467, %v4895
      %4912 = vst.msk [vmem:[%s258 + $0x308] sm:$0xff] %vm1467, %v4896
      %4913 = vst.msk [vmem:[%s258 + $0x340] sm:$0xff] %vm1467, %v4897
      %4914 = vst.msk [vmem:[%s258 + $0x378] sm:$0xff] %vm1467, %v4898
      %s4915 = smul.u32 16, %s17
      %p4916 = scmp.lt.s32.totalorder %s4915, 63
      %s4917 = scalar_select %p4916, %s4915, 63
      %s4918 = smul.addr %s4917, 7
      %s4919 = smul.addr %s4918, 8
      %s4920 = scalar_lea.vmem %s6, %s4919
      // Predicated region
      $region45: #{autoencoder_forward.1} parent=43 // pred_check
        %p4921 = pneg %p166
      $region46: #{autoencoder_forward.1} parent=43 // pred_check_branch
        %4923 = sbr.rel (%p4921) target = $region48
      $region47: #{autoencoder_forward.1} parent=43 // pred_region
        %s4924 = smul.u32 16, %s17
      $region48: #{autoencoder_forward.1} parent=43 // pred_fallthru
        _
    $region44: #{autoencoder_forward.1} parent=5 // pred_fallthru
      _
    %p4925 = scmp.le.s32.totalorder 2, %s12
    // Predicated region
    $region49: #{autoencoder_forward.1} parent=5 // pred_check
      %p4926 = pneg %p4925
    $region50: #{autoencoder_forward.1} parent=5 // pred_check_branch
      %4928 = sbr.rel (%p4926) target = $region52
    $region51: #{autoencoder_forward.1} parent=5 // pred_region
      %s4929 = ssub.s32 %s12, 2
      // Predicated region
      $region53: #{autoencoder_forward.1} parent=51 // pred_check
        %p4930 = pneg %p172
      $region54: #{autoencoder_forward.1} parent=51 // pred_check_branch
        %4932 = sbr.rel (%p4930) target = $region56
      $region55: #{autoencoder_forward.1} parent=51 // pred_region
        %s4933 = smul.u32 16, %s18
        %p4934 = scmp.lt.s32.totalorder %s4933, 63
        %s4935 = scalar_select %p4934, %s4933, 63
        %s4936 = smul.addr %s4935, 7
        %s4937 = smul.addr %s4936, 8
        %s4938 = scalar_lea.vmem %s6, %s4937
      $region56: #{autoencoder_forward.1} parent=51 // pred_fallthru
        _
    $region52: #{autoencoder_forward.1} parent=5 // pred_fallthru
      _
  $region6: #{autoencoder_forward.1} parent=0 // loop_footer
    %s16 = sadd.s32 1, %s12
  $region7: #{autoencoder_forward.1} parent=0 // loop_footer_branch
    %11 = sbr.rel target = $region3
  $region8: #{autoencoder_forward.1} parent=0 // loop_exit
    _

</llo_original>
